<compile_context>
chip_gen: v7x
topology: tpu7x:2x2x1
jax: 0.10.0
libtpu: 0.0.40
codegen_flags: <defaults>
</compile_context>

<pallas_src>
import math

import jax
import jax.numpy as jnp
from jax import lax
from jax.experimental import pallas as pl
from jax.experimental.pallas import tpu as pltpu


# ----------------------------------------------------------------------------
# Fused Pallas kernel (all GRU layers + fc1->relu->fc2->sigmoid head)
# ----------------------------------------------------------------------------
_ARGS_PER_LAYER = 4  # w_ih_rzn (in,3H), w_hh_rzn (H,3H), b_i_rzn (1,3H), b_hn (1,H)
_UNROLL_THRESHOLD = 16  # full static unroll up to this seq length, fori_loop beyond


def make_fused_gru_kernel(seq, bpad, hidden, num_layers):
    """Kernel signature:
        kernel(x2d_ref,                       # (seq*BP, in_dim), time-major, batch padded
               *layer_refs,                   # _ARGS_PER_LAYER refs per layer
               fc1_w, fc1_b, fc2_w, fc2_b,    # head
               o_ref,                         # (BP, 1) output
               gi_scr, hseq_scr)              # VMEM scratches
    """
    H = hidden
    BP = bpad

    def mm(a, b):
        return jnp.dot(a, b, preferred_element_type=jnp.float32)

    def kernel(*refs):
        x_ref = refs[0]
        pos = 1
        layer_refs = []
        for _ in range(num_layers):
            layer_refs.append(refs[pos:pos + _ARGS_PER_LAYER])
            pos += _ARGS_PER_LAYER
        fc1_w_ref, fc1_b_ref, fc2_w_ref, fc2_b_ref = refs[pos:pos + 4]
        o_ref = refs[pos + 4]
        gi_ref = refs[pos + 5]      # VMEM (seq*BP, 3H)
        hseq_ref = refs[pos + 6]    # VMEM (seq*BP, H)

        cur_in = x_ref[...]         # (seq*BP, in_dim) f32
        h = jnp.zeros((BP, H), jnp.float32)   # h0 == zeros (hidden=None default)

        for layer in range(num_layers):
            w_ih_ref, w_hh_ref, b_i_ref, b_hn_ref = layer_refs[layer]
            w_hh_v = w_hh_ref[...]              # (H, 3H), single packed RHS per step
            b_hn_v = b_hn_ref[...]              # (1, H), hidden-side n bias

            # Hoisted, packed input projection for the whole (padded) sequence.
            # Written to VMEM scratch so per-step reads are tile-aligned loads
            # and the (S*BP, 3H) value does not stay live across the time loop.
            gi_ref[...] = mm(cur_in, w_ih_ref[...]) + b_i_ref[...]

            def gru_step(h, gi_t, w_hh_v=w_hh_v, b_hn_v=b_hn_v):
                gh = mm(h, w_hh_v)                                   # one MXU pass
                r = jax.nn.sigmoid(gi_t[:, 0:H] + gh[:, 0:H])
                z = jax.nn.sigmoid(gi_t[:, H:2 * H] + gh[:, H:2 * H])
                n = jnp.tanh(gi_t[:, 2 * H:] + r * (gh[:, 2 * H:] + b_hn_v))
                return (1.0 - z) * n + z * h

            h = jnp.zeros((BP, H), jnp.float32)
            last_layer = (layer == num_layers - 1)

            if seq <= _UNROLL_THRESHOLD:
                for t in range(seq):                   # static -> fully unrolled
                    lo = t * BP                        # BP % 8 == 0 -> tile aligned
                    h = gru_step(h, gi_ref[lo:lo + BP, :])
                    if not last_layer:
                        hseq_ref[lo:lo + BP, :] = h    # full, unmasked store
            else:
                def body(t, h, last_layer=last_layer, gru_step=gru_step):
                    lo = pl.multiple_of(t * BP, BP)
                    h = gru_step(h, gi_ref[pl.ds(lo, BP), :])
                    if not last_layer:
                        hseq_ref[pl.ds(lo, BP), :] = h
                    return h
                h = lax.fori_loop(0, seq, body, h, unroll=4)

            if not last_layer:
                cur_in = hseq_ref[...]                 # (seq*BP, H) next-layer input

        # Head on the final hidden state only: fc1 -> relu -> fc2 -> sigmoid.
        h1 = jnp.maximum(mm(h, fc1_w_ref[...]) + fc1_b_ref[...], 0.0)
        o_ref[...] = jax.nn.sigmoid(mm(h1, fc2_w_ref[...]) + fc2_b_ref[...])

    return kernel


# ----------------------------------------------------------------------------
# Parameter preparation: pack per-gate weights into (in,3H)/(H,3H) matrices,
# pre-fold r/z biases. Done once, outside the hot path.
# ----------------------------------------------------------------------------
def prepare_kernel_params(params):
    H = params["gru"][0]["w_hh"].shape[0]
    flat = []
    for lp in params["gru"]:
        w_ih, w_hh = lp["w_ih"], lp["w_hh"]     # (in, 3H), (H, 3H); gate order [r, z, n]
        b_ih, b_hh = lp["b_ih"], lp["b_hh"]     # (1, 3H)
        b_i = jnp.concatenate(
            [b_ih[:, 0:2 * H] + b_hh[:, 0:2 * H],   # folded r and z biases
             b_ih[:, 2 * H:]], axis=1)              # n keeps input-side bias only
        flat += [w_ih, w_hh, b_i, b_hh[:, 2 * H:]]  # b_hh_n stays separate (inside tanh)
    flat += [params["fc1_w"], params["fc1_b"], params["fc2_w"], params["fc2_b"]]
    return tuple(flat)


def _padded_tile_bytes(shape, itemsize=4):
    """Approximate VMEM footprint of an f32 array with (8,128) tile padding."""
    if len(shape) == 1:
        lead, rows, cols = 1, 1, shape[0]
    else:
        lead = 1
        for d in shape[:-2]:
            lead *= d
        rows, cols = shape[-2], shape[-1]
    return lead * (-(-rows // 8) * 8) * (-(-cols // 128) * 128) * itemsize


# ----------------------------------------------------------------------------
# Forward: one pallas_call per inference
# ----------------------------------------------------------------------------
@jax.jit
def fused_forward(flat_params, x_bf):
    """x_bf: (batch, seq, source), batch_first like nn.GRU(batch_first=True).
    Returns (batch, 1, 1), matching fc2(...).sigmoid().unsqueeze(2)."""
    B, S, in0 = x_bf.shape
    num_layers = (len(flat_params) - 4) // _ARGS_PER_LAYER
    H = flat_params[1].shape[0]                 # layer-0 w_hh_rzn is (H, 3H)
    BP = ((B + 7) // 8) * 8                     # pad batch to a full sublane tile

    # Time-major, batch padded to BP, flattened to (S*BP, in): every per-step
    # slice in the kernel starts on an (8,128) tile boundary.
    xt = jnp.transpose(x_bf, (1, 0, 2)).astype(jnp.float32)   # (S, B, in)
    xt = jnp.pad(xt, ((0, 0), (0, BP - B), (0, 0)))           # (S, BP, in)
    x2d = xt.reshape(S * BP, in0)

    kernel = make_fused_gru_kernel(S, BP, H, num_layers)
    scratch_shapes = [pltpu.VMEM((S * BP, 3 * H), jnp.float32),   # gi
                      pltpu.VMEM((S * BP, H), jnp.float32)]       # inter-layer hseq

    # Grid-less call: x, all weights, both scratches and the output are
    # simultaneously VMEM-resident. Size the limit from the real footprint
    # (+headroom), capped at v7x's 64 MiB physical VMEM.
    footprint = _padded_tile_bytes(x2d.shape)
    for p in flat_params:
        footprint += _padded_tile_bytes(p.shape)
    footprint += _padded_tile_bytes((S * BP, 3 * H))
    footprint += _padded_tile_bytes((S * BP, H))
    footprint += _padded_tile_bytes((BP, 1))
    vmem_limit = int(min(max(2 * footprint + (4 << 20), 16 << 20), 64 << 20))

    out = pl.pallas_call(
        kernel,
        out_shape=jax.ShapeDtypeStruct((BP, 1), jnp.float32),
        scratch_shapes=scratch_shapes,
        compiler_params=pltpu.CompilerParams(vmem_limit_bytes=vmem_limit),
    )(x2d, *flat_params)
    return out[:B, :, None]                      # (B, 1, 1)


def simple_gru_forward(params, x_bf):
    return fused_forward(prepare_kernel_params(params), x_bf)


# ----------------------------------------------------------------------------
# Parameter construction (deterministic, mimics PyTorch init ranges)
# ----------------------------------------------------------------------------
def init_params(key, source_size, hidden_size, num_layers):
    params = {"gru": []}
    k_gru = 1.0 / math.sqrt(hidden_size)
    for layer in range(num_layers):
        in_dim = source_size if layer == 0 else hidden_size
        key, k1, k2, k3, k4 = jax.random.split(key, 5)
        params["gru"].append({
            "w_ih": jax.random.uniform(k1, (in_dim, 3 * hidden_size), jnp.float32, -k_gru, k_gru),
            "w_hh": jax.random.uniform(k2, (hidden_size, 3 * hidden_size), jnp.float32, -k_gru, k_gru),
            "b_ih": jax.random.uniform(k3, (1, 3 * hidden_size), jnp.float32, -k_gru, k_gru),
            "b_hh": jax.random.uniform(k4, (1, 3 * hidden_size), jnp.float32, -k_gru, k_gru),
        })
    k_fc1 = 1.0 / math.sqrt(hidden_size)
    k_fc2 = 1.0 / math.sqrt(64)
    key, k5, k6, k7, k8 = jax.random.split(key, 5)
    params["fc1_w"] = jax.random.uniform(k5, (hidden_size, 64), jnp.float32, -k_fc1, k_fc1)
    params["fc1_b"] = jax.random.uniform(k6, (1, 64), jnp.float32, -k_fc1, k_fc1)
    params["fc2_w"] = jax.random.uniform(k7, (64, 1), jnp.float32, -k_fc2, k_fc2)
    params["fc2_b"] = jax.random.uniform(k8, (1, 1), jnp.float32, -k_fc2, k_fc2)
    return params


# ----------------------------------------------------------------------------
# Pure-JAX reference (combined weights, PyTorch GRU math) for correctness check
# ----------------------------------------------------------------------------
def simple_gru_reference(params, x_bf):
    B, S, _ = x_bf.shape
    H = params["gru"][0]["w_hh"].shape[0]
    h_seq = jnp.transpose(x_bf, (1, 0, 2)).astype(jnp.float32)
    for lp in params["gru"]:
        def step(h, xt, lp=lp):
            gi = xt @ lp["w_ih"] + lp["b_ih"]
            gh = h @ lp["w_hh"] + lp["b_hh"]
            r = jax.nn.sigmoid(gi[:, :H] + gh[:, :H])
            z = jax.nn.sigmoid(gi[:, H:2 * H] + gh[:, H:2 * H])
            n = jnp.tanh(gi[:, 2 * H:] + r * gh[:, 2 * H:])
            h_new = (1.0 - z) * n + z * h
            return h_new, h_new
        _, h_seq = lax.scan(step, jnp.zeros((B, H), jnp.float32), h_seq)
    last = h_seq[-1]
    h1 = jnp.maximum(last @ params["fc1_w"] + params["fc1_b"], 0.0)
    o = jax.nn.sigmoid(h1 @ params["fc2_w"] + params["fc2_b"])
    return o[:, :, None]


if __name__ == "__main__":
    # Small deterministic config: source_size=16, hidden_size=32, num_layers=2,
    # dropout inactive (inference), bidirectional=False.
    source_size, hidden_size, num_layers = 16, 32, 2
    batch, seq = 2, 8

    key = jax.random.PRNGKey(0)
    key, kx = jax.random.split(key)
    params = init_params(key, source_size, hidden_size, num_layers)
    x = jax.random.normal(kx, (batch, seq, source_size), jnp.float32)

    flat_params = prepare_kernel_params(params)      # one-time weight repack
    out = jax.block_until_ready(fused_forward(flat_params, x))

    ref = jax.block_until_ready(simple_gru_reference(params, x))
    assert out.shape == (batch, 1, 1), out.shape
    assert jnp.allclose(out, ref, rtol=1e-5, atol=1e-5), (out, ref)

    print("KERNEL_OK")
</pallas_src>

<mosaic_0001>
module attributes {stable_mosaic.version = 11 : i64} {
  func.func @kernel(%arg0: memref<64x16xf32, #tpu.memory_space<vmem>>, %arg1: memref<16x96xf32, #tpu.memory_space<vmem>>, %arg2: memref<32x96xf32, #tpu.memory_space<vmem>>, %arg3: memref<1x96xf32, #tpu.memory_space<vmem>>, %arg4: memref<1x32xf32, #tpu.memory_space<vmem>>, %arg5: memref<32x96xf32, #tpu.memory_space<vmem>>, %arg6: memref<32x96xf32, #tpu.memory_space<vmem>>, %arg7: memref<1x96xf32, #tpu.memory_space<vmem>>, %arg8: memref<1x32xf32, #tpu.memory_space<vmem>>, %arg9: memref<32x64xf32, #tpu.memory_space<vmem>>, %arg10: memref<1x64xf32, #tpu.memory_space<vmem>>, %arg11: memref<64x1xf32, #tpu.memory_space<vmem>>, %arg12: memref<1x1xf32, #tpu.memory_space<vmem>>, %arg13: memref<8x1xf32, #tpu.memory_space<vmem>>, %arg14: memref<64x96xf32, #tpu.memory_space<vmem>>, %arg15: memref<64x32xf32, #tpu.memory_space<vmem>>) attributes {dimension_semantics = [], scalar_prefetch = 0 : i64, scratch_operands = 2 : i64, tpu.core_type = #tpu.core_type<tc>} {
    %c0 = arith.constant 0 : index
    %c0_0 = arith.constant 0 : index
    %0 = vector.load %arg0[%c0, %c0_0] : memref<64x16xf32, #tpu.memory_space<vmem>>, vector<64x16xf32>
    %c0_1 = arith.constant 0 : index
    %c0_2 = arith.constant 0 : index
    %1 = vector.load %arg2[%c0_1, %c0_2] : memref<32x96xf32, #tpu.memory_space<vmem>>, vector<32x96xf32>
    %c0_3 = arith.constant 0 : index
    %c0_4 = arith.constant 0 : index
    %2 = vector.load %arg4[%c0_3, %c0_4] : memref<1x32xf32, #tpu.memory_space<vmem>>, vector<1x32xf32>
    %c0_5 = arith.constant 0 : index
    %c0_6 = arith.constant 0 : index
    %3 = vector.load %arg1[%c0_5, %c0_6] : memref<16x96xf32, #tpu.memory_space<vmem>>, vector<16x96xf32>
    %cst = arith.constant dense<0.000000e+00> : vector<64x96xf32>
    %4 = tpu.matmul %0, %3, %cst {dimension_numbers = #tpu.dot_dimension_numbers<[1], [0], [0], [1], [0, 0, 1, 1], [], []>} : vector<64x16xf32>, vector<16x96xf32>, vector<64x96xf32> -> vector<64x96xf32>
    %c0_7 = arith.constant 0 : index
    %c0_8 = arith.constant 0 : index
    %5 = vector.load %arg3[%c0_7, %c0_8] : memref<1x96xf32, #tpu.memory_space<vmem>>, vector<1x96xf32>
    %6 = vector.broadcast %5 : vector<1x96xf32> to vector<64x96xf32>
    %7 = arith.addf %4, %6 : vector<64x96xf32>
    %c0_9 = arith.constant 0 : index
    %c0_10 = arith.constant 0 : index
    %8 = vector.load %arg14[%c0_9, %c0_10] : memref<64x96xf32, #tpu.memory_space<vmem>>, vector<64x96xf32>
    tpu.vector_store %arg14[%c0_9, %c0_10], %7 {strides = array<i32>} : memref<64x96xf32, #tpu.memory_space<vmem>>, vector<64x96xf32>,
    %cst_11 = arith.constant 0.000000e+00 : f32
    %9 = vector.broadcast %cst_11 : f32 to vector<8x32xf32>
    %c0_12 = arith.constant 0 : index
    %c0_13 = arith.constant 0 : index
    %10 = vector.load %arg14[%c0_12, %c0_13] : memref<64x96xf32, #tpu.memory_space<vmem>>, vector<8x96xf32>
    %cst_14 = arith.constant dense<0.000000e+00> : vector<8x96xf32>
    %11 = tpu.matmul %9, %1, %cst_14 {dimension_numbers = #tpu.dot_dimension_numbers<[1], [0], [0], [1], [0, 0, 1, 1], [], []>} : vector<8x32xf32>, vector<32x96xf32>, vector<8x96xf32> -> vector<8x96xf32>
    %12 = vector.extract_strided_slice %10 {offsets = [0, 0], sizes = [8, 32], strides = [1, 1]} : vector<8x96xf32> to vector<8x32xf32>
    %13 = vector.extract_strided_slice %11 {offsets = [0, 0], sizes = [8, 32], strides = [1, 1]} : vector<8x96xf32> to vector<8x32xf32>
    %14 = arith.addf %12, %13 : vector<8x32xf32>
    %15 = arith.negf %14 : vector<8x32xf32>
    %16 = math.exp %15 : vector<8x32xf32>
    %cst_15 = arith.constant 1.000000e+00 : f32
    %17 = vector.broadcast %cst_15 : f32 to vector<8x32xf32>
    %18 = arith.addf %17, %16 : vector<8x32xf32>
    %19 = arith.divf %17, %18 : vector<8x32xf32>
    %20 = vector.extract_strided_slice %10 {offsets = [0, 32], sizes = [8, 32], strides = [1, 1]} : vector<8x96xf32> to vector<8x32xf32>
    %21 = vector.extract_strided_slice %11 {offsets = [0, 32], sizes = [8, 32], strides = [1, 1]} : vector<8x96xf32> to vector<8x32xf32>
    %22 = arith.addf %20, %21 : vector<8x32xf32>
    %23 = arith.negf %22 : vector<8x32xf32>
    %24 = math.exp %23 : vector<8x32xf32>
    %cst_16 = arith.constant 1.000000e+00 : f32
    %25 = vector.broadcast %cst_16 : f32 to vector<8x32xf32>
    %26 = arith.addf %25, %24 : vector<8x32xf32>
    %27 = arith.divf %25, %26 : vector<8x32xf32>
    %28 = vector.extract_strided_slice %10 {offsets = [0, 64], sizes = [8, 32], strides = [1, 1]} : vector<8x96xf32> to vector<8x32xf32>
    %29 = vector.extract_strided_slice %11 {offsets = [0, 64], sizes = [8, 32], strides = [1, 1]} : vector<8x96xf32> to vector<8x32xf32>
    %30 = vector.broadcast %2 : vector<1x32xf32> to vector<8x32xf32>
    %31 = arith.addf %29, %30 : vector<8x32xf32>
    %32 = arith.mulf %19, %31 : vector<8x32xf32>
    %33 = arith.addf %28, %32 : vector<8x32xf32>
    %34 = math.tanh %33 : vector<8x32xf32>
    %cst_17 = arith.constant 1.000000e+00 : f32
    %35 = vector.broadcast %cst_17 : f32 to vector<8x32xf32>
    %36 = arith.subf %35, %27 : vector<8x32xf32>
    %37 = arith.mulf %36, %34 : vector<8x32xf32>
    %38 = arith.mulf %27, %9 : vector<8x32xf32>
    %39 = arith.addf %37, %38 : vector<8x32xf32>
    %c0_18 = arith.constant 0 : index
    %c0_19 = arith.constant 0 : index
    %40 = vector.load %arg15[%c0_18, %c0_19] : memref<64x32xf32, #tpu.memory_space<vmem>>, vector<8x32xf32>
    tpu.vector_store %arg15[%c0_18, %c0_19], %39 {strides = array<i32>} : memref<64x32xf32, #tpu.memory_space<vmem>>, vector<8x32xf32>,
    %c8 = arith.constant 8 : index
    %c0_20 = arith.constant 0 : index
    %41 = vector.load %arg14[%c8, %c0_20] : memref<64x96xf32, #tpu.memory_space<vmem>>, vector<8x96xf32>
    %cst_21 = arith.constant dense<0.000000e+00> : vector<8x96xf32>
    %42 = tpu.matmul %39, %1, %cst_21 {dimension_numbers = #tpu.dot_dimension_numbers<[1], [0], [0], [1], [0, 0, 1, 1], [], []>} : vector<8x32xf32>, vector<32x96xf32>, vector<8x96xf32> -> vector<8x96xf32>
    %43 = vector.extract_strided_slice %41 {offsets = [0, 0], sizes = [8, 32], strides = [1, 1]} : vector<8x96xf32> to vector<8x32xf32>
    %44 = vector.extract_strided_slice %42 {offsets = [0, 0], sizes = [8, 32], strides = [1, 1]} : vector<8x96xf32> to vector<8x32xf32>
    %45 = arith.addf %43, %44 : vector<8x32xf32>
    %46 = arith.negf %45 : vector<8x32xf32>
    %47 = math.exp %46 : vector<8x32xf32>
    %cst_22 = arith.constant 1.000000e+00 : f32
    %48 = vector.broadcast %cst_22 : f32 to vector<8x32xf32>
    %49 = arith.addf %48, %47 : vector<8x32xf32>
    %50 = arith.divf %48, %49 : vector<8x32xf32>
    %51 = vector.extract_strided_slice %41 {offsets = [0, 32], sizes = [8, 32], strides = [1, 1]} : vector<8x96xf32> to vector<8x32xf32>
    %52 = vector.extract_strided_slice %42 {offsets = [0, 32], sizes = [8, 32], strides = [1, 1]} : vector<8x96xf32> to vector<8x32xf32>
    %53 = arith.addf %51, %52 : vector<8x32xf32>
    %54 = arith.negf %53 : vector<8x32xf32>
    %55 = math.exp %54 : vector<8x32xf32>
    %cst_23 = arith.constant 1.000000e+00 : f32
    %56 = vector.broadcast %cst_23 : f32 to vector<8x32xf32>
    %57 = arith.addf %56, %55 : vector<8x32xf32>
    %58 = arith.divf %56, %57 : vector<8x32xf32>
    %59 = vector.extract_strided_slice %41 {offsets = [0, 64], sizes = [8, 32], strides = [1, 1]} : vector<8x96xf32> to vector<8x32xf32>
    %60 = vector.extract_strided_slice %42 {offsets = [0, 64], sizes = [8, 32], strides = [1, 1]} : vector<8x96xf32> to vector<8x32xf32>
    %61 = vector.broadcast %2 : vector<1x32xf32> to vector<8x32xf32>
    %62 = arith.addf %60, %61 : vector<8x32xf32>
    %63 = arith.mulf %50, %62 : vector<8x32xf32>
    %64 = arith.addf %59, %63 : vector<8x32xf32>
    %65 = math.tanh %64 : vector<8x32xf32>
    %cst_24 = arith.constant 1.000000e+00 : f32
    %66 = vector.broadcast %cst_24 : f32 to vector<8x32xf32>
    %67 = arith.subf %66, %58 : vector<8x32xf32>
    %68 = arith.mulf %67, %65 : vector<8x32xf32>
    %69 = arith.mulf %58, %39 : vector<8x32xf32>
    %70 = arith.addf %68, %69 : vector<8x32xf32>
    %c8_25 = arith.constant 8 : index
    %c0_26 = arith.constant 0 : index
    %71 = vector.load %arg15[%c8_25, %c0_26] : memref<64x32xf32, #tpu.memory_space<vmem>>, vector<8x32xf32>
    tpu.vector_store %arg15[%c8_25, %c0_26], %70 {strides = array<i32>} : memref<64x32xf32, #tpu.memory_space<vmem>>, vector<8x32xf32>,
    %c16 = arith.constant 16 : index
    %c0_27 = arith.constant 0 : index
    %72 = vector.load %arg14[%c16, %c0_27] : memref<64x96xf32, #tpu.memory_space<vmem>>, vector<8x96xf32>
    %cst_28 = arith.constant dense<0.000000e+00> : vector<8x96xf32>
    %73 = tpu.matmul %70, %1, %cst_28 {dimension_numbers = #tpu.dot_dimension_numbers<[1], [0], [0], [1], [0, 0, 1, 1], [], []>} : vector<8x32xf32>, vector<32x96xf32>, vector<8x96xf32> -> vector<8x96xf32>
    %74 = vector.extract_strided_slice %72 {offsets = [0, 0], sizes = [8, 32], strides = [1, 1]} : vector<8x96xf32> to vector<8x32xf32>
    %75 = vector.extract_strided_slice %73 {offsets = [0, 0], sizes = [8, 32], strides = [1, 1]} : vector<8x96xf32> to vector<8x32xf32>
    %76 = arith.addf %74, %75 : vector<8x32xf32>
    %77 = arith.negf %76 : vector<8x32xf32>
    %78 = math.exp %77 : vector<8x32xf32>
    %cst_29 = arith.constant 1.000000e+00 : f32
    %79 = vector.broadcast %cst_29 : f32 to vector<8x32xf32>
    %80 = arith.addf %79, %78 : vector<8x32xf32>
    %81 = arith.divf %79, %80 : vector<8x32xf32>
    %82 = vector.extract_strided_slice %72 {offsets = [0, 32], sizes = [8, 32], strides = [1, 1]} : vector<8x96xf32> to vector<8x32xf32>
    %83 = vector.extract_strided_slice %73 {offsets = [0, 32], sizes = [8, 32], strides = [1, 1]} : vector<8x96xf32> to vector<8x32xf32>
    %84 = arith.addf %82, %83 : vector<8x32xf32>
    %85 = arith.negf %84 : vector<8x32xf32>
    %86 = math.exp %85 : vector<8x32xf32>
    %cst_30 = arith.constant 1.000000e+00 : f32
    %87 = vector.broadcast %cst_30 : f32 to vector<8x32xf32>
    %88 = arith.addf %87, %86 : vector<8x32xf32>
    %89 = arith.divf %87, %88 : vector<8x32xf32>
    %90 = vector.extract_strided_slice %72 {offsets = [0, 64], sizes = [8, 32], strides = [1, 1]} : vector<8x96xf32> to vector<8x32xf32>
    %91 = vector.extract_strided_slice %73 {offsets = [0, 64], sizes = [8, 32], strides = [1, 1]} : vector<8x96xf32> to vector<8x32xf32>
    %92 = vector.broadcast %2 : vector<1x32xf32> to vector<8x32xf32>
    %93 = arith.addf %91, %92 : vector<8x32xf32>
    %94 = arith.mulf %81, %93 : vector<8x32xf32>
    %95 = arith.addf %90, %94 : vector<8x32xf32>
    %96 = math.tanh %95 : vector<8x32xf32>
    %cst_31 = arith.constant 1.000000e+00 : f32
    %97 = vector.broadcast %cst_31 : f32 to vector<8x32xf32>
    %98 = arith.subf %97, %89 : vector<8x32xf32>
    %99 = arith.mulf %98, %96 : vector<8x32xf32>
    %100 = arith.mulf %89, %70 : vector<8x32xf32>
    %101 = arith.addf %99, %100 : vector<8x32xf32>
    %c16_32 = arith.constant 16 : index
    %c0_33 = arith.constant 0 : index
    %102 = vector.load %arg15[%c16_32, %c0_33] : memref<64x32xf32, #tpu.memory_space<vmem>>, vector<8x32xf32>
    tpu.vector_store %arg15[%c16_32, %c0_33], %101 {strides = array<i32>} : memref<64x32xf32, #tpu.memory_space<vmem>>, vector<8x32xf32>,
    %c24 = arith.constant 24 : index
    %c0_34 = arith.constant 0 : index
    %103 = vector.load %arg14[%c24, %c0_34] : memref<64x96xf32, #tpu.memory_space<vmem>>, vector<8x96xf32>
    %cst_35 = arith.constant dense<0.000000e+00> : vector<8x96xf32>
    %104 = tpu.matmul %101, %1, %cst_35 {dimension_numbers = #tpu.dot_dimension_numbers<[1], [0], [0], [1], [0, 0, 1, 1], [], []>} : vector<8x32xf32>, vector<32x96xf32>, vector<8x96xf32> -> vector<8x96xf32>
    %105 = vector.extract_strided_slice %103 {offsets = [0, 0], sizes = [8, 32], strides = [1, 1]} : vector<8x96xf32> to vector<8x32xf32>
    %106 = vector.extract_strided_slice %104 {offsets = [0, 0], sizes = [8, 32], strides = [1, 1]} : vector<8x96xf32> to vector<8x32xf32>
    %107 = arith.addf %105, %106 : vector<8x32xf32>
    %108 = arith.negf %107 : vector<8x32xf32>
    %109 = math.exp %108 : vector<8x32xf32>
    %cst_36 = arith.constant 1.000000e+00 : f32
    %110 = vector.broadcast %cst_36 : f32 to vector<8x32xf32>
    %111 = arith.addf %110, %109 : vector<8x32xf32>
    %112 = arith.divf %110, %111 : vector<8x32xf32>
    %113 = vector.extract_strided_slice %103 {offsets = [0, 32], sizes = [8, 32], strides = [1, 1]} : vector<8x96xf32> to vector<8x32xf32>
    %114 = vector.extract_strided_slice %104 {offsets = [0, 32], sizes = [8, 32], strides = [1, 1]} : vector<8x96xf32> to vector<8x32xf32>
    %115 = arith.addf %113, %114 : vector<8x32xf32>
    %116 = arith.negf %115 : vector<8x32xf32>
    %117 = math.exp %116 : vector<8x32xf32>
    %cst_37 = arith.constant 1.000000e+00 : f32
    %118 = vector.broadcast %cst_37 : f32 to vector<8x32xf32>
    %119 = arith.addf %118, %117 : vector<8x32xf32>
    %120 = arith.divf %118, %119 : vector<8x32xf32>
    %121 = vector.extract_strided_slice %103 {offsets = [0, 64], sizes = [8, 32], strides = [1, 1]} : vector<8x96xf32> to vector<8x32xf32>
    %122 = vector.extract_strided_slice %104 {offsets = [0, 64], sizes = [8, 32], strides = [1, 1]} : vector<8x96xf32> to vector<8x32xf32>
    %123 = vector.broadcast %2 : vector<1x32xf32> to vector<8x32xf32>
    %124 = arith.addf %122, %123 : vector<8x32xf32>
    %125 = arith.mulf %112, %124 : vector<8x32xf32>
    %126 = arith.addf %121, %125 : vector<8x32xf32>
    %127 = math.tanh %126 : vector<8x32xf32>
    %cst_38 = arith.constant 1.000000e+00 : f32
    %128 = vector.broadcast %cst_38 : f32 to vector<8x32xf32>
    %129 = arith.subf %128, %120 : vector<8x32xf32>
    %130 = arith.mulf %129, %127 : vector<8x32xf32>
    %131 = arith.mulf %120, %101 : vector<8x32xf32>
    %132 = arith.addf %130, %131 : vector<8x32xf32>
    %c24_39 = arith.constant 24 : index
    %c0_40 = arith.constant 0 : index
    %133 = vector.load %arg15[%c24_39, %c0_40] : memref<64x32xf32, #tpu.memory_space<vmem>>, vector<8x32xf32>
    tpu.vector_store %arg15[%c24_39, %c0_40], %132 {strides = array<i32>} : memref<64x32xf32, #tpu.memory_space<vmem>>, vector<8x32xf32>,
    %c32 = arith.constant 32 : index
    %c0_41 = arith.constant 0 : index
    %134 = vector.load %arg14[%c32, %c0_41] : memref<64x96xf32, #tpu.memory_space<vmem>>, vector<8x96xf32>
    %cst_42 = arith.constant dense<0.000000e+00> : vector<8x96xf32>
    %135 = tpu.matmul %132, %1, %cst_42 {dimension_numbers = #tpu.dot_dimension_numbers<[1], [0], [0], [1], [0, 0, 1, 1], [], []>} : vector<8x32xf32>, vector<32x96xf32>, vector<8x96xf32> -> vector<8x96xf32>
    %136 = vector.extract_strided_slice %134 {offsets = [0, 0], sizes = [8, 32], strides = [1, 1]} : vector<8x96xf32> to vector<8x32xf32>
    %137 = vector.extract_strided_slice %135 {offsets = [0, 0], sizes = [8, 32], strides = [1, 1]} : vector<8x96xf32> to vector<8x32xf32>
    %138 = arith.addf %136, %137 : vector<8x32xf32>
    %139 = arith.negf %138 : vector<8x32xf32>
    %140 = math.exp %139 : vector<8x32xf32>
    %cst_43 = arith.constant 1.000000e+00 : f32
    %141 = vector.broadcast %cst_43 : f32 to vector<8x32xf32>
    %142 = arith.addf %141, %140 : vector<8x32xf32>
    %143 = arith.divf %141, %142 : vector<8x32xf32>
    %144 = vector.extract_strided_slice %134 {offsets = [0, 32], sizes = [8, 32], strides = [1, 1]} : vector<8x96xf32> to vector<8x32xf32>
    %145 = vector.extract_strided_slice %135 {offsets = [0, 32], sizes = [8, 32], strides = [1, 1]} : vector<8x96xf32> to vector<8x32xf32>
    %146 = arith.addf %144, %145 : vector<8x32xf32>
    %147 = arith.negf %146 : vector<8x32xf32>
    %148 = math.exp %147 : vector<8x32xf32>
    %cst_44 = arith.constant 1.000000e+00 : f32
    %149 = vector.broadcast %cst_44 : f32 to vector<8x32xf32>
    %150 = arith.addf %149, %148 : vector<8x32xf32>
    %151 = arith.divf %149, %150 : vector<8x32xf32>
    %152 = vector.extract_strided_slice %134 {offsets = [0, 64], sizes = [8, 32], strides = [1, 1]} : vector<8x96xf32> to vector<8x32xf32>
    %153 = vector.extract_strided_slice %135 {offsets = [0, 64], sizes = [8, 32], strides = [1, 1]} : vector<8x96xf32> to vector<8x32xf32>
    %154 = vector.broadcast %2 : vector<1x32xf32> to vector<8x32xf32>
    %155 = arith.addf %153, %154 : vector<8x32xf32>
    %156 = arith.mulf %143, %155 : vector<8x32xf32>
    %157 = arith.addf %152, %156 : vector<8x32xf32>
    %158 = math.tanh %157 : vector<8x32xf32>
    %cst_45 = arith.constant 1.000000e+00 : f32
    %159 = vector.broadcast %cst_45 : f32 to vector<8x32xf32>
    %160 = arith.subf %159, %151 : vector<8x32xf32>
    %161 = arith.mulf %160, %158 : vector<8x32xf32>
    %162 = arith.mulf %151, %132 : vector<8x32xf32>
    %163 = arith.addf %161, %162 : vector<8x32xf32>
    %c32_46 = arith.constant 32 : index
    %c0_47 = arith.constant 0 : index
    %164 = vector.load %arg15[%c32_46, %c0_47] : memref<64x32xf32, #tpu.memory_space<vmem>>, vector<8x32xf32>
    tpu.vector_store %arg15[%c32_46, %c0_47], %163 {strides = array<i32>} : memref<64x32xf32, #tpu.memory_space<vmem>>, vector<8x32xf32>,
    %c40 = arith.constant 40 : index
    %c0_48 = arith.constant 0 : index
    %165 = vector.load %arg14[%c40, %c0_48] : memref<64x96xf32, #tpu.memory_space<vmem>>, vector<8x96xf32>
    %cst_49 = arith.constant dense<0.000000e+00> : vector<8x96xf32>
    %166 = tpu.matmul %163, %1, %cst_49 {dimension_numbers = #tpu.dot_dimension_numbers<[1], [0], [0], [1], [0, 0, 1, 1], [], []>} : vector<8x32xf32>, vector<32x96xf32>, vector<8x96xf32> -> vector<8x96xf32>
    %167 = vector.extract_strided_slice %165 {offsets = [0, 0], sizes = [8, 32], strides = [1, 1]} : vector<8x96xf32> to vector<8x32xf32>
    %168 = vector.extract_strided_slice %166 {offsets = [0, 0], sizes = [8, 32], strides = [1, 1]} : vector<8x96xf32> to vector<8x32xf32>
    %169 = arith.addf %167, %168 : vector<8x32xf32>
    %170 = arith.negf %169 : vector<8x32xf32>
    %171 = math.exp %170 : vector<8x32xf32>
    %cst_50 = arith.constant 1.000000e+00 : f32
    %172 = vector.broadcast %cst_50 : f32 to vector<8x32xf32>
    %173 = arith.addf %172, %171 : vector<8x32xf32>
    %174 = arith.divf %172, %173 : vector<8x32xf32>
    %175 = vector.extract_strided_slice %165 {offsets = [0, 32], sizes = [8, 32], strides = [1, 1]} : vector<8x96xf32> to vector<8x32xf32>
    %176 = vector.extract_strided_slice %166 {offsets = [0, 32], sizes = [8, 32], strides = [1, 1]} : vector<8x96xf32> to vector<8x32xf32>
    %177 = arith.addf %175, %176 : vector<8x32xf32>
    %178 = arith.negf %177 : vector<8x32xf32>
    %179 = math.exp %178 : vector<8x32xf32>
    %cst_51 = arith.constant 1.000000e+00 : f32
    %180 = vector.broadcast %cst_51 : f32 to vector<8x32xf32>
    %181 = arith.addf %180, %179 : vector<8x32xf32>
    %182 = arith.divf %180, %181 : vector<8x32xf32>
    %183 = vector.extract_strided_slice %165 {offsets = [0, 64], sizes = [8, 32], strides = [1, 1]} : vector<8x96xf32> to vector<8x32xf32>
    %184 = vector.extract_strided_slice %166 {offsets = [0, 64], sizes = [8, 32], strides = [1, 1]} : vector<8x96xf32> to vector<8x32xf32>
    %185 = vector.broadcast %2 : vector<1x32xf32> to vector<8x32xf32>
    %186 = arith.addf %184, %185 : vector<8x32xf32>
    %187 = arith.mulf %174, %186 : vector<8x32xf32>
    %188 = arith.addf %183, %187 : vector<8x32xf32>
    %189 = math.tanh %188 : vector<8x32xf32>
    %cst_52 = arith.constant 1.000000e+00 : f32
    %190 = vector.broadcast %cst_52 : f32 to vector<8x32xf32>
    %191 = arith.subf %190, %182 : vector<8x32xf32>
    %192 = arith.mulf %191, %189 : vector<8x32xf32>
    %193 = arith.mulf %182, %163 : vector<8x32xf32>
    %194 = arith.addf %192, %193 : vector<8x32xf32>
    %c40_53 = arith.constant 40 : index
    %c0_54 = arith.constant 0 : index
    %195 = vector.load %arg15[%c40_53, %c0_54] : memref<64x32xf32, #tpu.memory_space<vmem>>, vector<8x32xf32>
    tpu.vector_store %arg15[%c40_53, %c0_54], %194 {strides = array<i32>} : memref<64x32xf32, #tpu.memory_space<vmem>>, vector<8x32xf32>,
    %c48 = arith.constant 48 : index
    %c0_55 = arith.constant 0 : index
    %196 = vector.load %arg14[%c48, %c0_55] : memref<64x96xf32, #tpu.memory_space<vmem>>, vector<8x96xf32>
    %cst_56 = arith.constant dense<0.000000e+00> : vector<8x96xf32>
    %197 = tpu.matmul %194, %1, %cst_56 {dimension_numbers = #tpu.dot_dimension_numbers<[1], [0], [0], [1], [0, 0, 1, 1], [], []>} : vector<8x32xf32>, vector<32x96xf32>, vector<8x96xf32> -> vector<8x96xf32>
    %198 = vector.extract_strided_slice %196 {offsets = [0, 0], sizes = [8, 32], strides = [1, 1]} : vector<8x96xf32> to vector<8x32xf32>
    %199 = vector.extract_strided_slice %197 {offsets = [0, 0], sizes = [8, 32], strides = [1, 1]} : vector<8x96xf32> to vector<8x32xf32>
    %200 = arith.addf %198, %199 : vector<8x32xf32>
    %201 = arith.negf %200 : vector<8x32xf32>
    %202 = math.exp %201 : vector<8x32xf32>
    %cst_57 = arith.constant 1.000000e+00 : f32
    %203 = vector.broadcast %cst_57 : f32 to vector<8x32xf32>
    %204 = arith.addf %203, %202 : vector<8x32xf32>
    %205 = arith.divf %203, %204 : vector<8x32xf32>
    %206 = vector.extract_strided_slice %196 {offsets = [0, 32], sizes = [8, 32], strides = [1, 1]} : vector<8x96xf32> to vector<8x32xf32>
    %207 = vector.extract_strided_slice %197 {offsets = [0, 32], sizes = [8, 32], strides = [1, 1]} : vector<8x96xf32> to vector<8x32xf32>
    %208 = arith.addf %206, %207 : vector<8x32xf32>
    %209 = arith.negf %208 : vector<8x32xf32>
    %210 = math.exp %209 : vector<8x32xf32>
    %cst_58 = arith.constant 1.000000e+00 : f32
    %211 = vector.broadcast %cst_58 : f32 to vector<8x32xf32>
    %212 = arith.addf %211, %210 : vector<8x32xf32>
    %213 = arith.divf %211, %212 : vector<8x32xf32>
    %214 = vector.extract_strided_slice %196 {offsets = [0, 64], sizes = [8, 32], strides = [1, 1]} : vector<8x96xf32> to vector<8x32xf32>
    %215 = vector.extract_strided_slice %197 {offsets = [0, 64], sizes = [8, 32], strides = [1, 1]} : vector<8x96xf32> to vector<8x32xf32>
    %216 = vector.broadcast %2 : vector<1x32xf32> to vector<8x32xf32>
    %217 = arith.addf %215, %216 : vector<8x32xf32>
    %218 = arith.mulf %205, %217 : vector<8x32xf32>
    %219 = arith.addf %214, %218 : vector<8x32xf32>
    %220 = math.tanh %219 : vector<8x32xf32>
    %cst_59 = arith.constant 1.000000e+00 : f32
    %221 = vector.broadcast %cst_59 : f32 to vector<8x32xf32>
    %222 = arith.subf %221, %213 : vector<8x32xf32>
    %223 = arith.mulf %222, %220 : vector<8x32xf32>
    %224 = arith.mulf %213, %194 : vector<8x32xf32>
    %225 = arith.addf %223, %224 : vector<8x32xf32>
    %c48_60 = arith.constant 48 : index
    %c0_61 = arith.constant 0 : index
    %226 = vector.load %arg15[%c48_60, %c0_61] : memref<64x32xf32, #tpu.memory_space<vmem>>, vector<8x32xf32>
    tpu.vector_store %arg15[%c48_60, %c0_61], %225 {strides = array<i32>} : memref<64x32xf32, #tpu.memory_space<vmem>>, vector<8x32xf32>,
    %c56 = arith.constant 56 : index
    %c0_62 = arith.constant 0 : index
    %227 = vector.load %arg14[%c56, %c0_62] : memref<64x96xf32, #tpu.memory_space<vmem>>, vector<8x96xf32>
    %cst_63 = arith.constant dense<0.000000e+00> : vector<8x96xf32>
    %228 = tpu.matmul %225, %1, %cst_63 {dimension_numbers = #tpu.dot_dimension_numbers<[1], [0], [0], [1], [0, 0, 1, 1], [], []>} : vector<8x32xf32>, vector<32x96xf32>, vector<8x96xf32> -> vector<8x96xf32>
    %229 = vector.extract_strided_slice %227 {offsets = [0, 0], sizes = [8, 32], strides = [1, 1]} : vector<8x96xf32> to vector<8x32xf32>
    %230 = vector.extract_strided_slice %228 {offsets = [0, 0], sizes = [8, 32], strides = [1, 1]} : vector<8x96xf32> to vector<8x32xf32>
    %231 = arith.addf %229, %230 : vector<8x32xf32>
    %232 = arith.negf %231 : vector<8x32xf32>
    %233 = math.exp %232 : vector<8x32xf32>
    %cst_64 = arith.constant 1.000000e+00 : f32
    %234 = vector.broadcast %cst_64 : f32 to vector<8x32xf32>
    %235 = arith.addf %234, %233 : vector<8x32xf32>
    %236 = arith.divf %234, %235 : vector<8x32xf32>
    %237 = vector.extract_strided_slice %227 {offsets = [0, 32], sizes = [8, 32], strides = [1, 1]} : vector<8x96xf32> to vector<8x32xf32>
    %238 = vector.extract_strided_slice %228 {offsets = [0, 32], sizes = [8, 32], strides = [1, 1]} : vector<8x96xf32> to vector<8x32xf32>
    %239 = arith.addf %237, %238 : vector<8x32xf32>
    %240 = arith.negf %239 : vector<8x32xf32>
    %241 = math.exp %240 : vector<8x32xf32>
    %cst_65 = arith.constant 1.000000e+00 : f32
    %242 = vector.broadcast %cst_65 : f32 to vector<8x32xf32>
    %243 = arith.addf %242, %241 : vector<8x32xf32>
    %244 = arith.divf %242, %243 : vector<8x32xf32>
    %245 = vector.extract_strided_slice %227 {offsets = [0, 64], sizes = [8, 32], strides = [1, 1]} : vector<8x96xf32> to vector<8x32xf32>
    %246 = vector.extract_strided_slice %228 {offsets = [0, 64], sizes = [8, 32], strides = [1, 1]} : vector<8x96xf32> to vector<8x32xf32>
    %247 = vector.broadcast %2 : vector<1x32xf32> to vector<8x32xf32>
    %248 = arith.addf %246, %247 : vector<8x32xf32>
    %249 = arith.mulf %236, %248 : vector<8x32xf32>
    %250 = arith.addf %245, %249 : vector<8x32xf32>
    %251 = math.tanh %250 : vector<8x32xf32>
    %cst_66 = arith.constant 1.000000e+00 : f32
    %252 = vector.broadcast %cst_66 : f32 to vector<8x32xf32>
    %253 = arith.subf %252, %244 : vector<8x32xf32>
    %254 = arith.mulf %253, %251 : vector<8x32xf32>
    %255 = arith.mulf %244, %225 : vector<8x32xf32>
    %256 = arith.addf %254, %255 : vector<8x32xf32>
    %c56_67 = arith.constant 56 : index
    %c0_68 = arith.constant 0 : index
    %257 = vector.load %arg15[%c56_67, %c0_68] : memref<64x32xf32, #tpu.memory_space<vmem>>, vector<8x32xf32>
    tpu.vector_store %arg15[%c56_67, %c0_68], %256 {strides = array<i32>} : memref<64x32xf32, #tpu.memory_space<vmem>>, vector<8x32xf32>,
    %c0_69 = arith.constant 0 : index
    %c0_70 = arith.constant 0 : index
    %258 = vector.load %arg15[%c0_69, %c0_70] : memref<64x32xf32, #tpu.memory_space<vmem>>, vector<64x32xf32>
    %c0_71 = arith.constant 0 : index
    %c0_72 = arith.constant 0 : index
    %259 = vector.load %arg6[%c0_71, %c0_72] : memref<32x96xf32, #tpu.memory_space<vmem>>, vector<32x96xf32>
    %c0_73 = arith.constant 0 : index
    %c0_74 = arith.constant 0 : index
    %260 = vector.load %arg8[%c0_73, %c0_74] : memref<1x32xf32, #tpu.memory_space<vmem>>, vector<1x32xf32>
    %c0_75 = arith.constant 0 : index
    %c0_76 = arith.constant 0 : index
    %261 = vector.load %arg5[%c0_75, %c0_76] : memref<32x96xf32, #tpu.memory_space<vmem>>, vector<32x96xf32>
    %cst_77 = arith.constant dense<0.000000e+00> : vector<64x96xf32>
    %262 = tpu.matmul %258, %261, %cst_77 {dimension_numbers = #tpu.dot_dimension_numbers<[1], [0], [0], [1], [0, 0, 1, 1], [], []>} : vector<64x32xf32>, vector<32x96xf32>, vector<64x96xf32> -> vector<64x96xf32>
    %c0_78 = arith.constant 0 : index
    %c0_79 = arith.constant 0 : index
    %263 = vector.load %arg7[%c0_78, %c0_79] : memref<1x96xf32, #tpu.memory_space<vmem>>, vector<1x96xf32>
    %264 = vector.broadcast %263 : vector<1x96xf32> to vector<64x96xf32>
    %265 = arith.addf %262, %264 : vector<64x96xf32>
    %c0_80 = arith.constant 0 : index
    %c0_81 = arith.constant 0 : index
    %266 = vector.load %arg14[%c0_80, %c0_81] : memref<64x96xf32, #tpu.memory_space<vmem>>, vector<64x96xf32>
    tpu.vector_store %arg14[%c0_80, %c0_81], %265 {strides = array<i32>} : memref<64x96xf32, #tpu.memory_space<vmem>>, vector<64x96xf32>,
    %cst_82 = arith.constant 0.000000e+00 : f32
    %267 = vector.broadcast %cst_82 : f32 to vector<8x32xf32>
    %c0_83 = arith.constant 0 : index
    %c0_84 = arith.constant 0 : index
    %268 = vector.load %arg14[%c0_83, %c0_84] : memref<64x96xf32, #tpu.memory_space<vmem>>, vector<8x96xf32>
    %cst_85 = arith.constant dense<0.000000e+00> : vector<8x96xf32>
    %269 = tpu.matmul %267, %259, %cst_85 {dimension_numbers = #tpu.dot_dimension_numbers<[1], [0], [0], [1], [0, 0, 1, 1], [], []>} : vector<8x32xf32>, vector<32x96xf32>, vector<8x96xf32> -> vector<8x96xf32>
    %270 = vector.extract_strided_slice %268 {offsets = [0, 0], sizes = [8, 32], strides = [1, 1]} : vector<8x96xf32> to vector<8x32xf32>
    %271 = vector.extract_strided_slice %269 {offsets = [0, 0], sizes = [8, 32], strides = [1, 1]} : vector<8x96xf32> to vector<8x32xf32>
    %272 = arith.addf %270, %271 : vector<8x32xf32>
    %273 = arith.negf %272 : vector<8x32xf32>
    %274 = math.exp %273 : vector<8x32xf32>
    %cst_86 = arith.constant 1.000000e+00 : f32
    %275 = vector.broadcast %cst_86 : f32 to vector<8x32xf32>
    %276 = arith.addf %275, %274 : vector<8x32xf32>
    %277 = arith.divf %275, %276 : vector<8x32xf32>
    %278 = vector.extract_strided_slice %268 {offsets = [0, 32], sizes = [8, 32], strides = [1, 1]} : vector<8x96xf32> to vector<8x32xf32>
    %279 = vector.extract_strided_slice %269 {offsets = [0, 32], sizes = [8, 32], strides = [1, 1]} : vector<8x96xf32> to vector<8x32xf32>
    %280 = arith.addf %278, %279 : vector<8x32xf32>
    %281 = arith.negf %280 : vector<8x32xf32>
    %282 = math.exp %281 : vector<8x32xf32>
    %cst_87 = arith.constant 1.000000e+00 : f32
    %283 = vector.broadcast %cst_87 : f32 to vector<8x32xf32>
    %284 = arith.addf %283, %282 : vector<8x32xf32>
    %285 = arith.divf %283, %284 : vector<8x32xf32>
    %286 = vector.extract_strided_slice %268 {offsets = [0, 64], sizes = [8, 32], strides = [1, 1]} : vector<8x96xf32> to vector<8x32xf32>
    %287 = vector.extract_strided_slice %269 {offsets = [0, 64], sizes = [8, 32], strides = [1, 1]} : vector<8x96xf32> to vector<8x32xf32>
    %288 = vector.broadcast %260 : vector<1x32xf32> to vector<8x32xf32>
    %289 = arith.addf %287, %288 : vector<8x32xf32>
    %290 = arith.mulf %277, %289 : vector<8x32xf32>
    %291 = arith.addf %286, %290 : vector<8x32xf32>
    %292 = math.tanh %291 : vector<8x32xf32>
    %cst_88 = arith.constant 1.000000e+00 : f32
    %293 = vector.broadcast %cst_88 : f32 to vector<8x32xf32>
    %294 = arith.subf %293, %285 : vector<8x32xf32>
    %295 = arith.mulf %294, %292 : vector<8x32xf32>
    %296 = arith.mulf %285, %267 : vector<8x32xf32>
    %297 = arith.addf %295, %296 : vector<8x32xf32>
    %c8_89 = arith.constant 8 : index
    %c0_90 = arith.constant 0 : index
    %298 = vector.load %arg14[%c8_89, %c0_90] : memref<64x96xf32, #tpu.memory_space<vmem>>, vector<8x96xf32>
    %cst_91 = arith.constant dense<0.000000e+00> : vector<8x96xf32>
    %299 = tpu.matmul %297, %259, %cst_91 {dimension_numbers = #tpu.dot_dimension_numbers<[1], [0], [0], [1], [0, 0, 1, 1], [], []>} : vector<8x32xf32>, vector<32x96xf32>, vector<8x96xf32> -> vector<8x96xf32>
    %300 = vector.extract_strided_slice %298 {offsets = [0, 0], sizes = [8, 32], strides = [1, 1]} : vector<8x96xf32> to vector<8x32xf32>
    %301 = vector.extract_strided_slice %299 {offsets = [0, 0], sizes = [8, 32], strides = [1, 1]} : vector<8x96xf32> to vector<8x32xf32>
    %302 = arith.addf %300, %301 : vector<8x32xf32>
    %303 = arith.negf %302 : vector<8x32xf32>
    %304 = math.exp %303 : vector<8x32xf32>
    %cst_92 = arith.constant 1.000000e+00 : f32
    %305 = vector.broadcast %cst_92 : f32 to vector<8x32xf32>
    %306 = arith.addf %305, %304 : vector<8x32xf32>
    %307 = arith.divf %305, %306 : vector<8x32xf32>
    %308 = vector.extract_strided_slice %298 {offsets = [0, 32], sizes = [8, 32], strides = [1, 1]} : vector<8x96xf32> to vector<8x32xf32>
    %309 = vector.extract_strided_slice %299 {offsets = [0, 32], sizes = [8, 32], strides = [1, 1]} : vector<8x96xf32> to vector<8x32xf32>
    %310 = arith.addf %308, %309 : vector<8x32xf32>
    %311 = arith.negf %310 : vector<8x32xf32>
    %312 = math.exp %311 : vector<8x32xf32>
    %cst_93 = arith.constant 1.000000e+00 : f32
    %313 = vector.broadcast %cst_93 : f32 to vector<8x32xf32>
    %314 = arith.addf %313, %312 : vector<8x32xf32>
    %315 = arith.divf %313, %314 : vector<8x32xf32>
    %316 = vector.extract_strided_slice %298 {offsets = [0, 64], sizes = [8, 32], strides = [1, 1]} : vector<8x96xf32> to vector<8x32xf32>
    %317 = vector.extract_strided_slice %299 {offsets = [0, 64], sizes = [8, 32], strides = [1, 1]} : vector<8x96xf32> to vector<8x32xf32>
    %318 = vector.broadcast %260 : vector<1x32xf32> to vector<8x32xf32>
    %319 = arith.addf %317, %318 : vector<8x32xf32>
    %320 = arith.mulf %307, %319 : vector<8x32xf32>
    %321 = arith.addf %316, %320 : vector<8x32xf32>
    %322 = math.tanh %321 : vector<8x32xf32>
    %cst_94 = arith.constant 1.000000e+00 : f32
    %323 = vector.broadcast %cst_94 : f32 to vector<8x32xf32>
    %324 = arith.subf %323, %315 : vector<8x32xf32>
    %325 = arith.mulf %324, %322 : vector<8x32xf32>
    %326 = arith.mulf %315, %297 : vector<8x32xf32>
    %327 = arith.addf %325, %326 : vector<8x32xf32>
    %c16_95 = arith.constant 16 : index
    %c0_96 = arith.constant 0 : index
    %328 = vector.load %arg14[%c16_95, %c0_96] : memref<64x96xf32, #tpu.memory_space<vmem>>, vector<8x96xf32>
    %cst_97 = arith.constant dense<0.000000e+00> : vector<8x96xf32>
    %329 = tpu.matmul %327, %259, %cst_97 {dimension_numbers = #tpu.dot_dimension_numbers<[1], [0], [0], [1], [0, 0, 1, 1], [], []>} : vector<8x32xf32>, vector<32x96xf32>, vector<8x96xf32> -> vector<8x96xf32>
    %330 = vector.extract_strided_slice %328 {offsets = [0, 0], sizes = [8, 32], strides = [1, 1]} : vector<8x96xf32> to vector<8x32xf32>
    %331 = vector.extract_strided_slice %329 {offsets = [0, 0], sizes = [8, 32], strides = [1, 1]} : vector<8x96xf32> to vector<8x32xf32>
    %332 = arith.addf %330, %331 : vector<8x32xf32>
    %333 = arith.negf %332 : vector<8x32xf32>
    %334 = math.exp %333 : vector<8x32xf32>
    %cst_98 = arith.constant 1.000000e+00 : f32
    %335 = vector.broadcast %cst_98 : f32 to vector<8x32xf32>
    %336 = arith.addf %335, %334 : vector<8x32xf32>
    %337 = arith.divf %335, %336 : vector<8x32xf32>
    %338 = vector.extract_strided_slice %328 {offsets = [0, 32], sizes = [8, 32], strides = [1, 1]} : vector<8x96xf32> to vector<8x32xf32>
    %339 = vector.extract_strided_slice %329 {offsets = [0, 32], sizes = [8, 32], strides = [1, 1]} : vector<8x96xf32> to vector<8x32xf32>
    %340 = arith.addf %338, %339 : vector<8x32xf32>
    %341 = arith.negf %340 : vector<8x32xf32>
    %342 = math.exp %341 : vector<8x32xf32>
    %cst_99 = arith.constant 1.000000e+00 : f32
    %343 = vector.broadcast %cst_99 : f32 to vector<8x32xf32>
    %344 = arith.addf %343, %342 : vector<8x32xf32>
    %345 = arith.divf %343, %344 : vector<8x32xf32>
    %346 = vector.extract_strided_slice %328 {offsets = [0, 64], sizes = [8, 32], strides = [1, 1]} : vector<8x96xf32> to vector<8x32xf32>
    %347 = vector.extract_strided_slice %329 {offsets = [0, 64], sizes = [8, 32], strides = [1, 1]} : vector<8x96xf32> to vector<8x32xf32>
    %348 = vector.broadcast %260 : vector<1x32xf32> to vector<8x32xf32>
    %349 = arith.addf %347, %348 : vector<8x32xf32>
    %350 = arith.mulf %337, %349 : vector<8x32xf32>
    %351 = arith.addf %346, %350 : vector<8x32xf32>
    %352 = math.tanh %351 : vector<8x32xf32>
    %cst_100 = arith.constant 1.000000e+00 : f32
    %353 = vector.broadcast %cst_100 : f32 to vector<8x32xf32>
    %354 = arith.subf %353, %345 : vector<8x32xf32>
    %355 = arith.mulf %354, %352 : vector<8x32xf32>
    %356 = arith.mulf %345, %327 : vector<8x32xf32>
    %357 = arith.addf %355, %356 : vector<8x32xf32>
    %c24_101 = arith.constant 24 : index
    %c0_102 = arith.constant 0 : index
    %358 = vector.load %arg14[%c24_101, %c0_102] : memref<64x96xf32, #tpu.memory_space<vmem>>, vector<8x96xf32>
    %cst_103 = arith.constant dense<0.000000e+00> : vector<8x96xf32>
    %359 = tpu.matmul %357, %259, %cst_103 {dimension_numbers = #tpu.dot_dimension_numbers<[1], [0], [0], [1], [0, 0, 1, 1], [], []>} : vector<8x32xf32>, vector<32x96xf32>, vector<8x96xf32> -> vector<8x96xf32>
    %360 = vector.extract_strided_slice %358 {offsets = [0, 0], sizes = [8, 32], strides = [1, 1]} : vector<8x96xf32> to vector<8x32xf32>
    %361 = vector.extract_strided_slice %359 {offsets = [0, 0], sizes = [8, 32], strides = [1, 1]} : vector<8x96xf32> to vector<8x32xf32>
    %362 = arith.addf %360, %361 : vector<8x32xf32>
    %363 = arith.negf %362 : vector<8x32xf32>
    %364 = math.exp %363 : vector<8x32xf32>
    %cst_104 = arith.constant 1.000000e+00 : f32
    %365 = vector.broadcast %cst_104 : f32 to vector<8x32xf32>
    %366 = arith.addf %365, %364 : vector<8x32xf32>
    %367 = arith.divf %365, %366 : vector<8x32xf32>
    %368 = vector.extract_strided_slice %358 {offsets = [0, 32], sizes = [8, 32], strides = [1, 1]} : vector<8x96xf32> to vector<8x32xf32>
    %369 = vector.extract_strided_slice %359 {offsets = [0, 32], sizes = [8, 32], strides = [1, 1]} : vector<8x96xf32> to vector<8x32xf32>
    %370 = arith.addf %368, %369 : vector<8x32xf32>
    %371 = arith.negf %370 : vector<8x32xf32>
    %372 = math.exp %371 : vector<8x32xf32>
    %cst_105 = arith.constant 1.000000e+00 : f32
    %373 = vector.broadcast %cst_105 : f32 to vector<8x32xf32>
    %374 = arith.addf %373, %372 : vector<8x32xf32>
    %375 = arith.divf %373, %374 : vector<8x32xf32>
    %376 = vector.extract_strided_slice %358 {offsets = [0, 64], sizes = [8, 32], strides = [1, 1]} : vector<8x96xf32> to vector<8x32xf32>
    %377 = vector.extract_strided_slice %359 {offsets = [0, 64], sizes = [8, 32], strides = [1, 1]} : vector<8x96xf32> to vector<8x32xf32>
    %378 = vector.broadcast %260 : vector<1x32xf32> to vector<8x32xf32>
    %379 = arith.addf %377, %378 : vector<8x32xf32>
    %380 = arith.mulf %367, %379 : vector<8x32xf32>
    %381 = arith.addf %376, %380 : vector<8x32xf32>
    %382 = math.tanh %381 : vector<8x32xf32>
    %cst_106 = arith.constant 1.000000e+00 : f32
    %383 = vector.broadcast %cst_106 : f32 to vector<8x32xf32>
    %384 = arith.subf %383, %375 : vector<8x32xf32>
    %385 = arith.mulf %384, %382 : vector<8x32xf32>
    %386 = arith.mulf %375, %357 : vector<8x32xf32>
    %387 = arith.addf %385, %386 : vector<8x32xf32>
    %c32_107 = arith.constant 32 : index
    %c0_108 = arith.constant 0 : index
    %388 = vector.load %arg14[%c32_107, %c0_108] : memref<64x96xf32, #tpu.memory_space<vmem>>, vector<8x96xf32>
    %cst_109 = arith.constant dense<0.000000e+00> : vector<8x96xf32>
    %389 = tpu.matmul %387, %259, %cst_109 {dimension_numbers = #tpu.dot_dimension_numbers<[1], [0], [0], [1], [0, 0, 1, 1], [], []>} : vector<8x32xf32>, vector<32x96xf32>, vector<8x96xf32> -> vector<8x96xf32>
    %390 = vector.extract_strided_slice %388 {offsets = [0, 0], sizes = [8, 32], strides = [1, 1]} : vector<8x96xf32> to vector<8x32xf32>
    %391 = vector.extract_strided_slice %389 {offsets = [0, 0], sizes = [8, 32], strides = [1, 1]} : vector<8x96xf32> to vector<8x32xf32>
    %392 = arith.addf %390, %391 : vector<8x32xf32>
    %393 = arith.negf %392 : vector<8x32xf32>
    %394 = math.exp %393 : vector<8x32xf32>
    %cst_110 = arith.constant 1.000000e+00 : f32
    %395 = vector.broadcast %cst_110 : f32 to vector<8x32xf32>
    %396 = arith.addf %395, %394 : vector<8x32xf32>
    %397 = arith.divf %395, %396 : vector<8x32xf32>
    %398 = vector.extract_strided_slice %388 {offsets = [0, 32], sizes = [8, 32], strides = [1, 1]} : vector<8x96xf32> to vector<8x32xf32>
    %399 = vector.extract_strided_slice %389 {offsets = [0, 32], sizes = [8, 32], strides = [1, 1]} : vector<8x96xf32> to vector<8x32xf32>
    %400 = arith.addf %398, %399 : vector<8x32xf32>
    %401 = arith.negf %400 : vector<8x32xf32>
    %402 = math.exp %401 : vector<8x32xf32>
    %cst_111 = arith.constant 1.000000e+00 : f32
    %403 = vector.broadcast %cst_111 : f32 to vector<8x32xf32>
    %404 = arith.addf %403, %402 : vector<8x32xf32>
    %405 = arith.divf %403, %404 : vector<8x32xf32>
    %406 = vector.extract_strided_slice %388 {offsets = [0, 64], sizes = [8, 32], strides = [1, 1]} : vector<8x96xf32> to vector<8x32xf32>
    %407 = vector.extract_strided_slice %389 {offsets = [0, 64], sizes = [8, 32], strides = [1, 1]} : vector<8x96xf32> to vector<8x32xf32>
    %408 = vector.broadcast %260 : vector<1x32xf32> to vector<8x32xf32>
    %409 = arith.addf %407, %408 : vector<8x32xf32>
    %410 = arith.mulf %397, %409 : vector<8x32xf32>
    %411 = arith.addf %406, %410 : vector<8x32xf32>
    %412 = math.tanh %411 : vector<8x32xf32>
    %cst_112 = arith.constant 1.000000e+00 : f32
    %413 = vector.broadcast %cst_112 : f32 to vector<8x32xf32>
    %414 = arith.subf %413, %405 : vector<8x32xf32>
    %415 = arith.mulf %414, %412 : vector<8x32xf32>
    %416 = arith.mulf %405, %387 : vector<8x32xf32>
    %417 = arith.addf %415, %416 : vector<8x32xf32>
    %c40_113 = arith.constant 40 : index
    %c0_114 = arith.constant 0 : index
    %418 = vector.load %arg14[%c40_113, %c0_114] : memref<64x96xf32, #tpu.memory_space<vmem>>, vector<8x96xf32>
    %cst_115 = arith.constant dense<0.000000e+00> : vector<8x96xf32>
    %419 = tpu.matmul %417, %259, %cst_115 {dimension_numbers = #tpu.dot_dimension_numbers<[1], [0], [0], [1], [0, 0, 1, 1], [], []>} : vector<8x32xf32>, vector<32x96xf32>, vector<8x96xf32> -> vector<8x96xf32>
    %420 = vector.extract_strided_slice %418 {offsets = [0, 0], sizes = [8, 32], strides = [1, 1]} : vector<8x96xf32> to vector<8x32xf32>
    %421 = vector.extract_strided_slice %419 {offsets = [0, 0], sizes = [8, 32], strides = [1, 1]} : vector<8x96xf32> to vector<8x32xf32>
    %422 = arith.addf %420, %421 : vector<8x32xf32>
    %423 = arith.negf %422 : vector<8x32xf32>
    %424 = math.exp %423 : vector<8x32xf32>
    %cst_116 = arith.constant 1.000000e+00 : f32
    %425 = vector.broadcast %cst_116 : f32 to vector<8x32xf32>
    %426 = arith.addf %425, %424 : vector<8x32xf32>
    %427 = arith.divf %425, %426 : vector<8x32xf32>
    %428 = vector.extract_strided_slice %418 {offsets = [0, 32], sizes = [8, 32], strides = [1, 1]} : vector<8x96xf32> to vector<8x32xf32>
    %429 = vector.extract_strided_slice %419 {offsets = [0, 32], sizes = [8, 32], strides = [1, 1]} : vector<8x96xf32> to vector<8x32xf32>
    %430 = arith.addf %428, %429 : vector<8x32xf32>
    %431 = arith.negf %430 : vector<8x32xf32>
    %432 = math.exp %431 : vector<8x32xf32>
    %cst_117 = arith.constant 1.000000e+00 : f32
    %433 = vector.broadcast %cst_117 : f32 to vector<8x32xf32>
    %434 = arith.addf %433, %432 : vector<8x32xf32>
    %435 = arith.divf %433, %434 : vector<8x32xf32>
    %436 = vector.extract_strided_slice %418 {offsets = [0, 64], sizes = [8, 32], strides = [1, 1]} : vector<8x96xf32> to vector<8x32xf32>
    %437 = vector.extract_strided_slice %419 {offsets = [0, 64], sizes = [8, 32], strides = [1, 1]} : vector<8x96xf32> to vector<8x32xf32>
    %438 = vector.broadcast %260 : vector<1x32xf32> to vector<8x32xf32>
    %439 = arith.addf %437, %438 : vector<8x32xf32>
    %440 = arith.mulf %427, %439 : vector<8x32xf32>
    %441 = arith.addf %436, %440 : vector<8x32xf32>
    %442 = math.tanh %441 : vector<8x32xf32>
    %cst_118 = arith.constant 1.000000e+00 : f32
    %443 = vector.broadcast %cst_118 : f32 to vector<8x32xf32>
    %444 = arith.subf %443, %435 : vector<8x32xf32>
    %445 = arith.mulf %444, %442 : vector<8x32xf32>
    %446 = arith.mulf %435, %417 : vector<8x32xf32>
    %447 = arith.addf %445, %446 : vector<8x32xf32>
    %c48_119 = arith.constant 48 : index
    %c0_120 = arith.constant 0 : index
    %448 = vector.load %arg14[%c48_119, %c0_120] : memref<64x96xf32, #tpu.memory_space<vmem>>, vector<8x96xf32>
    %cst_121 = arith.constant dense<0.000000e+00> : vector<8x96xf32>
    %449 = tpu.matmul %447, %259, %cst_121 {dimension_numbers = #tpu.dot_dimension_numbers<[1], [0], [0], [1], [0, 0, 1, 1], [], []>} : vector<8x32xf32>, vector<32x96xf32>, vector<8x96xf32> -> vector<8x96xf32>
    %450 = vector.extract_strided_slice %448 {offsets = [0, 0], sizes = [8, 32], strides = [1, 1]} : vector<8x96xf32> to vector<8x32xf32>
    %451 = vector.extract_strided_slice %449 {offsets = [0, 0], sizes = [8, 32], strides = [1, 1]} : vector<8x96xf32> to vector<8x32xf32>
    %452 = arith.addf %450, %451 : vector<8x32xf32>
    %453 = arith.negf %452 : vector<8x32xf32>
    %454 = math.exp %453 : vector<8x32xf32>
    %cst_122 = arith.constant 1.000000e+00 : f32
    %455 = vector.broadcast %cst_122 : f32 to vector<8x32xf32>
    %456 = arith.addf %455, %454 : vector<8x32xf32>
    %457 = arith.divf %455, %456 : vector<8x32xf32>
    %458 = vector.extract_strided_slice %448 {offsets = [0, 32], sizes = [8, 32], strides = [1, 1]} : vector<8x96xf32> to vector<8x32xf32>
    %459 = vector.extract_strided_slice %449 {offsets = [0, 32], sizes = [8, 32], strides = [1, 1]} : vector<8x96xf32> to vector<8x32xf32>
    %460 = arith.addf %458, %459 : vector<8x32xf32>
    %461 = arith.negf %460 : vector<8x32xf32>
    %462 = math.exp %461 : vector<8x32xf32>
    %cst_123 = arith.constant 1.000000e+00 : f32
    %463 = vector.broadcast %cst_123 : f32 to vector<8x32xf32>
    %464 = arith.addf %463, %462 : vector<8x32xf32>
    %465 = arith.divf %463, %464 : vector<8x32xf32>
    %466 = vector.extract_strided_slice %448 {offsets = [0, 64], sizes = [8, 32], strides = [1, 1]} : vector<8x96xf32> to vector<8x32xf32>
    %467 = vector.extract_strided_slice %449 {offsets = [0, 64], sizes = [8, 32], strides = [1, 1]} : vector<8x96xf32> to vector<8x32xf32>
    %468 = vector.broadcast %260 : vector<1x32xf32> to vector<8x32xf32>
    %469 = arith.addf %467, %468 : vector<8x32xf32>
    %470 = arith.mulf %457, %469 : vector<8x32xf32>
    %471 = arith.addf %466, %470 : vector<8x32xf32>
    %472 = math.tanh %471 : vector<8x32xf32>
    %cst_124 = arith.constant 1.000000e+00 : f32
    %473 = vector.broadcast %cst_124 : f32 to vector<8x32xf32>
    %474 = arith.subf %473, %465 : vector<8x32xf32>
    %475 = arith.mulf %474, %472 : vector<8x32xf32>
    %476 = arith.mulf %465, %447 : vector<8x32xf32>
    %477 = arith.addf %475, %476 : vector<8x32xf32>
    %c56_125 = arith.constant 56 : index
    %c0_126 = arith.constant 0 : index
    %478 = vector.load %arg14[%c56_125, %c0_126] : memref<64x96xf32, #tpu.memory_space<vmem>>, vector<8x96xf32>
    %cst_127 = arith.constant dense<0.000000e+00> : vector<8x96xf32>
    %479 = tpu.matmul %477, %259, %cst_127 {dimension_numbers = #tpu.dot_dimension_numbers<[1], [0], [0], [1], [0, 0, 1, 1], [], []>} : vector<8x32xf32>, vector<32x96xf32>, vector<8x96xf32> -> vector<8x96xf32>
    %480 = vector.extract_strided_slice %478 {offsets = [0, 0], sizes = [8, 32], strides = [1, 1]} : vector<8x96xf32> to vector<8x32xf32>
    %481 = vector.extract_strided_slice %479 {offsets = [0, 0], sizes = [8, 32], strides = [1, 1]} : vector<8x96xf32> to vector<8x32xf32>
    %482 = arith.addf %480, %481 : vector<8x32xf32>
    %483 = arith.negf %482 : vector<8x32xf32>
    %484 = math.exp %483 : vector<8x32xf32>
    %cst_128 = arith.constant 1.000000e+00 : f32
    %485 = vector.broadcast %cst_128 : f32 to vector<8x32xf32>
    %486 = arith.addf %485, %484 : vector<8x32xf32>
    %487 = arith.divf %485, %486 : vector<8x32xf32>
    %488 = vector.extract_strided_slice %478 {offsets = [0, 32], sizes = [8, 32], strides = [1, 1]} : vector<8x96xf32> to vector<8x32xf32>
    %489 = vector.extract_strided_slice %479 {offsets = [0, 32], sizes = [8, 32], strides = [1, 1]} : vector<8x96xf32> to vector<8x32xf32>
    %490 = arith.addf %488, %489 : vector<8x32xf32>
    %491 = arith.negf %490 : vector<8x32xf32>
    %492 = math.exp %491 : vector<8x32xf32>
    %cst_129 = arith.constant 1.000000e+00 : f32
    %493 = vector.broadcast %cst_129 : f32 to vector<8x32xf32>
    %494 = arith.addf %493, %492 : vector<8x32xf32>
    %495 = arith.divf %493, %494 : vector<8x32xf32>
    %496 = vector.extract_strided_slice %478 {offsets = [0, 64], sizes = [8, 32], strides = [1, 1]} : vector<8x96xf32> to vector<8x32xf32>
    %497 = vector.extract_strided_slice %479 {offsets = [0, 64], sizes = [8, 32], strides = [1, 1]} : vector<8x96xf32> to vector<8x32xf32>
    %498 = vector.broadcast %260 : vector<1x32xf32> to vector<8x32xf32>
    %499 = arith.addf %497, %498 : vector<8x32xf32>
    %500 = arith.mulf %487, %499 : vector<8x32xf32>
    %501 = arith.addf %496, %500 : vector<8x32xf32>
    %502 = math.tanh %501 : vector<8x32xf32>
    %cst_130 = arith.constant 1.000000e+00 : f32
    %503 = vector.broadcast %cst_130 : f32 to vector<8x32xf32>
    %504 = arith.subf %503, %495 : vector<8x32xf32>
    %505 = arith.mulf %504, %502 : vector<8x32xf32>
    %506 = arith.mulf %495, %477 : vector<8x32xf32>
    %507 = arith.addf %505, %506 : vector<8x32xf32>
    %c0_131 = arith.constant 0 : index
    %c0_132 = arith.constant 0 : index
    %508 = vector.load %arg9[%c0_131, %c0_132] : memref<32x64xf32, #tpu.memory_space<vmem>>, vector<32x64xf32>
    %cst_133 = arith.constant dense<0.000000e+00> : vector<8x64xf32>
    %509 = tpu.matmul %507, %508, %cst_133 {dimension_numbers = #tpu.dot_dimension_numbers<[1], [0], [0], [1], [0, 0, 1, 1], [], []>} : vector<8x32xf32>, vector<32x64xf32>, vector<8x64xf32> -> vector<8x64xf32>
    %c0_134 = arith.constant 0 : index
    %c0_135 = arith.constant 0 : index
    %510 = vector.load %arg10[%c0_134, %c0_135] : memref<1x64xf32, #tpu.memory_space<vmem>>, vector<1x64xf32>
    %511 = vector.broadcast %510 : vector<1x64xf32> to vector<8x64xf32>
    %512 = arith.addf %509, %511 : vector<8x64xf32>
    %cst_136 = arith.constant 0.000000e+00 : f32
    %513 = vector.broadcast %cst_136 : f32 to vector<8x64xf32>
    %514 = arith.maximumf %512, %513 : vector<8x64xf32>
    %c0_137 = arith.constant 0 : index
    %c0_138 = arith.constant 0 : index
    %515 = vector.load %arg11[%c0_137, %c0_138] : memref<64x1xf32, #tpu.memory_space<vmem>>, vector<64x1xf32>
    %cst_139 = arith.constant dense<0.000000e+00> : vector<8x1xf32>
    %516 = tpu.matmul %514, %515, %cst_139 {dimension_numbers = #tpu.dot_dimension_numbers<[1], [0], [0], [1], [0, 0, 1, 1], [], []>} : vector<8x64xf32>, vector<64x1xf32>, vector<8x1xf32> -> vector<8x1xf32>
    %c0_140 = arith.constant 0 : index
    %c0_141 = arith.constant 0 : index
    %517 = vector.load %arg12[%c0_140, %c0_141] : memref<1x1xf32, #tpu.memory_space<vmem>>, vector<1x1xf32>
    %518 = vector.broadcast %517 : vector<1x1xf32> to vector<8x1xf32>
    %519 = arith.addf %516, %518 : vector<8x1xf32>
    %520 = arith.negf %519 : vector<8x1xf32>
    %521 = math.exp %520 : vector<8x1xf32>
    %cst_142 = arith.constant 1.000000e+00 : f32
    %522 = vector.broadcast %cst_142 : f32 to vector<8x1xf32>
    %523 = arith.addf %522, %521 : vector<8x1xf32>
    %524 = arith.divf %522, %523 : vector<8x1xf32>
    %c0_143 = arith.constant 0 : index
    %c0_144 = arith.constant 0 : index
    %525 = vector.load %arg13[%c0_143, %c0_144] : memref<8x1xf32, #tpu.memory_space<vmem>>, vector<8x1xf32>
    tpu.vector_store %arg13[%c0_143, %c0_144], %524 {strides = array<i32>} : memref<8x1xf32, #tpu.memory_space<vmem>>, vector<8x1xf32>,
    return
  }
}

</mosaic_0001>

<llo_original>
// kernel: fused_forward.1
$region0: #{fused_forward.1}
  #allocation0 [shape = 'u32[]', space=smem, size = 0x4, offset = 0x4, fixed_abs, tag = 'smem constant byte address 0x4 - core index']
  #allocation1 [shape = 'u32[144,128]{1,0:T(1,128)}', space=vmem, size = 0x12000, scoped, tag = 'internal scratch']
  #allocation2 [shape = 'f32[64,96]{1,0:T(8,128)}', space=vmem, size = 0x8000, scoped, tag = 'scratch operand']
  #allocation3 [shape = 'f32[64,32]{1,0:T(8,128)}', space=vmem, size = 0x8000, scoped, tag = 'scratch operand']
  #allocation4 [shape = 'f32[1,1]{1,0:T(1,128)S(1)}', space=vmem, size = 0x200, scoped, tag = 'scoped memory for fused_forward.1']
  %s0 = inlined_call_operand.vmem [shape: f32[64,16], index: 0, kind: input, shape index: {}]
  %s1 = inlined_call_operand.vmem [shape: f32[16,96], index: 1, kind: input, shape index: {}]
  %s2 = inlined_call_operand.vmem [shape: f32[32,96], index: 2, kind: input, shape index: {}]
  %s3 = inlined_call_operand.vmem [shape: f32[1,96], index: 3, kind: input, shape index: {}]
  %s4 = inlined_call_operand.vmem [shape: f32[1,32], index: 4, kind: input, shape index: {}]
  %s5 = inlined_call_operand.vmem [shape: f32[32,96], index: 5, kind: input, shape index: {}]
  %s6 = inlined_call_operand.vmem [shape: f32[32,96], index: 6, kind: input, shape index: {}]
  %s7 = inlined_call_operand.vmem [shape: f32[1,96], index: 7, kind: input, shape index: {}]
  %s8 = inlined_call_operand.vmem [shape: f32[1,32], index: 8, kind: input, shape index: {}]
  %s9 = inlined_call_operand.vmem [shape: f32[32,64], index: 9, kind: input, shape index: {}]
  %s10 = inlined_call_operand.vmem [shape: f32[1,64], index: 10, kind: input, shape index: {}]
  %s11 = inlined_call_operand.vmem [shape: f32[64,1], index: 11, kind: input, shape index: {}]
  %s12 = inlined_call_operand.<no memory space> [shape: f32[1,1], index: 12, kind: input, shape index: {}]
  %s13 = inlined_call_operand.vmem [shape: f32[8,1], index: 13, kind: output, shape index: {}]
  %s14 = sld [smem:[#allocation0]]
  $region62: #{fused_forward.1} parent=0
    _
  %s16 = ssub.s32 1, %s14
  %s17 = scalar_select 0, %s16, %s14
  %v18 = vstv %s12
  %19 = vst [vmem:[#allocation4] sm:$0x1] %v18
  // Predicated region
  $region2: #{fused_forward.1} parent=0 // pred_check
    _
  $region3: #{fused_forward.1} parent=0 // pred_check_branch
    %21 = sbr.rel (0) target = $region5
  $region4: #{fused_forward.1} parent=0 // pred_region
    _
  $region5: #{fused_forward.1} parent=0 // pred_fallthru
    _
  // Predicated region
  $region6: #{fused_forward.1} parent=0 // pred_check
    _
  $region7: #{fused_forward.1} parent=0 // pred_check_branch
    %23 = sbr.rel (0) target = $region9
  $region8: #{fused_forward.1} parent=0 // pred_region
    _
  $region9: #{fused_forward.1} parent=0 // pred_fallthru
    _
  // Predicated region
  $region10: #{fused_forward.1} parent=0 // pred_check
    _
  $region11: #{fused_forward.1} parent=0 // pred_check_branch
    %25 = sbr.rel (0) target = $region13
  $region12: #{fused_forward.1} parent=0 // pred_region
    _
  $region13: #{fused_forward.1} parent=0 // pred_fallthru
    _
  // Predicated region
  $region14: #{fused_forward.1} parent=0 // pred_check
    _
  $region15: #{fused_forward.1} parent=0 // pred_check_branch
    %27 = sbr.rel (0) target = $region17
  $region16: #{fused_forward.1} parent=0 // pred_region
    _
  $region17: #{fused_forward.1} parent=0 // pred_fallthru
    _
  // Predicated region
  $region18: #{fused_forward.1} parent=0 // pred_check
    _
  $region19: #{fused_forward.1} parent=0 // pred_check_branch
    %29 = sbr.rel (0) target = $region21
  $region20: #{fused_forward.1} parent=0 // pred_region
    _
  $region21: #{fused_forward.1} parent=0 // pred_fallthru
    _
  // Predicated region
  $region22: #{fused_forward.1} parent=0 // pred_check
    _
  $region23: #{fused_forward.1} parent=0 // pred_check_branch
    %31 = sbr.rel (0) target = $region25
  $region24: #{fused_forward.1} parent=0 // pred_region
    _
  $region25: #{fused_forward.1} parent=0 // pred_fallthru
    _
  // Predicated region
  $region26: #{fused_forward.1} parent=0 // pred_check
    _
  $region27: #{fused_forward.1} parent=0 // pred_check_branch
    %33 = sbr.rel (0) target = $region29
  $region28: #{fused_forward.1} parent=0 // pred_region
    _
  $region29: #{fused_forward.1} parent=0 // pred_fallthru
    _
  // Predicated region
  $region30: #{fused_forward.1} parent=0 // pred_check
    _
  $region31: #{fused_forward.1} parent=0 // pred_check_branch
    %35 = sbr.rel (0) target = $region33
  $region32: #{fused_forward.1} parent=0 // pred_region
    _
  $region33: #{fused_forward.1} parent=0 // pred_fallthru
    _
  // Predicated region
  $region34: #{fused_forward.1} parent=0 // pred_check
    _
  $region35: #{fused_forward.1} parent=0 // pred_check_branch
    %37 = sbr.rel (0) target = $region37
  $region36: #{fused_forward.1} parent=0 // pred_region
    _
  $region37: #{fused_forward.1} parent=0 // pred_fallthru
    _
  // Predicated region
  $region38: #{fused_forward.1} parent=0 // pred_check
    _
  $region39: #{fused_forward.1} parent=0 // pred_check_branch
    %39 = sbr.rel (0) target = $region41
  $region40: #{fused_forward.1} parent=0 // pred_region
    _
  $region41: #{fused_forward.1} parent=0 // pred_fallthru
    _
  // Predicated region
  $region42: #{fused_forward.1} parent=0 // pred_check
    _
  $region43: #{fused_forward.1} parent=0 // pred_check_branch
    %41 = sbr.rel (0) target = $region45
  $region44: #{fused_forward.1} parent=0 // pred_region
    _
  $region45: #{fused_forward.1} parent=0 // pred_fallthru
    _
  // Predicated region
  $region46: #{fused_forward.1} parent=0 // pred_check
    _
  $region47: #{fused_forward.1} parent=0 // pred_check_branch
    %43 = sbr.rel (0) target = $region49
  $region48: #{fused_forward.1} parent=0 // pred_region
    _
  $region49: #{fused_forward.1} parent=0 // pred_fallthru
    _
  // Predicated region
  $region50: #{fused_forward.1} parent=0 // pred_check
    _
  $region51: #{fused_forward.1} parent=0 // pred_check_branch
    %45 = sbr.rel (0) target = $region53
  $region52: #{fused_forward.1} parent=0 // pred_region
    _
  $region53: #{fused_forward.1} parent=0 // pred_fallthru
    _
  %v46 = vld [vmem:[%s0] sm:$0xff]
  %v47 = vld [vmem:[%s0 + $0x8] sm:$0xff]
  %v48 = vld [vmem:[%s0 + $0x10] sm:$0xff]
  %v49 = vld [vmem:[%s0 + $0x18] sm:$0xff]
  %v50 = vld [vmem:[%s0 + $0x20] sm:$0xff]
  %v51 = vld [vmem:[%s0 + $0x28] sm:$0xff]
  %v52 = vld [vmem:[%s0 + $0x30] sm:$0xff]
  %v53 = vld [vmem:[%s0 + $0x38] sm:$0xff]
  %v54 = vld [vmem:[%s2] sm:$0xff]
  %v55 = vld [vmem:[%s2 + $0x8] sm:$0xff]
  %v56 = vld [vmem:[%s2 + $0x10] sm:$0xff]
  %v57 = vld [vmem:[%s2 + $0x18] sm:$0xff]
  %v58 = vld [vmem:[%s4] sm:$0x1]
  %v59 = vld [vmem:[%s1] sm:$0xff]
  %v60 = vld [vmem:[%s1 + $0x8] sm:$0xff]
  %v61 = vld [vmem:[%s3] sm:$0x1]
  %v63 = vlaneseq
  %v64 = vshrl.u32 %v63, 7
  %v65 = vsub.s32 0, %v64
  %v66 = vrot.slane %v61, %v65
  %vm68 = vcmask 130048
  %v70 = vsel %vm68, %v46, 0
  %v73 = vsel %vm68, %v47, 0
  %v76 = vsel %vm68, %v48, 0
  %v79 = vsel %vm68, %v49, 0
  %v82 = vsel %vm68, %v50, 0
  %v85 = vsel %vm68, %v51, 0
  %v88 = vsel %vm68, %v52, 0
  %v91 = vsel %vm68, %v53, 0
  %93 = vmatprep.subr.mxu0 0.0
  %94 = vmatpush1.msra.mxu0 %v59
  %95 = vmatprep.subr.mxu0 0.0
  %96 = vmatpush1.msra.mxu0 %v60
  %97 = vmatprep.subr.mxu0 0.0
  %98 = vmatpush1.msra.mxu0 0.0
  %99 = vmatprep.subr.mxu0 0.0
  %100 = vmatpush1.msra.mxu0 0.0
  %101 = vmatprep.subr.mxu0 0.0
  %102 = vmatpush1.msra.mxu0 0.0
  %103 = vmatprep.subr.mxu0 0.0
  %104 = vmatpush1.msra.mxu0 0.0
  %105 = vmatprep.subr.mxu0 0.0
  %106 = vmatpush1.msra.mxu0 0.0
  %107 = vmatprep.subr.mxu0 0.0
  %108 = vmatpush1.msra.mxu0 0.0
  %109 = vmatprep.subr.mxu0 0.0
  %110 = vmatpush1.msra.mxu0 0.0
  %111 = vmatprep.subr.mxu0 0.0
  %112 = vmatpush1.msra.mxu0 0.0
  %113 = vmatprep.subr.mxu0 0.0
  %114 = vmatpush1.msra.mxu0 0.0
  %115 = vmatprep.subr.mxu0 0.0
  %116 = vmatpush1.msra.mxu0 0.0
  %117 = vmatprep.subr.mxu0 0.0
  %118 = vmatpush1.msra.mxu0 0.0
  %119 = vmatprep.subr.mxu0 0.0
  %120 = vmatpush1.msra.mxu0 0.0
  %121 = vmatprep.subr.mxu0 0.0
  %122 = vmatpush1.msra.mxu0 0.0
  %123 = vmatprep.subr.mxu0 0.0
  %124 = vmatpush1.msra.mxu0 0.0
  %125 = vmatprep.subr.mxu0 0.0
  %126 = vmatpush1.msra.mxu0 0.0
  %127 = vmatprep.subr.mxu0 0.0
  %128 = vmatpush1.msra.mxu0 0.0
  %129 = vmatprep.subr.mxu0 0.0
  %130 = vmatpush1.msra.mxu0 0.0
  %131 = vmatprep.subr.mxu0 0.0
  %132 = vmatpush1.msra.mxu0 0.0
  %133 = vmatprep.subr.mxu0 0.0
  %134 = vmatpush1.msra.mxu0 0.0
  %135 = vmatprep.subr.mxu0 0.0
  %136 = vmatpush1.msra.mxu0 0.0
  %137 = vmatprep.subr.mxu0 0.0
  %138 = vmatpush1.msra.mxu0 0.0
  %139 = vmatprep.subr.mxu0 0.0
  %140 = vmatpush1.msra.mxu0 0.0
  %141 = vmatprep.subr.mxu0 0.0
  %142 = vmatpush1.msra.mxu0 0.0
  %143 = vmatprep.subr.mxu0 0.0
  %144 = vmatpush1.msra.mxu0 0.0
  %145 = vmatprep.subr.mxu0 0.0
  %146 = vmatpush1.msra.mxu0 0.0
  %147 = vmatprep.subr.mxu0 0.0
  %148 = vmatpush1.msra.mxu0 0.0
  %149 = vmatprep.subr.mxu0 0.0
  %150 = vmatpush1.msra.mxu0 0.0
  %151 = vmatprep.subr.mxu0 0.0
  %152 = vmatpush1.msra.mxu0 0.0
  %153 = vmatprep.subr.mxu0 0.0
  %154 = vmatpush1.msra.mxu0 0.0
  %155 = vmatprep.subr.mxu0 0.0
  %156 = vmatpush1.msra.mxu0 0.0
  %157 = vmatprep.mubr.f32.mxu0 0.0
  %158 = vmatmul.mubr.f32.gmra.mrb[0].mxu0 %v70
  %v159 = vpop.f32.mrb[0].mxu0
  %v160 = vadd.f32 %v66, %v159
  %v161 = vpop.f32.mrb[0].mxu0
  %162 = vmatprep.mubr.f32.mxu0 0.0
  %163 = vmatmul.mubr.f32.gmra.mrb[0].mxu0 %v73
  %v164 = vpop.f32.mrb[0].mxu0
  %v165 = vadd.f32 %v66, %v164
  %v166 = vpop.f32.mrb[0].mxu0
  %167 = vmatprep.mubr.f32.mxu0 0.0
  %168 = vmatmul.mubr.f32.gmra.mrb[0].mxu0 %v76
  %v169 = vpop.f32.mrb[0].mxu0
  %v170 = vadd.f32 %v66, %v169
  %v171 = vpop.f32.mrb[0].mxu0
  %172 = vmatprep.mubr.f32.mxu0 0.0
  %173 = vmatmul.mubr.f32.gmra.mrb[0].mxu0 %v79
  %v174 = vpop.f32.mrb[0].mxu0
  %v175 = vadd.f32 %v66, %v174
  %v176 = vpop.f32.mrb[0].mxu0
  %177 = vmatprep.mubr.f32.mxu0 0.0
  %178 = vmatmul.mubr.f32.gmra.mrb[0].mxu0 %v82
  %v179 = vpop.f32.mrb[0].mxu0
  %v180 = vadd.f32 %v66, %v179
  %v181 = vpop.f32.mrb[0].mxu0
  %182 = vmatprep.mubr.f32.mxu0 0.0
  %183 = vmatmul.mubr.f32.gmra.mrb[0].mxu0 %v85
  %v184 = vpop.f32.mrb[0].mxu0
  %v185 = vadd.f32 %v66, %v184
  %v186 = vpop.f32.mrb[0].mxu0
  %187 = vmatprep.mubr.f32.mxu0 0.0
  %188 = vmatmul.mubr.f32.gmra.mrb[0].mxu0 %v88
  %v189 = vpop.f32.mrb[0].mxu0
  %v190 = vadd.f32 %v66, %v189
  %v191 = vpop.f32.mrb[0].mxu0
  %192 = vmatprep.mubr.f32.mxu0 0.0
  %193 = vmatmul.mubr.f32.gmra.mrb[0].mxu0 %v91
  %v194 = vpop.f32.mrb[0].mxu0
  %v195 = vadd.f32 %v66, %v194
  %v196 = vpop.f32.mrb[0].mxu0
  %197 = vdwg.mxu0
  %vm198 = vcmask 785408
  %199 = vst.msk [vmem:[#allocation2] sm:$0xff] %vm198, %v160
  %200 = vst.msk [vmem:[#allocation2 + $0x8] sm:$0xff] %vm198, %v165
  %201 = vst.msk [vmem:[#allocation2 + $0x10] sm:$0xff] %vm198, %v170
  %202 = vst.msk [vmem:[#allocation2 + $0x18] sm:$0xff] %vm198, %v175
  %203 = vst.msk [vmem:[#allocation2 + $0x20] sm:$0xff] %vm198, %v180
  %204 = vst.msk [vmem:[#allocation2 + $0x28] sm:$0xff] %vm198, %v185
  %205 = vst.msk [vmem:[#allocation2 + $0x30] sm:$0xff] %vm198, %v190
  %206 = vst.msk [vmem:[#allocation2 + $0x38] sm:$0xff] %vm198, %v195
  %v207 = vld [vmem:[#allocation2] sm:$0xff]
  %vm208 = vcmask 261120
  %v210 = vsel %vm208, 0.0, 0
  %212 = vmatprep.subr.mxu0 0.0
  %213 = vmatpush1.msra.mxu0 %v54
  %214 = vmatprep.subr.mxu0 0.0
  %215 = vmatpush1.msra.mxu0 %v55
  %216 = vmatprep.subr.mxu0 0.0
  %217 = vmatpush1.msra.mxu0 %v56
  %218 = vmatprep.subr.mxu0 0.0
  %219 = vmatpush1.msra.mxu0 %v57
  %220 = vmatprep.subr.mxu0 0.0
  %221 = vmatpush1.msra.mxu0 0.0
  %222 = vmatprep.subr.mxu0 0.0
  %223 = vmatpush1.msra.mxu0 0.0
  %224 = vmatprep.subr.mxu0 0.0
  %225 = vmatpush1.msra.mxu0 0.0
  %226 = vmatprep.subr.mxu0 0.0
  %227 = vmatpush1.msra.mxu0 0.0
  %228 = vmatprep.subr.mxu0 0.0
  %229 = vmatpush1.msra.mxu0 0.0
  %230 = vmatprep.subr.mxu0 0.0
  %231 = vmatpush1.msra.mxu0 0.0
  %232 = vmatprep.subr.mxu0 0.0
  %233 = vmatpush1.msra.mxu0 0.0
  %234 = vmatprep.subr.mxu0 0.0
  %235 = vmatpush1.msra.mxu0 0.0
  %236 = vmatprep.subr.mxu0 0.0
  %237 = vmatpush1.msra.mxu0 0.0
  %238 = vmatprep.subr.mxu0 0.0
  %239 = vmatpush1.msra.mxu0 0.0
  %240 = vmatprep.subr.mxu0 0.0
  %241 = vmatpush1.msra.mxu0 0.0
  %242 = vmatprep.subr.mxu0 0.0
  %243 = vmatpush1.msra.mxu0 0.0
  %244 = vmatprep.subr.mxu0 0.0
  %245 = vmatpush1.msra.mxu0 0.0
  %246 = vmatprep.subr.mxu0 0.0
  %247 = vmatpush1.msra.mxu0 0.0
  %248 = vmatprep.subr.mxu0 0.0
  %249 = vmatpush1.msra.mxu0 0.0
  %250 = vmatprep.subr.mxu0 0.0
  %251 = vmatpush1.msra.mxu0 0.0
  %252 = vmatprep.subr.mxu0 0.0
  %253 = vmatpush1.msra.mxu0 0.0
  %254 = vmatprep.subr.mxu0 0.0
  %255 = vmatpush1.msra.mxu0 0.0
  %256 = vmatprep.subr.mxu0 0.0
  %257 = vmatpush1.msra.mxu0 0.0
  %258 = vmatprep.subr.mxu0 0.0
  %259 = vmatpush1.msra.mxu0 0.0
  %260 = vmatprep.subr.mxu0 0.0
  %261 = vmatpush1.msra.mxu0 0.0
  %262 = vmatprep.subr.mxu0 0.0
  %263 = vmatpush1.msra.mxu0 0.0
  %264 = vmatprep.subr.mxu0 0.0
  %265 = vmatpush1.msra.mxu0 0.0
  %266 = vmatprep.subr.mxu0 0.0
  %267 = vmatpush1.msra.mxu0 0.0
  %268 = vmatprep.subr.mxu0 0.0
  %269 = vmatpush1.msra.mxu0 0.0
  %270 = vmatprep.subr.mxu0 0.0
  %271 = vmatpush1.msra.mxu0 0.0
  %272 = vmatprep.subr.mxu0 0.0
  %273 = vmatpush1.msra.mxu0 0.0
  %274 = vmatprep.subr.mxu0 0.0
  %275 = vmatpush1.msra.mxu0 0.0
  %276 = vmatprep.mubr.f32.mxu0 0.0
  %277 = vmatmul.mubr.f32.gmra.mrb[0].mxu0 %v210
  %v278 = vpop.f32.mrb[0].mxu0
  %v279 = vadd.f32 0.0, %v278
  %v280 = vpop.f32.mrb[0].mxu0
  %281 = vdwg.mxu0
  %v282 = vadd.f32 %v207, %v279
  %v283 = vxor.u32 %v282, 2147483648
  %v284 = vmul.f32 %v283, 1.442695
  %v285 = vpow.pop %v284
  %v286 = vadd.f32 %v285, 1.0
  %v287 = vrcp.pop %v286
  %v288 = vmul.f32 1.0, %v287
  %v290 = vlaneseq
  %v291 = vshrl.u32 %v290, 7
  %v292 = vsub.s32 0, %v291
  %v293 = vrot.slane %v58, %v292
  %294 = vrot.lane.b32.xlu0 %v293, 64
  %v295 = vpop.permute.xlu0 %294
  %v297 = vadd.f32 %v279, %v295
  %299 = vrot.lane.b32.xlu0 %v297, 64
  %v300 = vpop.permute.xlu0 %299
  %v302 = vmul.f32 %v288, %v300
  %304 = vrot.lane.b32.xlu0 %v302, 64
  %v305 = vpop.permute.xlu0 %304
  %v307 = vadd.f32 %v207, %v305
  %v308 = vtanh.pop %v307
  %v309 = vsub.f32 1.0, %v288
  %311 = vrot.lane.b32.xlu0 %v308, 96
  %v312 = vpop.permute.xlu0 %311
  %v314 = vmul.f32 %v309, %v312
  %v315 = vmul.f32 %v288, 0.0
  %v316 = vadd.f32 %v314, %v315
  %318 = vrot.lane.b32.xlu0 %v316, 96
  %v319 = vpop.permute.xlu0 %318
  %321 = vst.msk [vmem:[#allocation3] sm:$0xff] %vm208, %v319
  %v322 = vld [vmem:[#allocation2 + $0x8] sm:$0xff]
  %v323 = vsel %vm208, %v319, 0
  %325 = vmatprep.subr.mxu0 0.0
  %326 = vmatpush1.msra.mxu0 %v54
  %327 = vmatprep.subr.mxu0 0.0
  %328 = vmatpush1.msra.mxu0 %v55
  %329 = vmatprep.subr.mxu0 0.0
  %330 = vmatpush1.msra.mxu0 %v56
  %331 = vmatprep.subr.mxu0 0.0
  %332 = vmatpush1.msra.mxu0 %v57
  %333 = vmatprep.subr.mxu0 0.0
  %334 = vmatpush1.msra.mxu0 0.0
  %335 = vmatprep.subr.mxu0 0.0
  %336 = vmatpush1.msra.mxu0 0.0
  %337 = vmatprep.subr.mxu0 0.0
  %338 = vmatpush1.msra.mxu0 0.0
  %339 = vmatprep.subr.mxu0 0.0
  %340 = vmatpush1.msra.mxu0 0.0
  %341 = vmatprep.subr.mxu0 0.0
  %342 = vmatpush1.msra.mxu0 0.0
  %343 = vmatprep.subr.mxu0 0.0
  %344 = vmatpush1.msra.mxu0 0.0
  %345 = vmatprep.subr.mxu0 0.0
  %346 = vmatpush1.msra.mxu0 0.0
  %347 = vmatprep.subr.mxu0 0.0
  %348 = vmatpush1.msra.mxu0 0.0
  %349 = vmatprep.subr.mxu0 0.0
  %350 = vmatpush1.msra.mxu0 0.0
  %351 = vmatprep.subr.mxu0 0.0
  %352 = vmatpush1.msra.mxu0 0.0
  %353 = vmatprep.subr.mxu0 0.0
  %354 = vmatpush1.msra.mxu0 0.0
  %355 = vmatprep.subr.mxu0 0.0
  %356 = vmatpush1.msra.mxu0 0.0
  %357 = vmatprep.subr.mxu0 0.0
  %358 = vmatpush1.msra.mxu0 0.0
  %359 = vmatprep.subr.mxu0 0.0
  %360 = vmatpush1.msra.mxu0 0.0
  %361 = vmatprep.subr.mxu0 0.0
  %362 = vmatpush1.msra.mxu0 0.0
  %363 = vmatprep.subr.mxu0 0.0
  %364 = vmatpush1.msra.mxu0 0.0
  %365 = vmatprep.subr.mxu0 0.0
  %366 = vmatpush1.msra.mxu0 0.0
  %367 = vmatprep.subr.mxu0 0.0
  %368 = vmatpush1.msra.mxu0 0.0
  %369 = vmatprep.subr.mxu0 0.0
  %370 = vmatpush1.msra.mxu0 0.0
  %371 = vmatprep.subr.mxu0 0.0
  %372 = vmatpush1.msra.mxu0 0.0
  %373 = vmatprep.subr.mxu0 0.0
  %374 = vmatpush1.msra.mxu0 0.0
  %375 = vmatprep.subr.mxu0 0.0
  %376 = vmatpush1.msra.mxu0 0.0
  %377 = vmatprep.subr.mxu0 0.0
  %378 = vmatpush1.msra.mxu0 0.0
  %379 = vmatprep.subr.mxu0 0.0
  %380 = vmatpush1.msra.mxu0 0.0
  %381 = vmatprep.subr.mxu0 0.0
  %382 = vmatpush1.msra.mxu0 0.0
  %383 = vmatprep.subr.mxu0 0.0
  %384 = vmatpush1.msra.mxu0 0.0
  %385 = vmatprep.subr.mxu0 0.0
  %386 = vmatpush1.msra.mxu0 0.0
  %387 = vmatprep.subr.mxu0 0.0
  %388 = vmatpush1.msra.mxu0 0.0
  %389 = vmatprep.mubr.f32.mxu0 0.0
  %390 = vmatmul.mubr.f32.gmra.mrb[0].mxu0 %v323
  %v391 = vpop.f32.mrb[0].mxu0
  %v392 = vadd.f32 0.0, %v391
  %v393 = vpop.f32.mrb[0].mxu0
  %394 = vdwg.mxu0
  %v395 = vadd.f32 %v322, %v392
  %v396 = vxor.u32 %v395, 2147483648
  %v397 = vmul.f32 %v396, 1.442695
  %v398 = vpow.pop %v397
  %v399 = vadd.f32 %v398, 1.0
  %v400 = vrcp.pop %v399
  %v401 = vmul.f32 1.0, %v400
  %v402 = vadd.f32 %v392, %v295
  %404 = vrot.lane.b32.xlu0 %v402, 64
  %v405 = vpop.permute.xlu0 %404
  %v407 = vmul.f32 %v401, %v405
  %409 = vrot.lane.b32.xlu0 %v407, 64
  %v410 = vpop.permute.xlu0 %409
  %v412 = vadd.f32 %v322, %v410
  %v413 = vtanh.pop %v412
  %v414 = vsub.f32 1.0, %v401
  %416 = vrot.lane.b32.xlu0 %v413, 96
  %v417 = vpop.permute.xlu0 %416
  %v419 = vmul.f32 %v414, %v417
  %v420 = vmul.f32 %v401, %v316
  %v421 = vadd.f32 %v419, %v420
  %423 = vrot.lane.b32.xlu0 %v421, 96
  %v424 = vpop.permute.xlu0 %423
  %426 = vst.msk [vmem:[#allocation3 + $0x8] sm:$0xff] %vm208, %v424
  %v427 = vld [vmem:[#allocation2 + $0x10] sm:$0xff]
  %v428 = vsel %vm208, %v424, 0
  %430 = vmatprep.subr.mxu0 0.0
  %431 = vmatpush1.msra.mxu0 %v54
  %432 = vmatprep.subr.mxu0 0.0
  %433 = vmatpush1.msra.mxu0 %v55
  %434 = vmatprep.subr.mxu0 0.0
  %435 = vmatpush1.msra.mxu0 %v56
  %436 = vmatprep.subr.mxu0 0.0
  %437 = vmatpush1.msra.mxu0 %v57
  %438 = vmatprep.subr.mxu0 0.0
  %439 = vmatpush1.msra.mxu0 0.0
  %440 = vmatprep.subr.mxu0 0.0
  %441 = vmatpush1.msra.mxu0 0.0
  %442 = vmatprep.subr.mxu0 0.0
  %443 = vmatpush1.msra.mxu0 0.0
  %444 = vmatprep.subr.mxu0 0.0
  %445 = vmatpush1.msra.mxu0 0.0
  %446 = vmatprep.subr.mxu0 0.0
  %447 = vmatpush1.msra.mxu0 0.0
  %448 = vmatprep.subr.mxu0 0.0
  %449 = vmatpush1.msra.mxu0 0.0
  %450 = vmatprep.subr.mxu0 0.0
  %451 = vmatpush1.msra.mxu0 0.0
  %452 = vmatprep.subr.mxu0 0.0
  %453 = vmatpush1.msra.mxu0 0.0
  %454 = vmatprep.subr.mxu0 0.0
  %455 = vmatpush1.msra.mxu0 0.0
  %456 = vmatprep.subr.mxu0 0.0
  %457 = vmatpush1.msra.mxu0 0.0
  %458 = vmatprep.subr.mxu0 0.0
  %459 = vmatpush1.msra.mxu0 0.0
  %460 = vmatprep.subr.mxu0 0.0
  %461 = vmatpush1.msra.mxu0 0.0
  %462 = vmatprep.subr.mxu0 0.0
  %463 = vmatpush1.msra.mxu0 0.0
  %464 = vmatprep.subr.mxu0 0.0
  %465 = vmatpush1.msra.mxu0 0.0
  %466 = vmatprep.subr.mxu0 0.0
  %467 = vmatpush1.msra.mxu0 0.0
  %468 = vmatprep.subr.mxu0 0.0
  %469 = vmatpush1.msra.mxu0 0.0
  %470 = vmatprep.subr.mxu0 0.0
  %471 = vmatpush1.msra.mxu0 0.0
  %472 = vmatprep.subr.mxu0 0.0
  %473 = vmatpush1.msra.mxu0 0.0
  %474 = vmatprep.subr.mxu0 0.0
  %475 = vmatpush1.msra.mxu0 0.0
  %476 = vmatprep.subr.mxu0 0.0
  %477 = vmatpush1.msra.mxu0 0.0
  %478 = vmatprep.subr.mxu0 0.0
  %479 = vmatpush1.msra.mxu0 0.0
  %480 = vmatprep.subr.mxu0 0.0
  %481 = vmatpush1.msra.mxu0 0.0
  %482 = vmatprep.subr.mxu0 0.0
  %483 = vmatpush1.msra.mxu0 0.0
  %484 = vmatprep.subr.mxu0 0.0
  %485 = vmatpush1.msra.mxu0 0.0
  %486 = vmatprep.subr.mxu0 0.0
  %487 = vmatpush1.msra.mxu0 0.0
  %488 = vmatprep.subr.mxu0 0.0
  %489 = vmatpush1.msra.mxu0 0.0
  %490 = vmatprep.subr.mxu0 0.0
  %491 = vmatpush1.msra.mxu0 0.0
  %492 = vmatprep.subr.mxu0 0.0
  %493 = vmatpush1.msra.mxu0 0.0
  %494 = vmatprep.mubr.f32.mxu0 0.0
  %495 = vmatmul.mubr.f32.gmra.mrb[0].mxu0 %v428
  %v496 = vpop.f32.mrb[0].mxu0
  %v497 = vadd.f32 0.0, %v496
  %v498 = vpop.f32.mrb[0].mxu0
  %499 = vdwg.mxu0
  %v500 = vadd.f32 %v427, %v497
  %v501 = vxor.u32 %v500, 2147483648
  %v502 = vmul.f32 %v501, 1.442695
  %v503 = vpow.pop %v502
  %v504 = vadd.f32 %v503, 1.0
  %v505 = vrcp.pop %v504
  %v506 = vmul.f32 1.0, %v505
  %v507 = vadd.f32 %v497, %v295
  %509 = vrot.lane.b32.xlu0 %v507, 64
  %v510 = vpop.permute.xlu0 %509
  %v512 = vmul.f32 %v506, %v510
  %514 = vrot.lane.b32.xlu0 %v512, 64
  %v515 = vpop.permute.xlu0 %514
  %v517 = vadd.f32 %v427, %v515
  %v518 = vtanh.pop %v517
  %v519 = vsub.f32 1.0, %v506
  %521 = vrot.lane.b32.xlu0 %v518, 96
  %v522 = vpop.permute.xlu0 %521
  %v524 = vmul.f32 %v519, %v522
  %v525 = vmul.f32 %v506, %v421
  %v526 = vadd.f32 %v524, %v525
  %528 = vrot.lane.b32.xlu0 %v526, 96
  %v529 = vpop.permute.xlu0 %528
  %531 = vst.msk [vmem:[#allocation3 + $0x10] sm:$0xff] %vm208, %v529
  %v532 = vld [vmem:[#allocation2 + $0x18] sm:$0xff]
  %v533 = vsel %vm208, %v529, 0
  %535 = vmatprep.subr.mxu0 0.0
  %536 = vmatpush1.msra.mxu0 %v54
  %537 = vmatprep.subr.mxu0 0.0
  %538 = vmatpush1.msra.mxu0 %v55
  %539 = vmatprep.subr.mxu0 0.0
  %540 = vmatpush1.msra.mxu0 %v56
  %541 = vmatprep.subr.mxu0 0.0
  %542 = vmatpush1.msra.mxu0 %v57
  %543 = vmatprep.subr.mxu0 0.0
  %544 = vmatpush1.msra.mxu0 0.0
  %545 = vmatprep.subr.mxu0 0.0
  %546 = vmatpush1.msra.mxu0 0.0
  %547 = vmatprep.subr.mxu0 0.0
  %548 = vmatpush1.msra.mxu0 0.0
  %549 = vmatprep.subr.mxu0 0.0
  %550 = vmatpush1.msra.mxu0 0.0
  %551 = vmatprep.subr.mxu0 0.0
  %552 = vmatpush1.msra.mxu0 0.0
  %553 = vmatprep.subr.mxu0 0.0
  %554 = vmatpush1.msra.mxu0 0.0
  %555 = vmatprep.subr.mxu0 0.0
  %556 = vmatpush1.msra.mxu0 0.0
  %557 = vmatprep.subr.mxu0 0.0
  %558 = vmatpush1.msra.mxu0 0.0
  %559 = vmatprep.subr.mxu0 0.0
  %560 = vmatpush1.msra.mxu0 0.0
  %561 = vmatprep.subr.mxu0 0.0
  %562 = vmatpush1.msra.mxu0 0.0
  %563 = vmatprep.subr.mxu0 0.0
  %564 = vmatpush1.msra.mxu0 0.0
  %565 = vmatprep.subr.mxu0 0.0
  %566 = vmatpush1.msra.mxu0 0.0
  %567 = vmatprep.subr.mxu0 0.0
  %568 = vmatpush1.msra.mxu0 0.0
  %569 = vmatprep.subr.mxu0 0.0
  %570 = vmatpush1.msra.mxu0 0.0
  %571 = vmatprep.subr.mxu0 0.0
  %572 = vmatpush1.msra.mxu0 0.0
  %573 = vmatprep.subr.mxu0 0.0
  %574 = vmatpush1.msra.mxu0 0.0
  %575 = vmatprep.subr.mxu0 0.0
  %576 = vmatpush1.msra.mxu0 0.0
  %577 = vmatprep.subr.mxu0 0.0
  %578 = vmatpush1.msra.mxu0 0.0
  %579 = vmatprep.subr.mxu0 0.0
  %580 = vmatpush1.msra.mxu0 0.0
  %581 = vmatprep.subr.mxu0 0.0
  %582 = vmatpush1.msra.mxu0 0.0
  %583 = vmatprep.subr.mxu0 0.0
  %584 = vmatpush1.msra.mxu0 0.0
  %585 = vmatprep.subr.mxu0 0.0
  %586 = vmatpush1.msra.mxu0 0.0
  %587 = vmatprep.subr.mxu0 0.0
  %588 = vmatpush1.msra.mxu0 0.0
  %589 = vmatprep.subr.mxu0 0.0
  %590 = vmatpush1.msra.mxu0 0.0
  %591 = vmatprep.subr.mxu0 0.0
  %592 = vmatpush1.msra.mxu0 0.0
  %593 = vmatprep.subr.mxu0 0.0
  %594 = vmatpush1.msra.mxu0 0.0
  %595 = vmatprep.subr.mxu0 0.0
  %596 = vmatpush1.msra.mxu0 0.0
  %597 = vmatprep.subr.mxu0 0.0
  %598 = vmatpush1.msra.mxu0 0.0
  %599 = vmatprep.mubr.f32.mxu0 0.0
  %600 = vmatmul.mubr.f32.gmra.mrb[0].mxu0 %v533
  %v601 = vpop.f32.mrb[0].mxu0
  %v602 = vadd.f32 0.0, %v601
  %v603 = vpop.f32.mrb[0].mxu0
  %604 = vdwg.mxu0
  %v605 = vadd.f32 %v532, %v602
  %v606 = vxor.u32 %v605, 2147483648
  %v607 = vmul.f32 %v606, 1.442695
  %v608 = vpow.pop %v607
  %v609 = vadd.f32 %v608, 1.0
  %v610 = vrcp.pop %v609
  %v611 = vmul.f32 1.0, %v610
  %v612 = vadd.f32 %v602, %v295
  %614 = vrot.lane.b32.xlu0 %v612, 64
  %v615 = vpop.permute.xlu0 %614
  %v617 = vmul.f32 %v611, %v615
  %619 = vrot.lane.b32.xlu0 %v617, 64
  %v620 = vpop.permute.xlu0 %619
  %v622 = vadd.f32 %v532, %v620
  %v623 = vtanh.pop %v622
  %v624 = vsub.f32 1.0, %v611
  %626 = vrot.lane.b32.xlu0 %v623, 96
  %v627 = vpop.permute.xlu0 %626
  %v629 = vmul.f32 %v624, %v627
  %v630 = vmul.f32 %v611, %v526
  %v631 = vadd.f32 %v629, %v630
  %633 = vrot.lane.b32.xlu0 %v631, 96
  %v634 = vpop.permute.xlu0 %633
  %636 = vst.msk [vmem:[#allocation3 + $0x18] sm:$0xff] %vm208, %v634
  %v637 = vld [vmem:[#allocation2 + $0x20] sm:$0xff]
  %v638 = vsel %vm208, %v634, 0
  %640 = vmatprep.subr.mxu0 0.0
  %641 = vmatpush1.msra.mxu0 %v54
  %642 = vmatprep.subr.mxu0 0.0
  %643 = vmatpush1.msra.mxu0 %v55
  %644 = vmatprep.subr.mxu0 0.0
  %645 = vmatpush1.msra.mxu0 %v56
  %646 = vmatprep.subr.mxu0 0.0
  %647 = vmatpush1.msra.mxu0 %v57
  %648 = vmatprep.subr.mxu0 0.0
  %649 = vmatpush1.msra.mxu0 0.0
  %650 = vmatprep.subr.mxu0 0.0
  %651 = vmatpush1.msra.mxu0 0.0
  %652 = vmatprep.subr.mxu0 0.0
  %653 = vmatpush1.msra.mxu0 0.0
  %654 = vmatprep.subr.mxu0 0.0
  %655 = vmatpush1.msra.mxu0 0.0
  %656 = vmatprep.subr.mxu0 0.0
  %657 = vmatpush1.msra.mxu0 0.0
  %658 = vmatprep.subr.mxu0 0.0
  %659 = vmatpush1.msra.mxu0 0.0
  %660 = vmatprep.subr.mxu0 0.0
  %661 = vmatpush1.msra.mxu0 0.0
  %662 = vmatprep.subr.mxu0 0.0
  %663 = vmatpush1.msra.mxu0 0.0
  %664 = vmatprep.subr.mxu0 0.0
  %665 = vmatpush1.msra.mxu0 0.0
  %666 = vmatprep.subr.mxu0 0.0
  %667 = vmatpush1.msra.mxu0 0.0
  %668 = vmatprep.subr.mxu0 0.0
  %669 = vmatpush1.msra.mxu0 0.0
  %670 = vmatprep.subr.mxu0 0.0
  %671 = vmatpush1.msra.mxu0 0.0
  %672 = vmatprep.subr.mxu0 0.0
  %673 = vmatpush1.msra.mxu0 0.0
  %674 = vmatprep.subr.mxu0 0.0
  %675 = vmatpush1.msra.mxu0 0.0
  %676 = vmatprep.subr.mxu0 0.0
  %677 = vmatpush1.msra.mxu0 0.0
  %678 = vmatprep.subr.mxu0 0.0
  %679 = vmatpush1.msra.mxu0 0.0
  %680 = vmatprep.subr.mxu0 0.0
  %681 = vmatpush1.msra.mxu0 0.0
  %682 = vmatprep.subr.mxu0 0.0
  %683 = vmatpush1.msra.mxu0 0.0
  %684 = vmatprep.subr.mxu0 0.0
  %685 = vmatpush1.msra.mxu0 0.0
  %686 = vmatprep.subr.mxu0 0.0
  %687 = vmatpush1.msra.mxu0 0.0
  %688 = vmatprep.subr.mxu0 0.0
  %689 = vmatpush1.msra.mxu0 0.0
  %690 = vmatprep.subr.mxu0 0.0
  %691 = vmatpush1.msra.mxu0 0.0
  %692 = vmatprep.subr.mxu0 0.0
  %693 = vmatpush1.msra.mxu0 0.0
  %694 = vmatprep.subr.mxu0 0.0
  %695 = vmatpush1.msra.mxu0 0.0
  %696 = vmatprep.subr.mxu0 0.0
  %697 = vmatpush1.msra.mxu0 0.0
  %698 = vmatprep.subr.mxu0 0.0
  %699 = vmatpush1.msra.mxu0 0.0
  %700 = vmatprep.subr.mxu0 0.0
  %701 = vmatpush1.msra.mxu0 0.0
  %702 = vmatprep.subr.mxu0 0.0
  %703 = vmatpush1.msra.mxu0 0.0
  %704 = vmatprep.mubr.f32.mxu0 0.0
  %705 = vmatmul.mubr.f32.gmra.mrb[0].mxu0 %v638
  %v706 = vpop.f32.mrb[0].mxu0
  %v707 = vadd.f32 0.0, %v706
  %v708 = vpop.f32.mrb[0].mxu0
  %709 = vdwg.mxu0
  %v710 = vadd.f32 %v637, %v707
  %v711 = vxor.u32 %v710, 2147483648
  %v712 = vmul.f32 %v711, 1.442695
  %v713 = vpow.pop %v712
  %v714 = vadd.f32 %v713, 1.0
  %v715 = vrcp.pop %v714
  %v716 = vmul.f32 1.0, %v715
  %v717 = vadd.f32 %v707, %v295
  %719 = vrot.lane.b32.xlu0 %v717, 64
  %v720 = vpop.permute.xlu0 %719
  %v722 = vmul.f32 %v716, %v720
  %724 = vrot.lane.b32.xlu0 %v722, 64
  %v725 = vpop.permute.xlu0 %724
  %v727 = vadd.f32 %v637, %v725
  %v728 = vtanh.pop %v727
  %v729 = vsub.f32 1.0, %v716
  %731 = vrot.lane.b32.xlu0 %v728, 96
  %v732 = vpop.permute.xlu0 %731
  %v734 = vmul.f32 %v729, %v732
  %v735 = vmul.f32 %v716, %v631
  %v736 = vadd.f32 %v734, %v735
  %738 = vrot.lane.b32.xlu0 %v736, 96
  %v739 = vpop.permute.xlu0 %738
  %741 = vst.msk [vmem:[#allocation3 + $0x20] sm:$0xff] %vm208, %v739
  %v742 = vld [vmem:[#allocation2 + $0x28] sm:$0xff]
  %v743 = vsel %vm208, %v739, 0
  %745 = vmatprep.subr.mxu0 0.0
  %746 = vmatpush1.msra.mxu0 %v54
  %747 = vmatprep.subr.mxu0 0.0
  %748 = vmatpush1.msra.mxu0 %v55
  %749 = vmatprep.subr.mxu0 0.0
  %750 = vmatpush1.msra.mxu0 %v56
  %751 = vmatprep.subr.mxu0 0.0
  %752 = vmatpush1.msra.mxu0 %v57
  %753 = vmatprep.subr.mxu0 0.0
  %754 = vmatpush1.msra.mxu0 0.0
  %755 = vmatprep.subr.mxu0 0.0
  %756 = vmatpush1.msra.mxu0 0.0
  %757 = vmatprep.subr.mxu0 0.0
  %758 = vmatpush1.msra.mxu0 0.0
  %759 = vmatprep.subr.mxu0 0.0
  %760 = vmatpush1.msra.mxu0 0.0
  %761 = vmatprep.subr.mxu0 0.0
  %762 = vmatpush1.msra.mxu0 0.0
  %763 = vmatprep.subr.mxu0 0.0
  %764 = vmatpush1.msra.mxu0 0.0
  %765 = vmatprep.subr.mxu0 0.0
  %766 = vmatpush1.msra.mxu0 0.0
  %767 = vmatprep.subr.mxu0 0.0
  %768 = vmatpush1.msra.mxu0 0.0
  %769 = vmatprep.subr.mxu0 0.0
  %770 = vmatpush1.msra.mxu0 0.0
  %771 = vmatprep.subr.mxu0 0.0
  %772 = vmatpush1.msra.mxu0 0.0
  %773 = vmatprep.subr.mxu0 0.0
  %774 = vmatpush1.msra.mxu0 0.0
  %775 = vmatprep.subr.mxu0 0.0
  %776 = vmatpush1.msra.mxu0 0.0
  %777 = vmatprep.subr.mxu0 0.0
  %778 = vmatpush1.msra.mxu0 0.0
  %779 = vmatprep.subr.mxu0 0.0
  %780 = vmatpush1.msra.mxu0 0.0
  %781 = vmatprep.subr.mxu0 0.0
  %782 = vmatpush1.msra.mxu0 0.0
  %783 = vmatprep.subr.mxu0 0.0
  %784 = vmatpush1.msra.mxu0 0.0
  %785 = vmatprep.subr.mxu0 0.0
  %786 = vmatpush1.msra.mxu0 0.0
  %787 = vmatprep.subr.mxu0 0.0
  %788 = vmatpush1.msra.mxu0 0.0
  %789 = vmatprep.subr.mxu0 0.0
  %790 = vmatpush1.msra.mxu0 0.0
  %791 = vmatprep.subr.mxu0 0.0
  %792 = vmatpush1.msra.mxu0 0.0
  %793 = vmatprep.subr.mxu0 0.0
  %794 = vmatpush1.msra.mxu0 0.0
  %795 = vmatprep.subr.mxu0 0.0
  %796 = vmatpush1.msra.mxu0 0.0
  %797 = vmatprep.subr.mxu0 0.0
  %798 = vmatpush1.msra.mxu0 0.0
  %799 = vmatprep.subr.mxu0 0.0
  %800 = vmatpush1.msra.mxu0 0.0
  %801 = vmatprep.subr.mxu0 0.0
  %802 = vmatpush1.msra.mxu0 0.0
  %803 = vmatprep.subr.mxu0 0.0
  %804 = vmatpush1.msra.mxu0 0.0
  %805 = vmatprep.subr.mxu0 0.0
  %806 = vmatpush1.msra.mxu0 0.0
  %807 = vmatprep.subr.mxu0 0.0
  %808 = vmatpush1.msra.mxu0 0.0
  %809 = vmatprep.mubr.f32.mxu0 0.0
  %810 = vmatmul.mubr.f32.gmra.mrb[0].mxu0 %v743
  %v811 = vpop.f32.mrb[0].mxu0
  %v812 = vadd.f32 0.0, %v811
  %v813 = vpop.f32.mrb[0].mxu0
  %814 = vdwg.mxu0
  %v815 = vadd.f32 %v742, %v812
  %v816 = vxor.u32 %v815, 2147483648
  %v817 = vmul.f32 %v816, 1.442695
  %v818 = vpow.pop %v817
  %v819 = vadd.f32 %v818, 1.0
  %v820 = vrcp.pop %v819
  %v821 = vmul.f32 1.0, %v820
  %v822 = vadd.f32 %v812, %v295
  %824 = vrot.lane.b32.xlu0 %v822, 64
  %v825 = vpop.permute.xlu0 %824
  %v827 = vmul.f32 %v821, %v825
  %829 = vrot.lane.b32.xlu0 %v827, 64
  %v830 = vpop.permute.xlu0 %829
  %v832 = vadd.f32 %v742, %v830
  %v833 = vtanh.pop %v832
  %v834 = vsub.f32 1.0, %v821
  %836 = vrot.lane.b32.xlu0 %v833, 96
  %v837 = vpop.permute.xlu0 %836
  %v839 = vmul.f32 %v834, %v837
  %v840 = vmul.f32 %v821, %v736
  %v841 = vadd.f32 %v839, %v840
  %843 = vrot.lane.b32.xlu0 %v841, 96
  %v844 = vpop.permute.xlu0 %843
  %846 = vst.msk [vmem:[#allocation3 + $0x28] sm:$0xff] %vm208, %v844
  %v847 = vld [vmem:[#allocation2 + $0x30] sm:$0xff]
  %v848 = vsel %vm208, %v844, 0
  %850 = vmatprep.subr.mxu0 0.0
  %851 = vmatpush1.msra.mxu0 %v54
  %852 = vmatprep.subr.mxu0 0.0
  %853 = vmatpush1.msra.mxu0 %v55
  %854 = vmatprep.subr.mxu0 0.0
  %855 = vmatpush1.msra.mxu0 %v56
  %856 = vmatprep.subr.mxu0 0.0
  %857 = vmatpush1.msra.mxu0 %v57
  %858 = vmatprep.subr.mxu0 0.0
  %859 = vmatpush1.msra.mxu0 0.0
  %860 = vmatprep.subr.mxu0 0.0
  %861 = vmatpush1.msra.mxu0 0.0
  %862 = vmatprep.subr.mxu0 0.0
  %863 = vmatpush1.msra.mxu0 0.0
  %864 = vmatprep.subr.mxu0 0.0
  %865 = vmatpush1.msra.mxu0 0.0
  %866 = vmatprep.subr.mxu0 0.0
  %867 = vmatpush1.msra.mxu0 0.0
  %868 = vmatprep.subr.mxu0 0.0
  %869 = vmatpush1.msra.mxu0 0.0
  %870 = vmatprep.subr.mxu0 0.0
  %871 = vmatpush1.msra.mxu0 0.0
  %872 = vmatprep.subr.mxu0 0.0
  %873 = vmatpush1.msra.mxu0 0.0
  %874 = vmatprep.subr.mxu0 0.0
  %875 = vmatpush1.msra.mxu0 0.0
  %876 = vmatprep.subr.mxu0 0.0
  %877 = vmatpush1.msra.mxu0 0.0
  %878 = vmatprep.subr.mxu0 0.0
  %879 = vmatpush1.msra.mxu0 0.0
  %880 = vmatprep.subr.mxu0 0.0
  %881 = vmatpush1.msra.mxu0 0.0
  %882 = vmatprep.subr.mxu0 0.0
  %883 = vmatpush1.msra.mxu0 0.0
  %884 = vmatprep.subr.mxu0 0.0
  %885 = vmatpush1.msra.mxu0 0.0
  %886 = vmatprep.subr.mxu0 0.0
  %887 = vmatpush1.msra.mxu0 0.0
  %888 = vmatprep.subr.mxu0 0.0
  %889 = vmatpush1.msra.mxu0 0.0
  %890 = vmatprep.subr.mxu0 0.0
  %891 = vmatpush1.msra.mxu0 0.0
  %892 = vmatprep.subr.mxu0 0.0
  %893 = vmatpush1.msra.mxu0 0.0
  %894 = vmatprep.subr.mxu0 0.0
  %895 = vmatpush1.msra.mxu0 0.0
  %896 = vmatprep.subr.mxu0 0.0
  %897 = vmatpush1.msra.mxu0 0.0
  %898 = vmatprep.subr.mxu0 0.0
  %899 = vmatpush1.msra.mxu0 0.0
  %900 = vmatprep.subr.mxu0 0.0
  %901 = vmatpush1.msra.mxu0 0.0
  %902 = vmatprep.subr.mxu0 0.0
  %903 = vmatpush1.msra.mxu0 0.0
  %904 = vmatprep.subr.mxu0 0.0
  %905 = vmatpush1.msra.mxu0 0.0
  %906 = vmatprep.subr.mxu0 0.0
  %907 = vmatpush1.msra.mxu0 0.0
  %908 = vmatprep.subr.mxu0 0.0
  %909 = vmatpush1.msra.mxu0 0.0
  %910 = vmatprep.subr.mxu0 0.0
  %911 = vmatpush1.msra.mxu0 0.0
  %912 = vmatprep.subr.mxu0 0.0
  %913 = vmatpush1.msra.mxu0 0.0
  %914 = vmatprep.mubr.f32.mxu0 0.0
  %915 = vmatmul.mubr.f32.gmra.mrb[0].mxu0 %v848
  %v916 = vpop.f32.mrb[0].mxu0
  %v917 = vadd.f32 0.0, %v916
  %v918 = vpop.f32.mrb[0].mxu0
  %919 = vdwg.mxu0
  %v920 = vadd.f32 %v847, %v917
  %v921 = vxor.u32 %v920, 2147483648
  %v922 = vmul.f32 %v921, 1.442695
  %v923 = vpow.pop %v922
  %v924 = vadd.f32 %v923, 1.0
  %v925 = vrcp.pop %v924
  %v926 = vmul.f32 1.0, %v925
  %v927 = vadd.f32 %v917, %v295
  %929 = vrot.lane.b32.xlu0 %v927, 64
  %v930 = vpop.permute.xlu0 %929
  %v932 = vmul.f32 %v926, %v930
  %934 = vrot.lane.b32.xlu0 %v932, 64
  %v935 = vpop.permute.xlu0 %934
  %v937 = vadd.f32 %v847, %v935
  %v938 = vtanh.pop %v937
  %v939 = vsub.f32 1.0, %v926
  %941 = vrot.lane.b32.xlu0 %v938, 96
  %v942 = vpop.permute.xlu0 %941
  %v944 = vmul.f32 %v939, %v942
  %v945 = vmul.f32 %v926, %v841
  %v946 = vadd.f32 %v944, %v945
  %948 = vrot.lane.b32.xlu0 %v946, 96
  %v949 = vpop.permute.xlu0 %948
  %951 = vst.msk [vmem:[#allocation3 + $0x30] sm:$0xff] %vm208, %v949
  %v952 = vld [vmem:[#allocation2 + $0x38] sm:$0xff]
  %v953 = vsel %vm208, %v949, 0
  %955 = vmatprep.subr.mxu0 0.0
  %956 = vmatpush1.msra.mxu0 %v54
  %957 = vmatprep.subr.mxu0 0.0
  %958 = vmatpush1.msra.mxu0 %v55
  %959 = vmatprep.subr.mxu0 0.0
  %960 = vmatpush1.msra.mxu0 %v56
  %961 = vmatprep.subr.mxu0 0.0
  %962 = vmatpush1.msra.mxu0 %v57
  %963 = vmatprep.subr.mxu0 0.0
  %964 = vmatpush1.msra.mxu0 0.0
  %965 = vmatprep.subr.mxu0 0.0
  %966 = vmatpush1.msra.mxu0 0.0
  %967 = vmatprep.subr.mxu0 0.0
  %968 = vmatpush1.msra.mxu0 0.0
  %969 = vmatprep.subr.mxu0 0.0
  %970 = vmatpush1.msra.mxu0 0.0
  %971 = vmatprep.subr.mxu0 0.0
  %972 = vmatpush1.msra.mxu0 0.0
  %973 = vmatprep.subr.mxu0 0.0
  %974 = vmatpush1.msra.mxu0 0.0
  %975 = vmatprep.subr.mxu0 0.0
  %976 = vmatpush1.msra.mxu0 0.0
  %977 = vmatprep.subr.mxu0 0.0
  %978 = vmatpush1.msra.mxu0 0.0
  %979 = vmatprep.subr.mxu0 0.0
  %980 = vmatpush1.msra.mxu0 0.0
  %981 = vmatprep.subr.mxu0 0.0
  %982 = vmatpush1.msra.mxu0 0.0
  %983 = vmatprep.subr.mxu0 0.0
  %984 = vmatpush1.msra.mxu0 0.0
  %985 = vmatprep.subr.mxu0 0.0
  %986 = vmatpush1.msra.mxu0 0.0
  %987 = vmatprep.subr.mxu0 0.0
  %988 = vmatpush1.msra.mxu0 0.0
  %989 = vmatprep.subr.mxu0 0.0
  %990 = vmatpush1.msra.mxu0 0.0
  %991 = vmatprep.subr.mxu0 0.0
  %992 = vmatpush1.msra.mxu0 0.0
  %993 = vmatprep.subr.mxu0 0.0
  %994 = vmatpush1.msra.mxu0 0.0
  %995 = vmatprep.subr.mxu0 0.0
  %996 = vmatpush1.msra.mxu0 0.0
  %997 = vmatprep.subr.mxu0 0.0
  %998 = vmatpush1.msra.mxu0 0.0
  %999 = vmatprep.subr.mxu0 0.0
  %1000 = vmatpush1.msra.mxu0 0.0
  %1001 = vmatprep.subr.mxu0 0.0
  %1002 = vmatpush1.msra.mxu0 0.0
  %1003 = vmatprep.subr.mxu0 0.0
  %1004 = vmatpush1.msra.mxu0 0.0
  %1005 = vmatprep.subr.mxu0 0.0
  %1006 = vmatpush1.msra.mxu0 0.0
  %1007 = vmatprep.subr.mxu0 0.0
  %1008 = vmatpush1.msra.mxu0 0.0
  %1009 = vmatprep.subr.mxu0 0.0
  %1010 = vmatpush1.msra.mxu0 0.0
  %1011 = vmatprep.subr.mxu0 0.0
  %1012 = vmatpush1.msra.mxu0 0.0
  %1013 = vmatprep.subr.mxu0 0.0
  %1014 = vmatpush1.msra.mxu0 0.0
  %1015 = vmatprep.subr.mxu0 0.0
  %1016 = vmatpush1.msra.mxu0 0.0
  %1017 = vmatprep.subr.mxu0 0.0
  %1018 = vmatpush1.msra.mxu0 0.0
  %1019 = vmatprep.mubr.f32.mxu0 0.0
  %1020 = vmatmul.mubr.f32.gmra.mrb[0].mxu0 %v953
  %v1021 = vpop.f32.mrb[0].mxu0
  %v1022 = vadd.f32 0.0, %v1021
  %v1023 = vpop.f32.mrb[0].mxu0
  %1024 = vdwg.mxu0
  %v1025 = vadd.f32 %v952, %v1022
  %v1026 = vxor.u32 %v1025, 2147483648
  %v1027 = vmul.f32 %v1026, 1.442695
  %v1028 = vpow.pop %v1027
  %v1029 = vadd.f32 %v1028, 1.0
  %v1030 = vrcp.pop %v1029
  %v1031 = vmul.f32 1.0, %v1030
  %v1032 = vadd.f32 %v1022, %v295
  %1034 = vrot.lane.b32.xlu0 %v1032, 64
  %v1035 = vpop.permute.xlu0 %1034
  %v1037 = vmul.f32 %v1031, %v1035
  %1039 = vrot.lane.b32.xlu0 %v1037, 64
  %v1040 = vpop.permute.xlu0 %1039
  %v1042 = vadd.f32 %v952, %v1040
  %v1043 = vtanh.pop %v1042
  %v1044 = vsub.f32 1.0, %v1031
  %1046 = vrot.lane.b32.xlu0 %v1043, 96
  %v1047 = vpop.permute.xlu0 %1046
  %v1049 = vmul.f32 %v1044, %v1047
  %v1050 = vmul.f32 %v1031, %v946
  %v1051 = vadd.f32 %v1049, %v1050
  %1053 = vrot.lane.b32.xlu0 %v1051, 96
  %v1054 = vpop.permute.xlu0 %1053
  %1056 = vst.msk [vmem:[#allocation3 + $0x38] sm:$0xff] %vm208, %v1054
  %v1057 = vld [vmem:[#allocation3] sm:$0xff]
  %v1058 = vld [vmem:[#allocation3 + $0x8] sm:$0xff]
  %v1059 = vld [vmem:[#allocation3 + $0x10] sm:$0xff]
  %v1060 = vld [vmem:[#allocation3 + $0x18] sm:$0xff]
  %v1061 = vld [vmem:[#allocation3 + $0x20] sm:$0xff]
  %v1062 = vld [vmem:[#allocation3 + $0x28] sm:$0xff]
  %v1063 = vld [vmem:[#allocation3 + $0x30] sm:$0xff]
  %v1064 = vld [vmem:[#allocation3 + $0x38] sm:$0xff]
  %v1065 = vld [vmem:[%s6] sm:$0xff]
  %v1066 = vld [vmem:[%s6 + $0x8] sm:$0xff]
  %v1067 = vld [vmem:[%s6 + $0x10] sm:$0xff]
  %v1068 = vld [vmem:[%s6 + $0x18] sm:$0xff]
  %v1069 = vld [vmem:[%s8] sm:$0x1]
  %v1070 = vld [vmem:[%s5] sm:$0xff]
  %v1071 = vld [vmem:[%s5 + $0x8] sm:$0xff]
  %v1072 = vld [vmem:[%s5 + $0x10] sm:$0xff]
  %v1073 = vld [vmem:[%s5 + $0x18] sm:$0xff]
  %v1074 = vld [vmem:[%s7] sm:$0x1]
  %v1076 = vlaneseq
  %v1077 = vshrl.u32 %v1076, 7
  %v1078 = vsub.s32 0, %v1077
  %v1079 = vrot.slane %v1074, %v1078
  %v1082 = vsel %vm208, %v1057, 0
  %v1085 = vsel %vm208, %v1058, 0
  %v1088 = vsel %vm208, %v1059, 0
  %v1091 = vsel %vm208, %v1060, 0
  %v1094 = vsel %vm208, %v1061, 0
  %v1097 = vsel %vm208, %v1062, 0
  %v1100 = vsel %vm208, %v1063, 0
  %v1103 = vsel %vm208, %v1064, 0
  %1105 = vmatprep.subr.mxu0 0.0
  %1106 = vmatpush1.msra.mxu0 %v1070
  %1107 = vmatprep.subr.mxu0 0.0
  %1108 = vmatpush1.msra.mxu0 %v1071
  %1109 = vmatprep.subr.mxu0 0.0
  %1110 = vmatpush1.msra.mxu0 %v1072
  %1111 = vmatprep.subr.mxu0 0.0
  %1112 = vmatpush1.msra.mxu0 %v1073
  %1113 = vmatprep.subr.mxu0 0.0
  %1114 = vmatpush1.msra.mxu0 0.0
  %1115 = vmatprep.subr.mxu0 0.0
  %1116 = vmatpush1.msra.mxu0 0.0
  %1117 = vmatprep.subr.mxu0 0.0
  %1118 = vmatpush1.msra.mxu0 0.0
  %1119 = vmatprep.subr.mxu0 0.0
  %1120 = vmatpush1.msra.mxu0 0.0
  %1121 = vmatprep.subr.mxu0 0.0
  %1122 = vmatpush1.msra.mxu0 0.0
  %1123 = vmatprep.subr.mxu0 0.0
  %1124 = vmatpush1.msra.mxu0 0.0
  %1125 = vmatprep.subr.mxu0 0.0
  %1126 = vmatpush1.msra.mxu0 0.0
  %1127 = vmatprep.subr.mxu0 0.0
  %1128 = vmatpush1.msra.mxu0 0.0
  %1129 = vmatprep.subr.mxu0 0.0
  %1130 = vmatpush1.msra.mxu0 0.0
  %1131 = vmatprep.subr.mxu0 0.0
  %1132 = vmatpush1.msra.mxu0 0.0
  %1133 = vmatprep.subr.mxu0 0.0
  %1134 = vmatpush1.msra.mxu0 0.0
  %1135 = vmatprep.subr.mxu0 0.0
  %1136 = vmatpush1.msra.mxu0 0.0
  %1137 = vmatprep.subr.mxu0 0.0
  %1138 = vmatpush1.msra.mxu0 0.0
  %1139 = vmatprep.subr.mxu0 0.0
  %1140 = vmatpush1.msra.mxu0 0.0
  %1141 = vmatprep.subr.mxu0 0.0
  %1142 = vmatpush1.msra.mxu0 0.0
  %1143 = vmatprep.subr.mxu0 0.0
  %1144 = vmatpush1.msra.mxu0 0.0
  %1145 = vmatprep.subr.mxu0 0.0
  %1146 = vmatpush1.msra.mxu0 0.0
  %1147 = vmatprep.subr.mxu0 0.0
  %1148 = vmatpush1.msra.mxu0 0.0
  %1149 = vmatprep.subr.mxu0 0.0
  %1150 = vmatpush1.msra.mxu0 0.0
  %1151 = vmatprep.subr.mxu0 0.0
  %1152 = vmatpush1.msra.mxu0 0.0
  %1153 = vmatprep.subr.mxu0 0.0
  %1154 = vmatpush1.msra.mxu0 0.0
  %1155 = vmatprep.subr.mxu0 0.0
  %1156 = vmatpush1.msra.mxu0 0.0
  %1157 = vmatprep.subr.mxu0 0.0
  %1158 = vmatpush1.msra.mxu0 0.0
  %1159 = vmatprep.subr.mxu0 0.0
  %1160 = vmatpush1.msra.mxu0 0.0
  %1161 = vmatprep.subr.mxu0 0.0
  %1162 = vmatpush1.msra.mxu0 0.0
  %1163 = vmatprep.subr.mxu0 0.0
  %1164 = vmatpush1.msra.mxu0 0.0
  %1165 = vmatprep.subr.mxu0 0.0
  %1166 = vmatpush1.msra.mxu0 0.0
  %1167 = vmatprep.subr.mxu0 0.0
  %1168 = vmatpush1.msra.mxu0 0.0
  %1169 = vmatprep.mubr.f32.mxu0 0.0
  %1170 = vmatmul.mubr.f32.gmra.mrb[0].mxu0 %v1082
  %v1171 = vpop.f32.mrb[0].mxu0
  %v1172 = vadd.f32 %v1079, %v1171
  %v1173 = vpop.f32.mrb[0].mxu0
  %1174 = vmatprep.mubr.f32.mxu0 0.0
  %1175 = vmatmul.mubr.f32.gmra.mrb[0].mxu0 %v1085
  %v1176 = vpop.f32.mrb[0].mxu0
  %v1177 = vadd.f32 %v1079, %v1176
  %v1178 = vpop.f32.mrb[0].mxu0
  %1179 = vmatprep.mubr.f32.mxu0 0.0
  %1180 = vmatmul.mubr.f32.gmra.mrb[0].mxu0 %v1088
  %v1181 = vpop.f32.mrb[0].mxu0
  %v1182 = vadd.f32 %v1079, %v1181
  %v1183 = vpop.f32.mrb[0].mxu0
  %1184 = vmatprep.mubr.f32.mxu0 0.0
  %1185 = vmatmul.mubr.f32.gmra.mrb[0].mxu0 %v1091
  %v1186 = vpop.f32.mrb[0].mxu0
  %v1187 = vadd.f32 %v1079, %v1186
  %v1188 = vpop.f32.mrb[0].mxu0
  %1189 = vmatprep.mubr.f32.mxu0 0.0
  %1190 = vmatmul.mubr.f32.gmra.mrb[0].mxu0 %v1094
  %v1191 = vpop.f32.mrb[0].mxu0
  %v1192 = vadd.f32 %v1079, %v1191
  %v1193 = vpop.f32.mrb[0].mxu0
  %1194 = vmatprep.mubr.f32.mxu0 0.0
  %1195 = vmatmul.mubr.f32.gmra.mrb[0].mxu0 %v1097
  %v1196 = vpop.f32.mrb[0].mxu0
  %v1197 = vadd.f32 %v1079, %v1196
  %v1198 = vpop.f32.mrb[0].mxu0
  %1199 = vmatprep.mubr.f32.mxu0 0.0
  %1200 = vmatmul.mubr.f32.gmra.mrb[0].mxu0 %v1100
  %v1201 = vpop.f32.mrb[0].mxu0
  %v1202 = vadd.f32 %v1079, %v1201
  %v1203 = vpop.f32.mrb[0].mxu0
  %1204 = vmatprep.mubr.f32.mxu0 0.0
  %1205 = vmatmul.mubr.f32.gmra.mrb[0].mxu0 %v1103
  %v1206 = vpop.f32.mrb[0].mxu0
  %v1207 = vadd.f32 %v1079, %v1206
  %v1208 = vpop.f32.mrb[0].mxu0
  %1209 = vdwg.mxu0
  %1210 = vst.msk [vmem:[#allocation2] sm:$0xff] %vm198, %v1172
  %1211 = vst.msk [vmem:[#allocation2 + $0x8] sm:$0xff] %vm198, %v1177
  %1212 = vst.msk [vmem:[#allocation2 + $0x10] sm:$0xff] %vm198, %v1182
  %1213 = vst.msk [vmem:[#allocation2 + $0x18] sm:$0xff] %vm198, %v1187
  %1214 = vst.msk [vmem:[#allocation2 + $0x20] sm:$0xff] %vm198, %v1192
  %1215 = vst.msk [vmem:[#allocation2 + $0x28] sm:$0xff] %vm198, %v1197
  %1216 = vst.msk [vmem:[#allocation2 + $0x30] sm:$0xff] %vm198, %v1202
  %1217 = vst.msk [vmem:[#allocation2 + $0x38] sm:$0xff] %vm198, %v1207
  %v1218 = vld [vmem:[#allocation2] sm:$0xff]
  %1219 = vmatprep.subr.mxu0 0.0
  %1220 = vmatpush1.msra.mxu0 %v1065
  %1221 = vmatprep.subr.mxu0 0.0
  %1222 = vmatpush1.msra.mxu0 %v1066
  %1223 = vmatprep.subr.mxu0 0.0
  %1224 = vmatpush1.msra.mxu0 %v1067
  %1225 = vmatprep.subr.mxu0 0.0
  %1226 = vmatpush1.msra.mxu0 %v1068
  %1227 = vmatprep.subr.mxu0 0.0
  %1228 = vmatpush1.msra.mxu0 0.0
  %1229 = vmatprep.subr.mxu0 0.0
  %1230 = vmatpush1.msra.mxu0 0.0
  %1231 = vmatprep.subr.mxu0 0.0
  %1232 = vmatpush1.msra.mxu0 0.0
  %1233 = vmatprep.subr.mxu0 0.0
  %1234 = vmatpush1.msra.mxu0 0.0
  %1235 = vmatprep.subr.mxu0 0.0
  %1236 = vmatpush1.msra.mxu0 0.0
  %1237 = vmatprep.subr.mxu0 0.0
  %1238 = vmatpush1.msra.mxu0 0.0
  %1239 = vmatprep.subr.mxu0 0.0
  %1240 = vmatpush1.msra.mxu0 0.0
  %1241 = vmatprep.subr.mxu0 0.0
  %1242 = vmatpush1.msra.mxu0 0.0
  %1243 = vmatprep.subr.mxu0 0.0
  %1244 = vmatpush1.msra.mxu0 0.0
  %1245 = vmatprep.subr.mxu0 0.0
  %1246 = vmatpush1.msra.mxu0 0.0
  %1247 = vmatprep.subr.mxu0 0.0
  %1248 = vmatpush1.msra.mxu0 0.0
  %1249 = vmatprep.subr.mxu0 0.0
  %1250 = vmatpush1.msra.mxu0 0.0
  %1251 = vmatprep.subr.mxu0 0.0
  %1252 = vmatpush1.msra.mxu0 0.0
  %1253 = vmatprep.subr.mxu0 0.0
  %1254 = vmatpush1.msra.mxu0 0.0
  %1255 = vmatprep.subr.mxu0 0.0
  %1256 = vmatpush1.msra.mxu0 0.0
  %1257 = vmatprep.subr.mxu0 0.0
  %1258 = vmatpush1.msra.mxu0 0.0
  %1259 = vmatprep.subr.mxu0 0.0
  %1260 = vmatpush1.msra.mxu0 0.0
  %1261 = vmatprep.subr.mxu0 0.0
  %1262 = vmatpush1.msra.mxu0 0.0
  %1263 = vmatprep.subr.mxu0 0.0
  %1264 = vmatpush1.msra.mxu0 0.0
  %1265 = vmatprep.subr.mxu0 0.0
  %1266 = vmatpush1.msra.mxu0 0.0
  %1267 = vmatprep.subr.mxu0 0.0
  %1268 = vmatpush1.msra.mxu0 0.0
  %1269 = vmatprep.subr.mxu0 0.0
  %1270 = vmatpush1.msra.mxu0 0.0
  %1271 = vmatprep.subr.mxu0 0.0
  %1272 = vmatpush1.msra.mxu0 0.0
  %1273 = vmatprep.subr.mxu0 0.0
  %1274 = vmatpush1.msra.mxu0 0.0
  %1275 = vmatprep.subr.mxu0 0.0
  %1276 = vmatpush1.msra.mxu0 0.0
  %1277 = vmatprep.subr.mxu0 0.0
  %1278 = vmatpush1.msra.mxu0 0.0
  %1279 = vmatprep.subr.mxu0 0.0
  %1280 = vmatpush1.msra.mxu0 0.0
  %1281 = vmatprep.subr.mxu0 0.0
  %1282 = vmatpush1.msra.mxu0 0.0
  %1283 = vmatprep.mubr.f32.mxu0 0.0
  %1284 = vmatmul.mubr.f32.gmra.mrb[0].mxu0 %v210
  %v1285 = vpop.f32.mrb[0].mxu0
  %v1286 = vadd.f32 0.0, %v1285
  %v1287 = vpop.f32.mrb[0].mxu0
  %1288 = vdwg.mxu0
  %v1289 = vadd.f32 %v1218, %v1286
  %v1290 = vxor.u32 %v1289, 2147483648
  %v1291 = vmul.f32 %v1290, 1.442695
  %v1292 = vpow.pop %v1291
  %v1293 = vadd.f32 %v1292, 1.0
  %v1294 = vrcp.pop %v1293
  %v1295 = vmul.f32 1.0, %v1294
  %v1297 = vlaneseq
  %v1298 = vshrl.u32 %v1297, 7
  %v1299 = vsub.s32 0, %v1298
  %v1300 = vrot.slane %v1069, %v1299
  %1301 = vrot.lane.b32.xlu0 %v1300, 64
  %v1302 = vpop.permute.xlu0 %1301
  %v1304 = vadd.f32 %v1286, %v1302
  %1306 = vrot.lane.b32.xlu0 %v1304, 64
  %v1307 = vpop.permute.xlu0 %1306
  %v1309 = vmul.f32 %v1295, %v1307
  %1311 = vrot.lane.b32.xlu0 %v1309, 64
  %v1312 = vpop.permute.xlu0 %1311
  %v1314 = vadd.f32 %v1218, %v1312
  %v1315 = vtanh.pop %v1314
  %v1316 = vsub.f32 1.0, %v1295
  %1318 = vrot.lane.b32.xlu0 %v1315, 96
  %v1319 = vpop.permute.xlu0 %1318
  %v1321 = vmul.f32 %v1316, %v1319
  %v1322 = vmul.f32 %v1295, 0.0
  %v1323 = vadd.f32 %v1321, %v1322
  %v1324 = vld [vmem:[#allocation2 + $0x8] sm:$0xff]
  %1326 = vrot.lane.b32.xlu0 %v1323, 96
  %v1327 = vpop.permute.xlu0 %1326
  %v1328 = vsel %vm208, %v1327, 0
  %1330 = vmatprep.subr.mxu0 0.0
  %1331 = vmatpush1.msra.mxu0 %v1065
  %1332 = vmatprep.subr.mxu0 0.0
  %1333 = vmatpush1.msra.mxu0 %v1066
  %1334 = vmatprep.subr.mxu0 0.0
  %1335 = vmatpush1.msra.mxu0 %v1067
  %1336 = vmatprep.subr.mxu0 0.0
  %1337 = vmatpush1.msra.mxu0 %v1068
  %1338 = vmatprep.subr.mxu0 0.0
  %1339 = vmatpush1.msra.mxu0 0.0
  %1340 = vmatprep.subr.mxu0 0.0
  %1341 = vmatpush1.msra.mxu0 0.0
  %1342 = vmatprep.subr.mxu0 0.0
  %1343 = vmatpush1.msra.mxu0 0.0
  %1344 = vmatprep.subr.mxu0 0.0
  %1345 = vmatpush1.msra.mxu0 0.0
  %1346 = vmatprep.subr.mxu0 0.0
  %1347 = vmatpush1.msra.mxu0 0.0
  %1348 = vmatprep.subr.mxu0 0.0
  %1349 = vmatpush1.msra.mxu0 0.0
  %1350 = vmatprep.subr.mxu0 0.0
  %1351 = vmatpush1.msra.mxu0 0.0
  %1352 = vmatprep.subr.mxu0 0.0
  %1353 = vmatpush1.msra.mxu0 0.0
  %1354 = vmatprep.subr.mxu0 0.0
  %1355 = vmatpush1.msra.mxu0 0.0
  %1356 = vmatprep.subr.mxu0 0.0
  %1357 = vmatpush1.msra.mxu0 0.0
  %1358 = vmatprep.subr.mxu0 0.0
  %1359 = vmatpush1.msra.mxu0 0.0
  %1360 = vmatprep.subr.mxu0 0.0
  %1361 = vmatpush1.msra.mxu0 0.0
  %1362 = vmatprep.subr.mxu0 0.0
  %1363 = vmatpush1.msra.mxu0 0.0
  %1364 = vmatprep.subr.mxu0 0.0
  %1365 = vmatpush1.msra.mxu0 0.0
  %1366 = vmatprep.subr.mxu0 0.0
  %1367 = vmatpush1.msra.mxu0 0.0
  %1368 = vmatprep.subr.mxu0 0.0
  %1369 = vmatpush1.msra.mxu0 0.0
  %1370 = vmatprep.subr.mxu0 0.0
  %1371 = vmatpush1.msra.mxu0 0.0
  %1372 = vmatprep.subr.mxu0 0.0
  %1373 = vmatpush1.msra.mxu0 0.0
  %1374 = vmatprep.subr.mxu0 0.0
  %1375 = vmatpush1.msra.mxu0 0.0
  %1376 = vmatprep.subr.mxu0 0.0
  %1377 = vmatpush1.msra.mxu0 0.0
  %1378 = vmatprep.subr.mxu0 0.0
  %1379 = vmatpush1.msra.mxu0 0.0
  %1380 = vmatprep.subr.mxu0 0.0
  %1381 = vmatpush1.msra.mxu0 0.0
  %1382 = vmatprep.subr.mxu0 0.0
  %1383 = vmatpush1.msra.mxu0 0.0
  %1384 = vmatprep.subr.mxu0 0.0
  %1385 = vmatpush1.msra.mxu0 0.0
  %1386 = vmatprep.subr.mxu0 0.0
  %1387 = vmatpush1.msra.mxu0 0.0
  %1388 = vmatprep.subr.mxu0 0.0
  %1389 = vmatpush1.msra.mxu0 0.0
  %1390 = vmatprep.subr.mxu0 0.0
  %1391 = vmatpush1.msra.mxu0 0.0
  %1392 = vmatprep.subr.mxu0 0.0
  %1393 = vmatpush1.msra.mxu0 0.0
  %1394 = vmatprep.mubr.f32.mxu0 0.0
  %1395 = vmatmul.mubr.f32.gmra.mrb[0].mxu0 %v1328
  %v1396 = vpop.f32.mrb[0].mxu0
  %v1397 = vadd.f32 0.0, %v1396
  %v1398 = vpop.f32.mrb[0].mxu0
  %1399 = vdwg.mxu0
  %v1400 = vadd.f32 %v1324, %v1397
  %v1401 = vxor.u32 %v1400, 2147483648
  %v1402 = vmul.f32 %v1401, 1.442695
  %v1403 = vpow.pop %v1402
  %v1404 = vadd.f32 %v1403, 1.0
  %v1405 = vrcp.pop %v1404
  %v1406 = vmul.f32 1.0, %v1405
  %v1407 = vadd.f32 %v1397, %v1302
  %1409 = vrot.lane.b32.xlu0 %v1407, 64
  %v1410 = vpop.permute.xlu0 %1409
  %v1412 = vmul.f32 %v1406, %v1410
  %1414 = vrot.lane.b32.xlu0 %v1412, 64
  %v1415 = vpop.permute.xlu0 %1414
  %v1417 = vadd.f32 %v1324, %v1415
  %v1418 = vtanh.pop %v1417
  %v1419 = vsub.f32 1.0, %v1406
  %1421 = vrot.lane.b32.xlu0 %v1418, 96
  %v1422 = vpop.permute.xlu0 %1421
  %v1424 = vmul.f32 %v1419, %v1422
  %v1425 = vmul.f32 %v1406, %v1323
  %v1426 = vadd.f32 %v1424, %v1425
  %v1427 = vld [vmem:[#allocation2 + $0x10] sm:$0xff]
  %1429 = vrot.lane.b32.xlu0 %v1426, 96
  %v1430 = vpop.permute.xlu0 %1429
  %v1431 = vsel %vm208, %v1430, 0
  %1433 = vmatprep.subr.mxu0 0.0
  %1434 = vmatpush1.msra.mxu0 %v1065
  %1435 = vmatprep.subr.mxu0 0.0
  %1436 = vmatpush1.msra.mxu0 %v1066
  %1437 = vmatprep.subr.mxu0 0.0
  %1438 = vmatpush1.msra.mxu0 %v1067
  %1439 = vmatprep.subr.mxu0 0.0
  %1440 = vmatpush1.msra.mxu0 %v1068
  %1441 = vmatprep.subr.mxu0 0.0
  %1442 = vmatpush1.msra.mxu0 0.0
  %1443 = vmatprep.subr.mxu0 0.0
  %1444 = vmatpush1.msra.mxu0 0.0
  %1445 = vmatprep.subr.mxu0 0.0
  %1446 = vmatpush1.msra.mxu0 0.0
  %1447 = vmatprep.subr.mxu0 0.0
  %1448 = vmatpush1.msra.mxu0 0.0
  %1449 = vmatprep.subr.mxu0 0.0
  %1450 = vmatpush1.msra.mxu0 0.0
  %1451 = vmatprep.subr.mxu0 0.0
  %1452 = vmatpush1.msra.mxu0 0.0
  %1453 = vmatprep.subr.mxu0 0.0
  %1454 = vmatpush1.msra.mxu0 0.0
  %1455 = vmatprep.subr.mxu0 0.0
  %1456 = vmatpush1.msra.mxu0 0.0
  %1457 = vmatprep.subr.mxu0 0.0
  %1458 = vmatpush1.msra.mxu0 0.0
  %1459 = vmatprep.subr.mxu0 0.0
  %1460 = vmatpush1.msra.mxu0 0.0
  %1461 = vmatprep.subr.mxu0 0.0
  %1462 = vmatpush1.msra.mxu0 0.0
  %1463 = vmatprep.subr.mxu0 0.0
  %1464 = vmatpush1.msra.mxu0 0.0
  %1465 = vmatprep.subr.mxu0 0.0
  %1466 = vmatpush1.msra.mxu0 0.0
  %1467 = vmatprep.subr.mxu0 0.0
  %1468 = vmatpush1.msra.mxu0 0.0
  %1469 = vmatprep.subr.mxu0 0.0
  %1470 = vmatpush1.msra.mxu0 0.0
  %1471 = vmatprep.subr.mxu0 0.0
  %1472 = vmatpush1.msra.mxu0 0.0
  %1473 = vmatprep.subr.mxu0 0.0
  %1474 = vmatpush1.msra.mxu0 0.0
  %1475 = vmatprep.subr.mxu0 0.0
  %1476 = vmatpush1.msra.mxu0 0.0
  %1477 = vmatprep.subr.mxu0 0.0
  %1478 = vmatpush1.msra.mxu0 0.0
  %1479 = vmatprep.subr.mxu0 0.0
  %1480 = vmatpush1.msra.mxu0 0.0
  %1481 = vmatprep.subr.mxu0 0.0
  %1482 = vmatpush1.msra.mxu0 0.0
  %1483 = vmatprep.subr.mxu0 0.0
  %1484 = vmatpush1.msra.mxu0 0.0
  %1485 = vmatprep.subr.mxu0 0.0
  %1486 = vmatpush1.msra.mxu0 0.0
  %1487 = vmatprep.subr.mxu0 0.0
  %1488 = vmatpush1.msra.mxu0 0.0
  %1489 = vmatprep.subr.mxu0 0.0
  %1490 = vmatpush1.msra.mxu0 0.0
  %1491 = vmatprep.subr.mxu0 0.0
  %1492 = vmatpush1.msra.mxu0 0.0
  %1493 = vmatprep.subr.mxu0 0.0
  %1494 = vmatpush1.msra.mxu0 0.0
  %1495 = vmatprep.subr.mxu0 0.0
  %1496 = vmatpush1.msra.mxu0 0.0
  %1497 = vmatprep.mubr.f32.mxu0 0.0
  %1498 = vmatmul.mubr.f32.gmra.mrb[0].mxu0 %v1431
  %v1499 = vpop.f32.mrb[0].mxu0
  %v1500 = vadd.f32 0.0, %v1499
  %v1501 = vpop.f32.mrb[0].mxu0
  %1502 = vdwg.mxu0
  %v1503 = vadd.f32 %v1427, %v1500
  %v1504 = vxor.u32 %v1503, 2147483648
  %v1505 = vmul.f32 %v1504, 1.442695
  %v1506 = vpow.pop %v1505
  %v1507 = vadd.f32 %v1506, 1.0
  %v1508 = vrcp.pop %v1507
  %v1509 = vmul.f32 1.0, %v1508
  %v1510 = vadd.f32 %v1500, %v1302
  %1512 = vrot.lane.b32.xlu0 %v1510, 64
  %v1513 = vpop.permute.xlu0 %1512
  %v1515 = vmul.f32 %v1509, %v1513
  %1517 = vrot.lane.b32.xlu0 %v1515, 64
  %v1518 = vpop.permute.xlu0 %1517
  %v1520 = vadd.f32 %v1427, %v1518
  %v1521 = vtanh.pop %v1520
  %v1522 = vsub.f32 1.0, %v1509
  %1524 = vrot.lane.b32.xlu0 %v1521, 96
  %v1525 = vpop.permute.xlu0 %1524
  %v1527 = vmul.f32 %v1522, %v1525
  %v1528 = vmul.f32 %v1509, %v1426
  %v1529 = vadd.f32 %v1527, %v1528
  %v1530 = vld [vmem:[#allocation2 + $0x18] sm:$0xff]
  %1532 = vrot.lane.b32.xlu0 %v1529, 96
  %v1533 = vpop.permute.xlu0 %1532
  %v1534 = vsel %vm208, %v1533, 0
  %1536 = vmatprep.subr.mxu0 0.0
  %1537 = vmatpush1.msra.mxu0 %v1065
  %1538 = vmatprep.subr.mxu0 0.0
  %1539 = vmatpush1.msra.mxu0 %v1066
  %1540 = vmatprep.subr.mxu0 0.0
  %1541 = vmatpush1.msra.mxu0 %v1067
  %1542 = vmatprep.subr.mxu0 0.0
  %1543 = vmatpush1.msra.mxu0 %v1068
  %1544 = vmatprep.subr.mxu0 0.0
  %1545 = vmatpush1.msra.mxu0 0.0
  %1546 = vmatprep.subr.mxu0 0.0
  %1547 = vmatpush1.msra.mxu0 0.0
  %1548 = vmatprep.subr.mxu0 0.0
  %1549 = vmatpush1.msra.mxu0 0.0
  %1550 = vmatprep.subr.mxu0 0.0
  %1551 = vmatpush1.msra.mxu0 0.0
  %1552 = vmatprep.subr.mxu0 0.0
  %1553 = vmatpush1.msra.mxu0 0.0
  %1554 = vmatprep.subr.mxu0 0.0
  %1555 = vmatpush1.msra.mxu0 0.0
  %1556 = vmatprep.subr.mxu0 0.0
  %1557 = vmatpush1.msra.mxu0 0.0
  %1558 = vmatprep.subr.mxu0 0.0
  %1559 = vmatpush1.msra.mxu0 0.0
  %1560 = vmatprep.subr.mxu0 0.0
  %1561 = vmatpush1.msra.mxu0 0.0
  %1562 = vmatprep.subr.mxu0 0.0
  %1563 = vmatpush1.msra.mxu0 0.0
  %1564 = vmatprep.subr.mxu0 0.0
  %1565 = vmatpush1.msra.mxu0 0.0
  %1566 = vmatprep.subr.mxu0 0.0
  %1567 = vmatpush1.msra.mxu0 0.0
  %1568 = vmatprep.subr.mxu0 0.0
  %1569 = vmatpush1.msra.mxu0 0.0
  %1570 = vmatprep.subr.mxu0 0.0
  %1571 = vmatpush1.msra.mxu0 0.0
  %1572 = vmatprep.subr.mxu0 0.0
  %1573 = vmatpush1.msra.mxu0 0.0
  %1574 = vmatprep.subr.mxu0 0.0
  %1575 = vmatpush1.msra.mxu0 0.0
  %1576 = vmatprep.subr.mxu0 0.0
  %1577 = vmatpush1.msra.mxu0 0.0
  %1578 = vmatprep.subr.mxu0 0.0
  %1579 = vmatpush1.msra.mxu0 0.0
  %1580 = vmatprep.subr.mxu0 0.0
  %1581 = vmatpush1.msra.mxu0 0.0
  %1582 = vmatprep.subr.mxu0 0.0
  %1583 = vmatpush1.msra.mxu0 0.0
  %1584 = vmatprep.subr.mxu0 0.0
  %1585 = vmatpush1.msra.mxu0 0.0
  %1586 = vmatprep.subr.mxu0 0.0
  %1587 = vmatpush1.msra.mxu0 0.0
  %1588 = vmatprep.subr.mxu0 0.0
  %1589 = vmatpush1.msra.mxu0 0.0
  %1590 = vmatprep.subr.mxu0 0.0
  %1591 = vmatpush1.msra.mxu0 0.0
  %1592 = vmatprep.subr.mxu0 0.0
  %1593 = vmatpush1.msra.mxu0 0.0
  %1594 = vmatprep.subr.mxu0 0.0
  %1595 = vmatpush1.msra.mxu0 0.0
  %1596 = vmatprep.subr.mxu0 0.0
  %1597 = vmatpush1.msra.mxu0 0.0
  %1598 = vmatprep.subr.mxu0 0.0
  %1599 = vmatpush1.msra.mxu0 0.0
  %1600 = vmatprep.mubr.f32.mxu0 0.0
  %1601 = vmatmul.mubr.f32.gmra.mrb[0].mxu0 %v1534
  %v1602 = vpop.f32.mrb[0].mxu0
  %v1603 = vadd.f32 0.0, %v1602
  %v1604 = vpop.f32.mrb[0].mxu0
  %1605 = vdwg.mxu0
  %v1606 = vadd.f32 %v1530, %v1603
  %v1607 = vxor.u32 %v1606, 2147483648
  %v1608 = vmul.f32 %v1607, 1.442695
  %v1609 = vpow.pop %v1608
  %v1610 = vadd.f32 %v1609, 1.0
  %v1611 = vrcp.pop %v1610
  %v1612 = vmul.f32 1.0, %v1611
  %v1613 = vadd.f32 %v1603, %v1302
  %1615 = vrot.lane.b32.xlu0 %v1613, 64
  %v1616 = vpop.permute.xlu0 %1615
  %v1618 = vmul.f32 %v1612, %v1616
  %1620 = vrot.lane.b32.xlu0 %v1618, 64
  %v1621 = vpop.permute.xlu0 %1620
  %v1623 = vadd.f32 %v1530, %v1621
  %v1624 = vtanh.pop %v1623
  %v1625 = vsub.f32 1.0, %v1612
  %1627 = vrot.lane.b32.xlu0 %v1624, 96
  %v1628 = vpop.permute.xlu0 %1627
  %v1630 = vmul.f32 %v1625, %v1628
  %v1631 = vmul.f32 %v1612, %v1529
  %v1632 = vadd.f32 %v1630, %v1631
  %v1633 = vld [vmem:[#allocation2 + $0x20] sm:$0xff]
  %1635 = vrot.lane.b32.xlu0 %v1632, 96
  %v1636 = vpop.permute.xlu0 %1635
  %v1637 = vsel %vm208, %v1636, 0
  %1639 = vmatprep.subr.mxu0 0.0
  %1640 = vmatpush1.msra.mxu0 %v1065
  %1641 = vmatprep.subr.mxu0 0.0
  %1642 = vmatpush1.msra.mxu0 %v1066
  %1643 = vmatprep.subr.mxu0 0.0
  %1644 = vmatpush1.msra.mxu0 %v1067
  %1645 = vmatprep.subr.mxu0 0.0
  %1646 = vmatpush1.msra.mxu0 %v1068
  %1647 = vmatprep.subr.mxu0 0.0
  %1648 = vmatpush1.msra.mxu0 0.0
  %1649 = vmatprep.subr.mxu0 0.0
  %1650 = vmatpush1.msra.mxu0 0.0
  %1651 = vmatprep.subr.mxu0 0.0
  %1652 = vmatpush1.msra.mxu0 0.0
  %1653 = vmatprep.subr.mxu0 0.0
  %1654 = vmatpush1.msra.mxu0 0.0
  %1655 = vmatprep.subr.mxu0 0.0
  %1656 = vmatpush1.msra.mxu0 0.0
  %1657 = vmatprep.subr.mxu0 0.0
  %1658 = vmatpush1.msra.mxu0 0.0
  %1659 = vmatprep.subr.mxu0 0.0
  %1660 = vmatpush1.msra.mxu0 0.0
  %1661 = vmatprep.subr.mxu0 0.0
  %1662 = vmatpush1.msra.mxu0 0.0
  %1663 = vmatprep.subr.mxu0 0.0
  %1664 = vmatpush1.msra.mxu0 0.0
  %1665 = vmatprep.subr.mxu0 0.0
  %1666 = vmatpush1.msra.mxu0 0.0
  %1667 = vmatprep.subr.mxu0 0.0
  %1668 = vmatpush1.msra.mxu0 0.0
  %1669 = vmatprep.subr.mxu0 0.0
  %1670 = vmatpush1.msra.mxu0 0.0
  %1671 = vmatprep.subr.mxu0 0.0
  %1672 = vmatpush1.msra.mxu0 0.0
  %1673 = vmatprep.subr.mxu0 0.0
  %1674 = vmatpush1.msra.mxu0 0.0
  %1675 = vmatprep.subr.mxu0 0.0
  %1676 = vmatpush1.msra.mxu0 0.0
  %1677 = vmatprep.subr.mxu0 0.0
  %1678 = vmatpush1.msra.mxu0 0.0
  %1679 = vmatprep.subr.mxu0 0.0
  %1680 = vmatpush1.msra.mxu0 0.0
  %1681 = vmatprep.subr.mxu0 0.0
  %1682 = vmatpush1.msra.mxu0 0.0
  %1683 = vmatprep.subr.mxu0 0.0
  %1684 = vmatpush1.msra.mxu0 0.0
  %1685 = vmatprep.subr.mxu0 0.0
  %1686 = vmatpush1.msra.mxu0 0.0
  %1687 = vmatprep.subr.mxu0 0.0
  %1688 = vmatpush1.msra.mxu0 0.0
  %1689 = vmatprep.subr.mxu0 0.0
  %1690 = vmatpush1.msra.mxu0 0.0
  %1691 = vmatprep.subr.mxu0 0.0
  %1692 = vmatpush1.msra.mxu0 0.0
  %1693 = vmatprep.subr.mxu0 0.0
  %1694 = vmatpush1.msra.mxu0 0.0
  %1695 = vmatprep.subr.mxu0 0.0
  %1696 = vmatpush1.msra.mxu0 0.0
  %1697 = vmatprep.subr.mxu0 0.0
  %1698 = vmatpush1.msra.mxu0 0.0
  %1699 = vmatprep.subr.mxu0 0.0
  %1700 = vmatpush1.msra.mxu0 0.0
  %1701 = vmatprep.subr.mxu0 0.0
  %1702 = vmatpush1.msra.mxu0 0.0
  %1703 = vmatprep.mubr.f32.mxu0 0.0
  %1704 = vmatmul.mubr.f32.gmra.mrb[0].mxu0 %v1637
  %v1705 = vpop.f32.mrb[0].mxu0
  %v1706 = vadd.f32 0.0, %v1705
  %v1707 = vpop.f32.mrb[0].mxu0
  %1708 = vdwg.mxu0
  %v1709 = vadd.f32 %v1633, %v1706
  %v1710 = vxor.u32 %v1709, 2147483648
  %v1711 = vmul.f32 %v1710, 1.442695
  %v1712 = vpow.pop %v1711
  %v1713 = vadd.f32 %v1712, 1.0
  %v1714 = vrcp.pop %v1713
  %v1715 = vmul.f32 1.0, %v1714
  %v1716 = vadd.f32 %v1706, %v1302
  %1718 = vrot.lane.b32.xlu0 %v1716, 64
  %v1719 = vpop.permute.xlu0 %1718
  %v1721 = vmul.f32 %v1715, %v1719
  %1723 = vrot.lane.b32.xlu0 %v1721, 64
  %v1724 = vpop.permute.xlu0 %1723
  %v1726 = vadd.f32 %v1633, %v1724
  %v1727 = vtanh.pop %v1726
  %v1728 = vsub.f32 1.0, %v1715
  %1730 = vrot.lane.b32.xlu0 %v1727, 96
  %v1731 = vpop.permute.xlu0 %1730
  %v1733 = vmul.f32 %v1728, %v1731
  %v1734 = vmul.f32 %v1715, %v1632
  %v1735 = vadd.f32 %v1733, %v1734
  %v1736 = vld [vmem:[#allocation2 + $0x28] sm:$0xff]
  %1738 = vrot.lane.b32.xlu0 %v1735, 96
  %v1739 = vpop.permute.xlu0 %1738
  %v1740 = vsel %vm208, %v1739, 0
  %1742 = vmatprep.subr.mxu0 0.0
  %1743 = vmatpush1.msra.mxu0 %v1065
  %1744 = vmatprep.subr.mxu0 0.0
  %1745 = vmatpush1.msra.mxu0 %v1066
  %1746 = vmatprep.subr.mxu0 0.0
  %1747 = vmatpush1.msra.mxu0 %v1067
  %1748 = vmatprep.subr.mxu0 0.0
  %1749 = vmatpush1.msra.mxu0 %v1068
  %1750 = vmatprep.subr.mxu0 0.0
  %1751 = vmatpush1.msra.mxu0 0.0
  %1752 = vmatprep.subr.mxu0 0.0
  %1753 = vmatpush1.msra.mxu0 0.0
  %1754 = vmatprep.subr.mxu0 0.0
  %1755 = vmatpush1.msra.mxu0 0.0
  %1756 = vmatprep.subr.mxu0 0.0
  %1757 = vmatpush1.msra.mxu0 0.0
  %1758 = vmatprep.subr.mxu0 0.0
  %1759 = vmatpush1.msra.mxu0 0.0
  %1760 = vmatprep.subr.mxu0 0.0
  %1761 = vmatpush1.msra.mxu0 0.0
  %1762 = vmatprep.subr.mxu0 0.0
  %1763 = vmatpush1.msra.mxu0 0.0
  %1764 = vmatprep.subr.mxu0 0.0
  %1765 = vmatpush1.msra.mxu0 0.0
  %1766 = vmatprep.subr.mxu0 0.0
  %1767 = vmatpush1.msra.mxu0 0.0
  %1768 = vmatprep.subr.mxu0 0.0
  %1769 = vmatpush1.msra.mxu0 0.0
  %1770 = vmatprep.subr.mxu0 0.0
  %1771 = vmatpush1.msra.mxu0 0.0
  %1772 = vmatprep.subr.mxu0 0.0
  %1773 = vmatpush1.msra.mxu0 0.0
  %1774 = vmatprep.subr.mxu0 0.0
  %1775 = vmatpush1.msra.mxu0 0.0
  %1776 = vmatprep.subr.mxu0 0.0
  %1777 = vmatpush1.msra.mxu0 0.0
  %1778 = vmatprep.subr.mxu0 0.0
  %1779 = vmatpush1.msra.mxu0 0.0
  %1780 = vmatprep.subr.mxu0 0.0
  %1781 = vmatpush1.msra.mxu0 0.0
  %1782 = vmatprep.subr.mxu0 0.0
  %1783 = vmatpush1.msra.mxu0 0.0
  %1784 = vmatprep.subr.mxu0 0.0
  %1785 = vmatpush1.msra.mxu0 0.0
  %1786 = vmatprep.subr.mxu0 0.0
  %1787 = vmatpush1.msra.mxu0 0.0
  %1788 = vmatprep.subr.mxu0 0.0
  %1789 = vmatpush1.msra.mxu0 0.0
  %1790 = vmatprep.subr.mxu0 0.0
  %1791 = vmatpush1.msra.mxu0 0.0
  %1792 = vmatprep.subr.mxu0 0.0
  %1793 = vmatpush1.msra.mxu0 0.0
  %1794 = vmatprep.subr.mxu0 0.0
  %1795 = vmatpush1.msra.mxu0 0.0
  %1796 = vmatprep.subr.mxu0 0.0
  %1797 = vmatpush1.msra.mxu0 0.0
  %1798 = vmatprep.subr.mxu0 0.0
  %1799 = vmatpush1.msra.mxu0 0.0
  %1800 = vmatprep.subr.mxu0 0.0
  %1801 = vmatpush1.msra.mxu0 0.0
  %1802 = vmatprep.subr.mxu0 0.0
  %1803 = vmatpush1.msra.mxu0 0.0
  %1804 = vmatprep.subr.mxu0 0.0
  %1805 = vmatpush1.msra.mxu0 0.0
  %1806 = vmatprep.mubr.f32.mxu0 0.0
  %1807 = vmatmul.mubr.f32.gmra.mrb[0].mxu0 %v1740
  %v1808 = vpop.f32.mrb[0].mxu0
  %v1809 = vadd.f32 0.0, %v1808
  %v1810 = vpop.f32.mrb[0].mxu0
  %1811 = vdwg.mxu0
  %v1812 = vadd.f32 %v1736, %v1809
  %v1813 = vxor.u32 %v1812, 2147483648
  %v1814 = vmul.f32 %v1813, 1.442695
  %v1815 = vpow.pop %v1814
  %v1816 = vadd.f32 %v1815, 1.0
  %v1817 = vrcp.pop %v1816
  %v1818 = vmul.f32 1.0, %v1817
  %v1819 = vadd.f32 %v1809, %v1302
  %1821 = vrot.lane.b32.xlu0 %v1819, 64
  %v1822 = vpop.permute.xlu0 %1821
  %v1824 = vmul.f32 %v1818, %v1822
  %1826 = vrot.lane.b32.xlu0 %v1824, 64
  %v1827 = vpop.permute.xlu0 %1826
  %v1829 = vadd.f32 %v1736, %v1827
  %v1830 = vtanh.pop %v1829
  %v1831 = vsub.f32 1.0, %v1818
  %1833 = vrot.lane.b32.xlu0 %v1830, 96
  %v1834 = vpop.permute.xlu0 %1833
  %v1836 = vmul.f32 %v1831, %v1834
  %v1837 = vmul.f32 %v1818, %v1735
  %v1838 = vadd.f32 %v1836, %v1837
  %v1839 = vld [vmem:[#allocation2 + $0x30] sm:$0xff]
  %1841 = vrot.lane.b32.xlu0 %v1838, 96
  %v1842 = vpop.permute.xlu0 %1841
  %v1843 = vsel %vm208, %v1842, 0
  %1845 = vmatprep.subr.mxu0 0.0
  %1846 = vmatpush1.msra.mxu0 %v1065
  %1847 = vmatprep.subr.mxu0 0.0
  %1848 = vmatpush1.msra.mxu0 %v1066
  %1849 = vmatprep.subr.mxu0 0.0
  %1850 = vmatpush1.msra.mxu0 %v1067
  %1851 = vmatprep.subr.mxu0 0.0
  %1852 = vmatpush1.msra.mxu0 %v1068
  %1853 = vmatprep.subr.mxu0 0.0
  %1854 = vmatpush1.msra.mxu0 0.0
  %1855 = vmatprep.subr.mxu0 0.0
  %1856 = vmatpush1.msra.mxu0 0.0
  %1857 = vmatprep.subr.mxu0 0.0
  %1858 = vmatpush1.msra.mxu0 0.0
  %1859 = vmatprep.subr.mxu0 0.0
  %1860 = vmatpush1.msra.mxu0 0.0
  %1861 = vmatprep.subr.mxu0 0.0
  %1862 = vmatpush1.msra.mxu0 0.0
  %1863 = vmatprep.subr.mxu0 0.0
  %1864 = vmatpush1.msra.mxu0 0.0
  %1865 = vmatprep.subr.mxu0 0.0
  %1866 = vmatpush1.msra.mxu0 0.0
  %1867 = vmatprep.subr.mxu0 0.0
  %1868 = vmatpush1.msra.mxu0 0.0
  %1869 = vmatprep.subr.mxu0 0.0
  %1870 = vmatpush1.msra.mxu0 0.0
  %1871 = vmatprep.subr.mxu0 0.0
  %1872 = vmatpush1.msra.mxu0 0.0
  %1873 = vmatprep.subr.mxu0 0.0
  %1874 = vmatpush1.msra.mxu0 0.0
  %1875 = vmatprep.subr.mxu0 0.0
  %1876 = vmatpush1.msra.mxu0 0.0
  %1877 = vmatprep.subr.mxu0 0.0
  %1878 = vmatpush1.msra.mxu0 0.0
  %1879 = vmatprep.subr.mxu0 0.0
  %1880 = vmatpush1.msra.mxu0 0.0
  %1881 = vmatprep.subr.mxu0 0.0
  %1882 = vmatpush1.msra.mxu0 0.0
  %1883 = vmatprep.subr.mxu0 0.0
  %1884 = vmatpush1.msra.mxu0 0.0
  %1885 = vmatprep.subr.mxu0 0.0
  %1886 = vmatpush1.msra.mxu0 0.0
  %1887 = vmatprep.subr.mxu0 0.0
  %1888 = vmatpush1.msra.mxu0 0.0
  %1889 = vmatprep.subr.mxu0 0.0
  %1890 = vmatpush1.msra.mxu0 0.0
  %1891 = vmatprep.subr.mxu0 0.0
  %1892 = vmatpush1.msra.mxu0 0.0
  %1893 = vmatprep.subr.mxu0 0.0
  %1894 = vmatpush1.msra.mxu0 0.0
  %1895 = vmatprep.subr.mxu0 0.0
  %1896 = vmatpush1.msra.mxu0 0.0
  %1897 = vmatprep.subr.mxu0 0.0
  %1898 = vmatpush1.msra.mxu0 0.0
  %1899 = vmatprep.subr.mxu0 0.0
  %1900 = vmatpush1.msra.mxu0 0.0
  %1901 = vmatprep.subr.mxu0 0.0
  %1902 = vmatpush1.msra.mxu0 0.0
  %1903 = vmatprep.subr.mxu0 0.0
  %1904 = vmatpush1.msra.mxu0 0.0
  %1905 = vmatprep.subr.mxu0 0.0
  %1906 = vmatpush1.msra.mxu0 0.0
  %1907 = vmatprep.subr.mxu0 0.0
  %1908 = vmatpush1.msra.mxu0 0.0
  %1909 = vmatprep.mubr.f32.mxu0 0.0
  %1910 = vmatmul.mubr.f32.gmra.mrb[0].mxu0 %v1843
  %v1911 = vpop.f32.mrb[0].mxu0
  %v1912 = vadd.f32 0.0, %v1911
  %v1913 = vpop.f32.mrb[0].mxu0
  %1914 = vdwg.mxu0
  %v1915 = vadd.f32 %v1839, %v1912
  %v1916 = vxor.u32 %v1915, 2147483648
  %v1917 = vmul.f32 %v1916, 1.442695
  %v1918 = vpow.pop %v1917
  %v1919 = vadd.f32 %v1918, 1.0
  %v1920 = vrcp.pop %v1919
  %v1921 = vmul.f32 1.0, %v1920
  %v1922 = vadd.f32 %v1912, %v1302
  %1924 = vrot.lane.b32.xlu0 %v1922, 64
  %v1925 = vpop.permute.xlu0 %1924
  %v1927 = vmul.f32 %v1921, %v1925
  %1929 = vrot.lane.b32.xlu0 %v1927, 64
  %v1930 = vpop.permute.xlu0 %1929
  %v1932 = vadd.f32 %v1839, %v1930
  %v1933 = vtanh.pop %v1932
  %v1934 = vsub.f32 1.0, %v1921
  %1936 = vrot.lane.b32.xlu0 %v1933, 96
  %v1937 = vpop.permute.xlu0 %1936
  %v1939 = vmul.f32 %v1934, %v1937
  %v1940 = vmul.f32 %v1921, %v1838
  %v1941 = vadd.f32 %v1939, %v1940
  %v1942 = vld [vmem:[#allocation2 + $0x38] sm:$0xff]
  %1944 = vrot.lane.b32.xlu0 %v1941, 96
  %v1945 = vpop.permute.xlu0 %1944
  %v1946 = vsel %vm208, %v1945, 0
  %1948 = vmatprep.subr.mxu0 0.0
  %1949 = vmatpush1.msra.mxu0 %v1065
  %1950 = vmatprep.subr.mxu0 0.0
  %1951 = vmatpush1.msra.mxu0 %v1066
  %1952 = vmatprep.subr.mxu0 0.0
  %1953 = vmatpush1.msra.mxu0 %v1067
  %1954 = vmatprep.subr.mxu0 0.0
  %1955 = vmatpush1.msra.mxu0 %v1068
  %1956 = vmatprep.subr.mxu0 0.0
  %1957 = vmatpush1.msra.mxu0 0.0
  %1958 = vmatprep.subr.mxu0 0.0
  %1959 = vmatpush1.msra.mxu0 0.0
  %1960 = vmatprep.subr.mxu0 0.0
  %1961 = vmatpush1.msra.mxu0 0.0
  %1962 = vmatprep.subr.mxu0 0.0
  %1963 = vmatpush1.msra.mxu0 0.0
  %1964 = vmatprep.subr.mxu0 0.0
  %1965 = vmatpush1.msra.mxu0 0.0
  %1966 = vmatprep.subr.mxu0 0.0
  %1967 = vmatpush1.msra.mxu0 0.0
  %1968 = vmatprep.subr.mxu0 0.0
  %1969 = vmatpush1.msra.mxu0 0.0
  %1970 = vmatprep.subr.mxu0 0.0
  %1971 = vmatpush1.msra.mxu0 0.0
  %1972 = vmatprep.subr.mxu0 0.0
  %1973 = vmatpush1.msra.mxu0 0.0
  %1974 = vmatprep.subr.mxu0 0.0
  %1975 = vmatpush1.msra.mxu0 0.0
  %1976 = vmatprep.subr.mxu0 0.0
  %1977 = vmatpush1.msra.mxu0 0.0
  %1978 = vmatprep.subr.mxu0 0.0
  %1979 = vmatpush1.msra.mxu0 0.0
  %1980 = vmatprep.subr.mxu0 0.0
  %1981 = vmatpush1.msra.mxu0 0.0
  %1982 = vmatprep.subr.mxu0 0.0
  %1983 = vmatpush1.msra.mxu0 0.0
  %1984 = vmatprep.subr.mxu0 0.0
  %1985 = vmatpush1.msra.mxu0 0.0
  %1986 = vmatprep.subr.mxu0 0.0
  %1987 = vmatpush1.msra.mxu0 0.0
  %1988 = vmatprep.subr.mxu0 0.0
  %1989 = vmatpush1.msra.mxu0 0.0
  %1990 = vmatprep.subr.mxu0 0.0
  %1991 = vmatpush1.msra.mxu0 0.0
  %1992 = vmatprep.subr.mxu0 0.0
  %1993 = vmatpush1.msra.mxu0 0.0
  %1994 = vmatprep.subr.mxu0 0.0
  %1995 = vmatpush1.msra.mxu0 0.0
  %1996 = vmatprep.subr.mxu0 0.0
  %1997 = vmatpush1.msra.mxu0 0.0
  %1998 = vmatprep.subr.mxu0 0.0
  %1999 = vmatpush1.msra.mxu0 0.0
  %2000 = vmatprep.subr.mxu0 0.0
  %2001 = vmatpush1.msra.mxu0 0.0
  %2002 = vmatprep.subr.mxu0 0.0
  %2003 = vmatpush1.msra.mxu0 0.0
  %2004 = vmatprep.subr.mxu0 0.0
  %2005 = vmatpush1.msra.mxu0 0.0
  %2006 = vmatprep.subr.mxu0 0.0
  %2007 = vmatpush1.msra.mxu0 0.0
  %2008 = vmatprep.subr.mxu0 0.0
  %2009 = vmatpush1.msra.mxu0 0.0
  %2010 = vmatprep.subr.mxu0 0.0
  %2011 = vmatpush1.msra.mxu0 0.0
  %2012 = vmatprep.mubr.f32.mxu0 0.0
  %2013 = vmatmul.mubr.f32.gmra.mrb[0].mxu0 %v1946
  %v2014 = vpop.f32.mrb[0].mxu0
  %v2015 = vadd.f32 0.0, %v2014
  %v2016 = vpop.f32.mrb[0].mxu0
  %2017 = vdwg.mxu0
  %v2018 = vadd.f32 %v1942, %v2015
  %v2019 = vxor.u32 %v2018, 2147483648
  %v2020 = vmul.f32 %v2019, 1.442695
  %v2021 = vpow.pop %v2020
  %v2022 = vadd.f32 %v2021, 1.0
  %v2023 = vrcp.pop %v2022
  %v2024 = vmul.f32 1.0, %v2023
  %v2025 = vadd.f32 %v2015, %v1302
  %2027 = vrot.lane.b32.xlu0 %v2025, 64
  %v2028 = vpop.permute.xlu0 %2027
  %v2030 = vmul.f32 %v2024, %v2028
  %2032 = vrot.lane.b32.xlu0 %v2030, 64
  %v2033 = vpop.permute.xlu0 %2032
  %v2035 = vadd.f32 %v1942, %v2033
  %v2036 = vtanh.pop %v2035
  %v2037 = vsub.f32 1.0, %v2024
  %2039 = vrot.lane.b32.xlu0 %v2036, 96
  %v2040 = vpop.permute.xlu0 %2039
  %v2042 = vmul.f32 %v2037, %v2040
  %v2043 = vmul.f32 %v2024, %v1941
  %v2044 = vadd.f32 %v2042, %v2043
  %v2045 = vld [vmem:[%s9] sm:$0xff]
  %v2046 = vld [vmem:[%s9 + $0x8] sm:$0xff]
  %v2047 = vld [vmem:[%s9 + $0x10] sm:$0xff]
  %v2048 = vld [vmem:[%s9 + $0x18] sm:$0xff]
  %v2049 = vld [vmem:[%s10] sm:$0x1]
  %v2051 = vlaneseq
  %v2052 = vshrl.u32 %v2051, 7
  %v2053 = vsub.s32 0, %v2052
  %v2054 = vrot.slane %v2049, %v2053
  %2057 = vrot.lane.b32.xlu0 %v2044, 96
  %v2058 = vpop.permute.xlu0 %2057
  %v2059 = vsel %vm208, %v2058, 0
  %2061 = vmatprep.subr.mxu0 0.0
  %2062 = vmatpush1.msra.mxu0 %v2045
  %2063 = vmatprep.subr.mxu0 0.0
  %2064 = vmatpush1.msra.mxu0 %v2046
  %2065 = vmatprep.subr.mxu0 0.0
  %2066 = vmatpush1.msra.mxu0 %v2047
  %2067 = vmatprep.subr.mxu0 0.0
  %2068 = vmatpush1.msra.mxu0 %v2048
  %2069 = vmatprep.subr.mxu0 0.0
  %2070 = vmatpush1.msra.mxu0 0.0
  %2071 = vmatprep.subr.mxu0 0.0
  %2072 = vmatpush1.msra.mxu0 0.0
  %2073 = vmatprep.subr.mxu0 0.0
  %2074 = vmatpush1.msra.mxu0 0.0
  %2075 = vmatprep.subr.mxu0 0.0
  %2076 = vmatpush1.msra.mxu0 0.0
  %2077 = vmatprep.subr.mxu0 0.0
  %2078 = vmatpush1.msra.mxu0 0.0
  %2079 = vmatprep.subr.mxu0 0.0
  %2080 = vmatpush1.msra.mxu0 0.0
  %2081 = vmatprep.subr.mxu0 0.0
  %2082 = vmatpush1.msra.mxu0 0.0
  %2083 = vmatprep.subr.mxu0 0.0
  %2084 = vmatpush1.msra.mxu0 0.0
  %2085 = vmatprep.subr.mxu0 0.0
  %2086 = vmatpush1.msra.mxu0 0.0
  %2087 = vmatprep.subr.mxu0 0.0
  %2088 = vmatpush1.msra.mxu0 0.0
  %2089 = vmatprep.subr.mxu0 0.0
  %2090 = vmatpush1.msra.mxu0 0.0
  %2091 = vmatprep.subr.mxu0 0.0
  %2092 = vmatpush1.msra.mxu0 0.0
  %2093 = vmatprep.subr.mxu0 0.0
  %2094 = vmatpush1.msra.mxu0 0.0
  %2095 = vmatprep.subr.mxu0 0.0
  %2096 = vmatpush1.msra.mxu0 0.0
  %2097 = vmatprep.subr.mxu0 0.0
  %2098 = vmatpush1.msra.mxu0 0.0
  %2099 = vmatprep.subr.mxu0 0.0
  %2100 = vmatpush1.msra.mxu0 0.0
  %2101 = vmatprep.subr.mxu0 0.0
  %2102 = vmatpush1.msra.mxu0 0.0
  %2103 = vmatprep.subr.mxu0 0.0
  %2104 = vmatpush1.msra.mxu0 0.0
  %2105 = vmatprep.subr.mxu0 0.0
  %2106 = vmatpush1.msra.mxu0 0.0
  %2107 = vmatprep.subr.mxu0 0.0
  %2108 = vmatpush1.msra.mxu0 0.0
  %2109 = vmatprep.subr.mxu0 0.0
  %2110 = vmatpush1.msra.mxu0 0.0
  %2111 = vmatprep.subr.mxu0 0.0
  %2112 = vmatpush1.msra.mxu0 0.0
  %2113 = vmatprep.subr.mxu0 0.0
  %2114 = vmatpush1.msra.mxu0 0.0
  %2115 = vmatprep.subr.mxu0 0.0
  %2116 = vmatpush1.msra.mxu0 0.0
  %2117 = vmatprep.subr.mxu0 0.0
  %2118 = vmatpush1.msra.mxu0 0.0
  %2119 = vmatprep.subr.mxu0 0.0
  %2120 = vmatpush1.msra.mxu0 0.0
  %2121 = vmatprep.subr.mxu0 0.0
  %2122 = vmatpush1.msra.mxu0 0.0
  %2123 = vmatprep.subr.mxu0 0.0
  %2124 = vmatpush1.msra.mxu0 0.0
  %2125 = vmatprep.mubr.f32.mxu0 0.0
  %2126 = vmatmul.mubr.f32.gmra.mrb[0].mxu0 %v2059
  %v2127 = vpop.f32.mrb[0].mxu0
  %v2128 = vadd.f32 %v2054, %v2127
  %v2129 = vpop.f32.mrb[0].mxu0
  %2130 = vdwg.mxu0
  %v2131 = vmax.f32 %v2128, 0.0
  %v2132 = vld [vmem:[%s11] sm:$0xff]
  %v2133 = vld [vmem:[%s11 + $0x8] sm:$0xff]
  %v2134 = vld [vmem:[%s11 + $0x10] sm:$0xff]
  %v2135 = vld [vmem:[%s11 + $0x18] sm:$0xff]
  %v2136 = vld [vmem:[%s11 + $0x20] sm:$0xff]
  %v2137 = vld [vmem:[%s11 + $0x28] sm:$0xff]
  %v2138 = vld [vmem:[%s11 + $0x30] sm:$0xff]
  %v2139 = vld [vmem:[%s11 + $0x38] sm:$0xff]
  %v2140 = vld [vmem:[#allocation4] sm:$0x1]
  %v2142 = vlaneseq
  %v2143 = vshrl.u32 %v2142, 7
  %v2144 = vsub.s32 0, %v2143
  %v2145 = vrot.slane %v2140, %v2144
  %vm2147 = vcmask 523264
  %v2149 = vsel %vm2147, %v2131, 0
  %2151 = vmatprep.subr.mxu0 0.0
  %2152 = vmatpush1.msra.mxu0 %v2132
  %2153 = vmatprep.subr.mxu0 0.0
  %2154 = vmatpush1.msra.mxu0 %v2133
  %2155 = vmatprep.subr.mxu0 0.0
  %2156 = vmatpush1.msra.mxu0 %v2134
  %2157 = vmatprep.subr.mxu0 0.0
  %2158 = vmatpush1.msra.mxu0 %v2135
  %2159 = vmatprep.subr.mxu0 0.0
  %2160 = vmatpush1.msra.mxu0 %v2136
  %2161 = vmatprep.subr.mxu0 0.0
  %2162 = vmatpush1.msra.mxu0 %v2137
  %2163 = vmatprep.subr.mxu0 0.0
  %2164 = vmatpush1.msra.mxu0 %v2138
  %2165 = vmatprep.subr.mxu0 0.0
  %2166 = vmatpush1.msra.mxu0 %v2139
  %2167 = vmatprep.subr.mxu0 0.0
  %2168 = vmatpush1.msra.mxu0 0.0
  %2169 = vmatprep.subr.mxu0 0.0
  %2170 = vmatpush1.msra.mxu0 0.0
  %2171 = vmatprep.subr.mxu0 0.0
  %2172 = vmatpush1.msra.mxu0 0.0
  %2173 = vmatprep.subr.mxu0 0.0
  %2174 = vmatpush1.msra.mxu0 0.0
  %2175 = vmatprep.subr.mxu0 0.0
  %2176 = vmatpush1.msra.mxu0 0.0
  %2177 = vmatprep.subr.mxu0 0.0
  %2178 = vmatpush1.msra.mxu0 0.0
  %2179 = vmatprep.subr.mxu0 0.0
  %2180 = vmatpush1.msra.mxu0 0.0
  %2181 = vmatprep.subr.mxu0 0.0
  %2182 = vmatpush1.msra.mxu0 0.0
  %2183 = vmatprep.subr.mxu0 0.0
  %2184 = vmatpush1.msra.mxu0 0.0
  %2185 = vmatprep.subr.mxu0 0.0
  %2186 = vmatpush1.msra.mxu0 0.0
  %2187 = vmatprep.subr.mxu0 0.0
  %2188 = vmatpush1.msra.mxu0 0.0
  %2189 = vmatprep.subr.mxu0 0.0
  %2190 = vmatpush1.msra.mxu0 0.0
  %2191 = vmatprep.subr.mxu0 0.0
  %2192 = vmatpush1.msra.mxu0 0.0
  %2193 = vmatprep.subr.mxu0 0.0
  %2194 = vmatpush1.msra.mxu0 0.0
  %2195 = vmatprep.subr.mxu0 0.0
  %2196 = vmatpush1.msra.mxu0 0.0
  %2197 = vmatprep.subr.mxu0 0.0
  %2198 = vmatpush1.msra.mxu0 0.0
  %2199 = vmatprep.subr.mxu0 0.0
  %2200 = vmatpush1.msra.mxu0 0.0
  %2201 = vmatprep.subr.mxu0 0.0
  %2202 = vmatpush1.msra.mxu0 0.0
  %2203 = vmatprep.subr.mxu0 0.0
  %2204 = vmatpush1.msra.mxu0 0.0
  %2205 = vmatprep.subr.mxu0 0.0
  %2206 = vmatpush1.msra.mxu0 0.0
  %2207 = vmatprep.subr.mxu0 0.0
  %2208 = vmatpush1.msra.mxu0 0.0
  %2209 = vmatprep.subr.mxu0 0.0
  %2210 = vmatpush1.msra.mxu0 0.0
  %2211 = vmatprep.subr.mxu0 0.0
  %2212 = vmatpush1.msra.mxu0 0.0
  %2213 = vmatprep.subr.mxu0 0.0
  %2214 = vmatpush1.msra.mxu0 0.0
  %2215 = vmatprep.mubr.f32.mxu0 0.0
  %2216 = vmatmul.mubr.f32.gmra.mrb[0].mxu0 %v2149
  %v2217 = vpop.f32.mrb[0].mxu0
  %v2218 = vadd.f32 %v2145, %v2217
  %v2219 = vpop.f32.mrb[0].mxu0
  %2220 = vdwg.mxu0
  %v2221 = vxor.u32 %v2218, 2147483648
  %v2222 = vmul.f32 %v2221, 1.442695
  %v2223 = vpow.pop %v2222
  %v2224 = vadd.f32 %v2223, 1.0
  %v2225 = vrcp.pop %v2224
  %v2226 = vmul.f32 1.0, %v2225
  %vm2227 = vcmask 7168
  %2228 = vst.msk [vmem:[%s13] sm:$0xff] %vm2227, %v2226
  // Predicated region
  $region54: #{fused_forward.1} parent=0 // pred_check
    _
  $region55: #{fused_forward.1} parent=0 // pred_check_branch
    %2230 = sbr.rel (0) target = $region57
  $region56: #{fused_forward.1} parent=0 // pred_region
    _
  $region57: #{fused_forward.1} parent=0 // pred_fallthru
    _
  // Predicated region
  $region58: #{fused_forward.1} parent=0 // pred_check
    _
  $region59: #{fused_forward.1} parent=0 // pred_check_branch
    %2232 = sbr.rel (0) target = $region61
  $region60: #{fused_forward.1} parent=0 // pred_region
    _
  $region61: #{fused_forward.1} parent=0 // pred_fallthru
    _

</llo_original>
